<compile_context>
chip_gen: v5e
topology: v5e:2x2
jax: 0.10.0
libtpu: 0.0.40
codegen_flags: <defaults>
</compile_context>

<pallas_src>
import functools
import math

import jax
import jax.numpy as jnp
from jax.experimental import pallas as pl
from jax.experimental.pallas import tpu as pltpu


def _round_up(x, m):
    return (x + m - 1) // m * m


def _cdiv(a, b):
    return -(-a // b)


# ----------------------------------------------------------------------------
# Pallas kernel: one (output-channel tile, batch element, TH-row tile) step.
#
#   x_ref     : (PH*Hps, Wps, Cin) bf16  -- flattened polyphase slabs of one
#                                           padded image (resident across t)
#   w_ref     : (kh, kw, Cin, tn)  bf16  -- VMEM-resident weight slab (per n)
#   scale_ref : (1, tn)            f32   -- folded BN scale
#   shift_ref : (1, tn)            f32   -- folded BN shift
#   o_ref     : (TH, OW, tn)       out   -- TH output rows of channel tile n
# ----------------------------------------------------------------------------
def _conv_bn_relu_kernel(x_ref, w_ref, scale_ref, shift_ref, o_ref, *,
                         kh, kw, stride, th, ow, hps):
    row0 = pl.program_id(2) * th                  # first output row of the tile
    sc = scale_ref[...]                           # (1, tn) f32, hoisted
    sh = shift_ref[...]

    for r in range(th):                           # static output-row loop
        acc = None
        for i in range(kh):                       # static kernel-row taps
            p, di = i % stride, i // stride
            for j in range(kw):                   # static kernel-col taps
                q, dj = j % stride, j // stride
                # dynamic index only on the leading (non-tiled) axis
                idx = (p * stride + q) * hps + row0 + r + di
                a = x_ref[idx, dj:dj + ow, :]     # (OW, Cin) bf16
                d = jnp.dot(a, w_ref[i, j], preferred_element_type=jnp.float32)
                acc = d if acc is None else acc + d
        y = acc * sc + sh                         # fused inference-BN (f32)
        o_ref[r] = jnp.maximum(y, 0.0).astype(o_ref.dtype)


# ----------------------------------------------------------------------------
# Wrapper: BasicConv2d forward.  Input is NCHW (like the PyTorch module);
# output layout is "NCHW" (default, matches the module) or "NHWC" (skips the
# final transpose when fusing into an NHWC consumer).
# ----------------------------------------------------------------------------
def basic_conv2d_forward(x_nchw, w_oihw, bn, *, stride, padding,
                         out_dtype=jnp.bfloat16, out_layout="NCHW", th=8):
    O, Cin, kh, kw = w_oihw.shape
    B, C, H, W = x_nchw.shape
    assert C == Cin and stride >= 1
    s = stride

    OH = (H + 2 * padding - kh) // s + 1
    OW = (W + 2 * padding - kw) // s + 1
    assert OH >= 1 and OW >= 1

    th = max(1, min(th, OH))
    oht = _cdiv(OH, th)
    ohp = oht * th                                # OH padded to the row tile

    # Per-phase padded extents.  Window-coverage invariants (explicit, so a
    # change to the padding glue cannot produce silent OOB reads):
    dih, diw = (kh - 1) // s, (kw - 1) // s
    hps = max(ohp + dih, _cdiv(H + 2 * padding, s))
    wps = max(OW + diw, _cdiv(W + 2 * padding, s))
    assert hps >= ohp + dih, (hps, ohp, dih)
    assert wps >= OW + diw, (wps, OW, diw)

    # ---- glue: NCHW -> NHWC bf16, ONE merged spatial pad, polyphase split ----
    x = jnp.transpose(x_nchw, (0, 2, 3, 1)).astype(jnp.bfloat16)
    xp = jnp.pad(x, ((0, 0),
                     (padding, hps * s - H - padding),
                     (padding, wps * s - W - padding),
                     (0, 0)))
    if s == 1:                                    # stride-1 fast path: no stack
        slab = xp                                 # (B, Hps, Wps, Cin), PH == 1
    else:
        # slab[b, p*s+q, r, c, :] == xp[b, r*s+p, c*s+q, :]
        slab = (xp.reshape(B, hps, s, wps, s, Cin)
                  .transpose(0, 2, 4, 1, 3, 5)
                  .reshape(B, s * s, hps, wps, Cin))
    slab = slab.reshape(B, (s * s) * hps, wps, Cin)   # flatten (phase, row)

    # ---- weights: OIHW -> (kh, kw, Cin, Npad) bf16, lane-dense Npad ----------
    npad = _round_up(O, 128)
    tn = math.gcd(npad, 256)          # 128 or 256; capped at 256 (v7x VMEM)
    w_t = jnp.transpose(w_oihw, (2, 3, 1, 0))
    w_t = jnp.pad(w_t, ((0, 0), (0, 0), (0, 0), (0, npad - O))).astype(jnp.bfloat16)

    # ---- fold inference BatchNorm into per-channel scale/shift (f32) ---------
    # Padded output channels get scale = shift = 0, so ReLU(0*acc + 0) == 0.
    scale = (bn["gamma"] / jnp.sqrt(bn["var"] + bn["eps"])).astype(jnp.float32)
    shift = (bn["beta"] - bn["mean"] * scale).astype(jnp.float32)
    scale = jnp.pad(scale, (0, npad - O)).reshape(1, npad)
    shift = jnp.pad(shift, (0, npad - O)).reshape(1, npad)

    # channel-tile axis OUTERMOST so the resident weight slab streams once
    grid = (npad // tn, B, oht)

    kernel = functools.partial(_conv_bn_relu_kernel, kh=kh, kw=kw, stride=s,
                               th=th, ow=OW, hps=hps)
    out_bytes = B * ohp * OW * npad * jnp.dtype(out_dtype).itemsize
    cost = pl.CostEstimate(
        flops=2 * B * ohp * OW * kh * kw * Cin * npad,
        transcendentals=0,
        bytes_accessed=slab.size * 2 + w_t.size * 2 + out_bytes)

    out = pl.pallas_call(
        kernel,
        out_shape=jax.ShapeDtypeStruct((B, ohp, OW, npad), out_dtype),
        grid=grid,
        in_specs=[
            # whole padded (polyphase) image of batch element b; resident
            # across the OH-tile axis, re-fetched only when b (or n) changes.
            pl.BlockSpec(((s * s) * hps, wps, Cin) if False else
                         (None, (s * s) * hps, wps, Cin),
                         lambda n, b, t: (b, 0, 0, 0)),
            # VMEM-resident weight slab for output-channel tile n.
            pl.BlockSpec((kh, kw, Cin, tn), lambda n, b, t: (0, 0, 0, n)),
            pl.BlockSpec((1, tn), lambda n, b, t: (0, n)),
            pl.BlockSpec((1, tn), lambda n, b, t: (0, n)),
        ],
        out_specs=pl.BlockSpec((None, th, OW, tn), lambda n, b, t: (b, t, 0, n)),
        compiler_params=pltpu.CompilerParams(
            dimension_semantics=("parallel", "parallel", "parallel"),
            vmem_limit_bytes=48 * 1024 * 1024),
        cost_estimate=cost,
    )(slab, w_t, scale, shift)

    # Drop row / channel padding.  (Channel slice is a no-op when O % 128 == 0.)
    out = out[:, :OH, :, :O]
    if out_layout == "NCHW":
        out = jnp.transpose(out, (0, 3, 1, 2))
    return out


# ----------------------------------------------------------------------------
# Pure-JAX reference (f32) for correctness checks
# ----------------------------------------------------------------------------
def _reference(x_nchw, w_oihw, bn, *, stride, padding):
    y = jax.lax.conv_general_dilated(
        x_nchw.astype(jnp.float32), w_oihw.astype(jnp.float32),
        window_strides=(stride, stride),
        padding=((padding, padding), (padding, padding)),
        dimension_numbers=("NCHW", "OIHW", "NCHW"),
        preferred_element_type=jnp.float32,
        precision=jax.lax.Precision.HIGHEST)
    scale = bn["gamma"] / jnp.sqrt(bn["var"] + bn["eps"])
    shift = bn["beta"] - bn["mean"] * scale
    y = y * scale[None, :, None, None] + shift[None, :, None, None]
    return jnp.maximum(y, 0.0)


# ----------------------------------------------------------------------------
if __name__ == "__main__":
    key = jax.random.PRNGKey(0)
    kx, kwt, kg, kb, km = jax.random.split(key, 5)

    # BasicConv2d(in_planes=4, out_planes=32, kernel_size=3, stride=2, padding=1)
    B, Cin, H, W = 2, 4, 16, 16
    Cout, ksize, stride, padding = 32, 3, 2, 1

    x = jax.random.normal(kx, (B, Cin, H, W), jnp.float32)
    fan_in = Cin * ksize * ksize
    w = jax.random.normal(kwt, (Cout, Cin, ksize, ksize), jnp.float32) \
        * (2.0 / fan_in) ** 0.5
    bn = {"gamma": 1.0 + 0.1 * jax.random.normal(kg, (Cout,), jnp.float32),
          "beta": 0.05 * jax.random.normal(kb, (Cout,), jnp.float32),
          "mean": 0.01 * jax.random.normal(km, (Cout,), jnp.float32),
          "var": jnp.ones((Cout,), jnp.float32),
          "eps": 1e-3}

    OH = (H + 2 * padding - ksize) // stride + 1
    OW = (W + 2 * padding - ksize) // stride + 1

    # f32-output NCHW path (tight numerics check).
    fwd_f32 = jax.jit(functools.partial(
        basic_conv2d_forward, stride=stride, padding=padding,
        out_dtype=jnp.float32, out_layout="NCHW"))
    out = jax.block_until_ready(fwd_f32(x, w, bn))
    assert out.shape == (B, Cout, OH, OW), out.shape
    assert bool(jnp.all(jnp.isfinite(out)))

    # Tight check: reference run on the exact bf16-rounded inputs the MXU sees.
    x_bf = x.astype(jnp.bfloat16).astype(jnp.float32)
    w_bf = w.astype(jnp.bfloat16).astype(jnp.float32)
    ref_bf = _reference(x_bf, w_bf, bn, stride=stride, padding=padding)
    rel = float(jnp.max(jnp.abs(out - ref_bf)) /
                (jnp.max(jnp.abs(ref_bf)) + 1e-6))
    assert rel < 1e-3, f"relative err vs bf16-cast reference: {rel}"

    # Looser sanity check against the full-precision module semantics.
    ref = _reference(x, w, bn, stride=stride, padding=padding)
    err = float(jnp.max(jnp.abs(out - ref)))
    assert err < 1e-1, f"max abs err vs f32 reference: {err}"

    # Default fast path: bf16 output, NHWC layout (no transpose round-trip).
    fwd_bf16 = jax.jit(functools.partial(
        basic_conv2d_forward, stride=stride, padding=padding,
        out_layout="NHWC"))
    out_bf = jax.block_until_ready(fwd_bf16(x, w, bn))
    assert out_bf.shape == (B, OH, OW, Cout), out_bf.shape
    diff = float(jnp.max(jnp.abs(out_bf.astype(jnp.float32)
                                 - jnp.transpose(out, (0, 2, 3, 1)))))
    assert diff < 5e-2 * (float(jnp.max(jnp.abs(out))) + 1.0), diff

    print("KERNEL_OK")
</pallas_src>

<mosaic_0001>
module attributes {stable_mosaic.version = 11 : i64} {
  func.func @_conv_bn_relu_kernel(%arg0: i32, %arg1: i32, %arg2: i32, %arg3: memref<1x36x9x4xbf16, #tpu.memory_space<vmem>>, %arg4: memref<3x3x4x128xbf16, #tpu.memory_space<vmem>>, %arg5: memref<1x128xf32, #tpu.memory_space<vmem>>, %arg6: memref<1x128xf32, #tpu.memory_space<vmem>>, %arg7: memref<1x8x8x128xf32, #tpu.memory_space<vmem>>) attributes {dimension_semantics = [#tpu.dimension_semantics<parallel>, #tpu.dimension_semantics<parallel>, #tpu.dimension_semantics<parallel>], iteration_bounds = array<i64: 1, 2, 1>, scalar_prefetch = 0 : i64, scratch_operands = 0 : i64, tpu.core_type = #tpu.core_type<tc>, window_params = [{transform_indices = @transform_0, window_bounds = array<i64: 1, 36, 9, 4>}, {transform_indices = @transform_1, window_bounds = array<i64: 3, 3, 4, 128>}, {transform_indices = @transform_2, window_bounds = array<i64: 1, 128>}, {transform_indices = @transform_3, window_bounds = array<i64: 1, 128>}, {transform_indices = @transform_4, window_bounds = array<i64: 1, 8, 8, 128>}]} {
    %c8_i32 = arith.constant 8 : i32
    %0 = arith.muli %arg2, %c8_i32 : i32
    %c0 = arith.constant 0 : index
    %c0_0 = arith.constant 0 : index
    %1 = vector.load %arg5[%c0, %c0_0] : memref<1x128xf32, #tpu.memory_space<vmem>>, vector<1x128xf32>
    %c0_1 = arith.constant 0 : index
    %c0_2 = arith.constant 0 : index
    %2 = vector.load %arg6[%c0_1, %c0_2] : memref<1x128xf32, #tpu.memory_space<vmem>>, vector<1x128xf32>
    %c0_i32 = arith.constant 0 : i32
    %3 = arith.addi %c0_i32, %0 : i32
    %c0_i32_3 = arith.constant 0 : i32
    %4 = arith.addi %3, %c0_i32_3 : i32
    %c0_i32_4 = arith.constant 0 : i32
    %5 = arith.addi %4, %c0_i32_4 : i32
    %c0_5 = arith.constant 0 : index
    %6 = arith.index_cast %5 : i32 to index
    %c0_6 = arith.constant 0 : index
    %c0_7 = arith.constant 0 : index
    %7 = vector.load %arg3[%c0_5, %6, %c0_6, %c0_7] : memref<1x36x9x4xbf16, #tpu.memory_space<vmem>>, vector<1x1x8x4xbf16>
    %8 = vector.shape_cast %7 : vector<1x1x8x4xbf16> to vector<8x4xbf16>
    %c0_8 = arith.constant 0 : index
    %c0_9 = arith.constant 0 : index
    %c0_10 = arith.constant 0 : index
    %c0_11 = arith.constant 0 : index
    %9 = vector.load %arg4[%c0_8, %c0_9, %c0_10, %c0_11] : memref<3x3x4x128xbf16, #tpu.memory_space<vmem>>, vector<1x1x4x128xbf16>
    %10 = vector.shape_cast %9 : vector<1x1x4x128xbf16> to vector<4x128xbf16>
    %cst = arith.constant dense<0.000000e+00> : vector<8x128xf32>
    %11 = tpu.matmul %8, %10, %cst {dimension_numbers = #tpu.dot_dimension_numbers<[1], [0], [0], [1], [0, 0, 1, 1], [], []>} : vector<8x4xbf16>, vector<4x128xbf16>, vector<8x128xf32> -> vector<8x128xf32>
    %c9_i32 = arith.constant 9 : i32
    %12 = arith.addi %c9_i32, %0 : i32
    %c0_i32_12 = arith.constant 0 : i32
    %13 = arith.addi %12, %c0_i32_12 : i32
    %c0_i32_13 = arith.constant 0 : i32
    %14 = arith.addi %13, %c0_i32_13 : i32
    %c0_14 = arith.constant 0 : index
    %15 = arith.index_cast %14 : i32 to index
    %c0_15 = arith.constant 0 : index
    %c0_16 = arith.constant 0 : index
    %16 = vector.load %arg3[%c0_14, %15, %c0_15, %c0_16] : memref<1x36x9x4xbf16, #tpu.memory_space<vmem>>, vector<1x1x8x4xbf16>
    %17 = vector.shape_cast %16 : vector<1x1x8x4xbf16> to vector<8x4xbf16>
    %c0_17 = arith.constant 0 : index
    %c1 = arith.constant 1 : index
    %c0_18 = arith.constant 0 : index
    %c0_19 = arith.constant 0 : index
    %18 = vector.load %arg4[%c0_17, %c1, %c0_18, %c0_19] : memref<3x3x4x128xbf16, #tpu.memory_space<vmem>>, vector<1x1x4x128xbf16>
    %19 = vector.shape_cast %18 : vector<1x1x4x128xbf16> to vector<4x128xbf16>
    %cst_20 = arith.constant dense<0.000000e+00> : vector<8x128xf32>
    %20 = tpu.matmul %17, %19, %cst_20 {dimension_numbers = #tpu.dot_dimension_numbers<[1], [0], [0], [1], [0, 0, 1, 1], [], []>} : vector<8x4xbf16>, vector<4x128xbf16>, vector<8x128xf32> -> vector<8x128xf32>
    %21 = arith.addf %11, %20 : vector<8x128xf32>
    %c0_i32_21 = arith.constant 0 : i32
    %22 = arith.addi %c0_i32_21, %0 : i32
    %c0_i32_22 = arith.constant 0 : i32
    %23 = arith.addi %22, %c0_i32_22 : i32
    %c0_i32_23 = arith.constant 0 : i32
    %24 = arith.addi %23, %c0_i32_23 : i32
    %c0_24 = arith.constant 0 : index
    %25 = arith.index_cast %24 : i32 to index
    %c1_25 = arith.constant 1 : index
    %c0_26 = arith.constant 0 : index
    %26 = vector.load %arg3[%c0_24, %25, %c1_25, %c0_26] : memref<1x36x9x4xbf16, #tpu.memory_space<vmem>>, vector<1x1x8x4xbf16>
    %27 = vector.shape_cast %26 : vector<1x1x8x4xbf16> to vector<8x4xbf16>
    %c0_27 = arith.constant 0 : index
    %c2 = arith.constant 2 : index
    %c0_28 = arith.constant 0 : index
    %c0_29 = arith.constant 0 : index
    %28 = vector.load %arg4[%c0_27, %c2, %c0_28, %c0_29] : memref<3x3x4x128xbf16, #tpu.memory_space<vmem>>, vector<1x1x4x128xbf16>
    %29 = vector.shape_cast %28 : vector<1x1x4x128xbf16> to vector<4x128xbf16>
    %cst_30 = arith.constant dense<0.000000e+00> : vector<8x128xf32>
    %30 = tpu.matmul %27, %29, %cst_30 {dimension_numbers = #tpu.dot_dimension_numbers<[1], [0], [0], [1], [0, 0, 1, 1], [], []>} : vector<8x4xbf16>, vector<4x128xbf16>, vector<8x128xf32> -> vector<8x128xf32>
    %31 = arith.addf %21, %30 : vector<8x128xf32>
    %c18_i32 = arith.constant 18 : i32
    %32 = arith.addi %c18_i32, %0 : i32
    %c0_i32_31 = arith.constant 0 : i32
    %33 = arith.addi %32, %c0_i32_31 : i32
    %c0_i32_32 = arith.constant 0 : i32
    %34 = arith.addi %33, %c0_i32_32 : i32
    %c0_33 = arith.constant 0 : index
    %35 = arith.index_cast %34 : i32 to index
    %c0_34 = arith.constant 0 : index
    %c0_35 = arith.constant 0 : index
    %36 = vector.load %arg3[%c0_33, %35, %c0_34, %c0_35] : memref<1x36x9x4xbf16, #tpu.memory_space<vmem>>, vector<1x1x8x4xbf16>
    %37 = vector.shape_cast %36 : vector<1x1x8x4xbf16> to vector<8x4xbf16>
    %c1_36 = arith.constant 1 : index
    %c0_37 = arith.constant 0 : index
    %c0_38 = arith.constant 0 : index
    %c0_39 = arith.constant 0 : index
    %38 = vector.load %arg4[%c1_36, %c0_37, %c0_38, %c0_39] : memref<3x3x4x128xbf16, #tpu.memory_space<vmem>>, vector<1x1x4x128xbf16>
    %39 = vector.shape_cast %38 : vector<1x1x4x128xbf16> to vector<4x128xbf16>
    %cst_40 = arith.constant dense<0.000000e+00> : vector<8x128xf32>
    %40 = tpu.matmul %37, %39, %cst_40 {dimension_numbers = #tpu.dot_dimension_numbers<[1], [0], [0], [1], [0, 0, 1, 1], [], []>} : vector<8x4xbf16>, vector<4x128xbf16>, vector<8x128xf32> -> vector<8x128xf32>
    %41 = arith.addf %31, %40 : vector<8x128xf32>
    %c27_i32 = arith.constant 27 : i32
    %42 = arith.addi %c27_i32, %0 : i32
    %c0_i32_41 = arith.constant 0 : i32
    %43 = arith.addi %42, %c0_i32_41 : i32
    %c0_i32_42 = arith.constant 0 : i32
    %44 = arith.addi %43, %c0_i32_42 : i32
    %c0_43 = arith.constant 0 : index
    %45 = arith.index_cast %44 : i32 to index
    %c0_44 = arith.constant 0 : index
    %c0_45 = arith.constant 0 : index
    %46 = vector.load %arg3[%c0_43, %45, %c0_44, %c0_45] : memref<1x36x9x4xbf16, #tpu.memory_space<vmem>>, vector<1x1x8x4xbf16>
    %47 = vector.shape_cast %46 : vector<1x1x8x4xbf16> to vector<8x4xbf16>
    %c1_46 = arith.constant 1 : index
    %c1_47 = arith.constant 1 : index
    %c0_48 = arith.constant 0 : index
    %c0_49 = arith.constant 0 : index
    %48 = vector.load %arg4[%c1_46, %c1_47, %c0_48, %c0_49] : memref<3x3x4x128xbf16, #tpu.memory_space<vmem>>, vector<1x1x4x128xbf16>
    %49 = vector.shape_cast %48 : vector<1x1x4x128xbf16> to vector<4x128xbf16>
    %cst_50 = arith.constant dense<0.000000e+00> : vector<8x128xf32>
    %50 = tpu.matmul %47, %49, %cst_50 {dimension_numbers = #tpu.dot_dimension_numbers<[1], [0], [0], [1], [0, 0, 1, 1], [], []>} : vector<8x4xbf16>, vector<4x128xbf16>, vector<8x128xf32> -> vector<8x128xf32>
    %51 = arith.addf %41, %50 : vector<8x128xf32>
    %c18_i32_51 = arith.constant 18 : i32
    %52 = arith.addi %c18_i32_51, %0 : i32
    %c0_i32_52 = arith.constant 0 : i32
    %53 = arith.addi %52, %c0_i32_52 : i32
    %c0_i32_53 = arith.constant 0 : i32
    %54 = arith.addi %53, %c0_i32_53 : i32
    %c0_54 = arith.constant 0 : index
    %55 = arith.index_cast %54 : i32 to index
    %c1_55 = arith.constant 1 : index
    %c0_56 = arith.constant 0 : index
    %56 = vector.load %arg3[%c0_54, %55, %c1_55, %c0_56] : memref<1x36x9x4xbf16, #tpu.memory_space<vmem>>, vector<1x1x8x4xbf16>
    %57 = vector.shape_cast %56 : vector<1x1x8x4xbf16> to vector<8x4xbf16>
    %c1_57 = arith.constant 1 : index
    %c2_58 = arith.constant 2 : index
    %c0_59 = arith.constant 0 : index
    %c0_60 = arith.constant 0 : index
    %58 = vector.load %arg4[%c1_57, %c2_58, %c0_59, %c0_60] : memref<3x3x4x128xbf16, #tpu.memory_space<vmem>>, vector<1x1x4x128xbf16>
    %59 = vector.shape_cast %58 : vector<1x1x4x128xbf16> to vector<4x128xbf16>
    %cst_61 = arith.constant dense<0.000000e+00> : vector<8x128xf32>
    %60 = tpu.matmul %57, %59, %cst_61 {dimension_numbers = #tpu.dot_dimension_numbers<[1], [0], [0], [1], [0, 0, 1, 1], [], []>} : vector<8x4xbf16>, vector<4x128xbf16>, vector<8x128xf32> -> vector<8x128xf32>
    %61 = arith.addf %51, %60 : vector<8x128xf32>
    %c0_i32_62 = arith.constant 0 : i32
    %62 = arith.addi %c0_i32_62, %0 : i32
    %c0_i32_63 = arith.constant 0 : i32
    %63 = arith.addi %62, %c0_i32_63 : i32
    %c1_i32 = arith.constant 1 : i32
    %64 = arith.addi %63, %c1_i32 : i32
    %c0_64 = arith.constant 0 : index
    %65 = arith.index_cast %64 : i32 to index
    %c0_65 = arith.constant 0 : index
    %c0_66 = arith.constant 0 : index
    %66 = vector.load %arg3[%c0_64, %65, %c0_65, %c0_66] : memref<1x36x9x4xbf16, #tpu.memory_space<vmem>>, vector<1x1x8x4xbf16>
    %67 = vector.shape_cast %66 : vector<1x1x8x4xbf16> to vector<8x4xbf16>
    %c2_67 = arith.constant 2 : index
    %c0_68 = arith.constant 0 : index
    %c0_69 = arith.constant 0 : index
    %c0_70 = arith.constant 0 : index
    %68 = vector.load %arg4[%c2_67, %c0_68, %c0_69, %c0_70] : memref<3x3x4x128xbf16, #tpu.memory_space<vmem>>, vector<1x1x4x128xbf16>
    %69 = vector.shape_cast %68 : vector<1x1x4x128xbf16> to vector<4x128xbf16>
    %cst_71 = arith.constant dense<0.000000e+00> : vector<8x128xf32>
    %70 = tpu.matmul %67, %69, %cst_71 {dimension_numbers = #tpu.dot_dimension_numbers<[1], [0], [0], [1], [0, 0, 1, 1], [], []>} : vector<8x4xbf16>, vector<4x128xbf16>, vector<8x128xf32> -> vector<8x128xf32>
    %71 = arith.addf %61, %70 : vector<8x128xf32>
    %c9_i32_72 = arith.constant 9 : i32
    %72 = arith.addi %c9_i32_72, %0 : i32
    %c0_i32_73 = arith.constant 0 : i32
    %73 = arith.addi %72, %c0_i32_73 : i32
    %c1_i32_74 = arith.constant 1 : i32
    %74 = arith.addi %73, %c1_i32_74 : i32
    %c0_75 = arith.constant 0 : index
    %75 = arith.index_cast %74 : i32 to index
    %c0_76 = arith.constant 0 : index
    %c0_77 = arith.constant 0 : index
    %76 = vector.load %arg3[%c0_75, %75, %c0_76, %c0_77] : memref<1x36x9x4xbf16, #tpu.memory_space<vmem>>, vector<1x1x8x4xbf16>
    %77 = vector.shape_cast %76 : vector<1x1x8x4xbf16> to vector<8x4xbf16>
    %c2_78 = arith.constant 2 : index
    %c1_79 = arith.constant 1 : index
    %c0_80 = arith.constant 0 : index
    %c0_81 = arith.constant 0 : index
    %78 = vector.load %arg4[%c2_78, %c1_79, %c0_80, %c0_81] : memref<3x3x4x128xbf16, #tpu.memory_space<vmem>>, vector<1x1x4x128xbf16>
    %79 = vector.shape_cast %78 : vector<1x1x4x128xbf16> to vector<4x128xbf16>
    %cst_82 = arith.constant dense<0.000000e+00> : vector<8x128xf32>
    %80 = tpu.matmul %77, %79, %cst_82 {dimension_numbers = #tpu.dot_dimension_numbers<[1], [0], [0], [1], [0, 0, 1, 1], [], []>} : vector<8x4xbf16>, vector<4x128xbf16>, vector<8x128xf32> -> vector<8x128xf32>
    %81 = arith.addf %71, %80 : vector<8x128xf32>
    %c0_i32_83 = arith.constant 0 : i32
    %82 = arith.addi %c0_i32_83, %0 : i32
    %c0_i32_84 = arith.constant 0 : i32
    %83 = arith.addi %82, %c0_i32_84 : i32
    %c1_i32_85 = arith.constant 1 : i32
    %84 = arith.addi %83, %c1_i32_85 : i32
    %c0_86 = arith.constant 0 : index
    %85 = arith.index_cast %84 : i32 to index
    %c1_87 = arith.constant 1 : index
    %c0_88 = arith.constant 0 : index
    %86 = vector.load %arg3[%c0_86, %85, %c1_87, %c0_88] : memref<1x36x9x4xbf16, #tpu.memory_space<vmem>>, vector<1x1x8x4xbf16>
    %87 = vector.shape_cast %86 : vector<1x1x8x4xbf16> to vector<8x4xbf16>
    %c2_89 = arith.constant 2 : index
    %c2_90 = arith.constant 2 : index
    %c0_91 = arith.constant 0 : index
    %c0_92 = arith.constant 0 : index
    %88 = vector.load %arg4[%c2_89, %c2_90, %c0_91, %c0_92] : memref<3x3x4x128xbf16, #tpu.memory_space<vmem>>, vector<1x1x4x128xbf16>
    %89 = vector.shape_cast %88 : vector<1x1x4x128xbf16> to vector<4x128xbf16>
    %cst_93 = arith.constant dense<0.000000e+00> : vector<8x128xf32>
    %90 = tpu.matmul %87, %89, %cst_93 {dimension_numbers = #tpu.dot_dimension_numbers<[1], [0], [0], [1], [0, 0, 1, 1], [], []>} : vector<8x4xbf16>, vector<4x128xbf16>, vector<8x128xf32> -> vector<8x128xf32>
    %91 = arith.addf %81, %90 : vector<8x128xf32>
    %92 = vector.broadcast %1 : vector<1x128xf32> to vector<8x128xf32>
    %93 = arith.mulf %91, %92 : vector<8x128xf32>
    %94 = vector.broadcast %2 : vector<1x128xf32> to vector<8x128xf32>
    %95 = arith.addf %93, %94 : vector<8x128xf32>
    %cst_94 = arith.constant 0.000000e+00 : f32
    %96 = vector.broadcast %cst_94 : f32 to vector<8x128xf32>
    %97 = arith.maximumf %95, %96 : vector<8x128xf32>
    %c0_95 = arith.constant 0 : index
    %c0_96 = arith.constant 0 : index
    %c0_97 = arith.constant 0 : index
    %c0_98 = arith.constant 0 : index
    %98 = vector.load %arg7[%c0_95, %c0_96, %c0_97, %c0_98] : memref<1x8x8x128xf32, #tpu.memory_space<vmem>>, vector<1x1x8x128xf32>
    %99 = vector.shape_cast %98 : vector<1x1x8x128xf32> to vector<8x128xf32>
    %100 = vector.shape_cast %97 : vector<8x128xf32> to vector<1x1x8x128xf32>
    tpu.vector_store %arg7[%c0_95, %c0_96, %c0_97, %c0_98], %100 {strides = array<i32>} : memref<1x8x8x128xf32, #tpu.memory_space<vmem>>, vector<1x1x8x128xf32>,
    %c0_i32_99 = arith.constant 0 : i32
    %101 = arith.addi %c0_i32_99, %0 : i32
    %c1_i32_100 = arith.constant 1 : i32
    %102 = arith.addi %101, %c1_i32_100 : i32
    %c0_i32_101 = arith.constant 0 : i32
    %103 = arith.addi %102, %c0_i32_101 : i32
    %c0_102 = arith.constant 0 : index
    %104 = arith.index_cast %103 : i32 to index
    %c0_103 = arith.constant 0 : index
    %c0_104 = arith.constant 0 : index
    %105 = vector.load %arg3[%c0_102, %104, %c0_103, %c0_104] : memref<1x36x9x4xbf16, #tpu.memory_space<vmem>>, vector<1x1x8x4xbf16>
    %106 = vector.shape_cast %105 : vector<1x1x8x4xbf16> to vector<8x4xbf16>
    %c0_105 = arith.constant 0 : index
    %c0_106 = arith.constant 0 : index
    %c0_107 = arith.constant 0 : index
    %c0_108 = arith.constant 0 : index
    %107 = vector.load %arg4[%c0_105, %c0_106, %c0_107, %c0_108] : memref<3x3x4x128xbf16, #tpu.memory_space<vmem>>, vector<1x1x4x128xbf16>
    %108 = vector.shape_cast %107 : vector<1x1x4x128xbf16> to vector<4x128xbf16>
    %cst_109 = arith.constant dense<0.000000e+00> : vector<8x128xf32>
    %109 = tpu.matmul %106, %108, %cst_109 {dimension_numbers = #tpu.dot_dimension_numbers<[1], [0], [0], [1], [0, 0, 1, 1], [], []>} : vector<8x4xbf16>, vector<4x128xbf16>, vector<8x128xf32> -> vector<8x128xf32>
    %c9_i32_110 = arith.constant 9 : i32
    %110 = arith.addi %c9_i32_110, %0 : i32
    %c1_i32_111 = arith.constant 1 : i32
    %111 = arith.addi %110, %c1_i32_111 : i32
    %c0_i32_112 = arith.constant 0 : i32
    %112 = arith.addi %111, %c0_i32_112 : i32
    %c0_113 = arith.constant 0 : index
    %113 = arith.index_cast %112 : i32 to index
    %c0_114 = arith.constant 0 : index
    %c0_115 = arith.constant 0 : index
    %114 = vector.load %arg3[%c0_113, %113, %c0_114, %c0_115] : memref<1x36x9x4xbf16, #tpu.memory_space<vmem>>, vector<1x1x8x4xbf16>
    %115 = vector.shape_cast %114 : vector<1x1x8x4xbf16> to vector<8x4xbf16>
    %c0_116 = arith.constant 0 : index
    %c1_117 = arith.constant 1 : index
    %c0_118 = arith.constant 0 : index
    %c0_119 = arith.constant 0 : index
    %116 = vector.load %arg4[%c0_116, %c1_117, %c0_118, %c0_119] : memref<3x3x4x128xbf16, #tpu.memory_space<vmem>>, vector<1x1x4x128xbf16>
    %117 = vector.shape_cast %116 : vector<1x1x4x128xbf16> to vector<4x128xbf16>
    %cst_120 = arith.constant dense<0.000000e+00> : vector<8x128xf32>
    %118 = tpu.matmul %115, %117, %cst_120 {dimension_numbers = #tpu.dot_dimension_numbers<[1], [0], [0], [1], [0, 0, 1, 1], [], []>} : vector<8x4xbf16>, vector<4x128xbf16>, vector<8x128xf32> -> vector<8x128xf32>
    %119 = arith.addf %109, %118 : vector<8x128xf32>
    %c0_i32_121 = arith.constant 0 : i32
    %120 = arith.addi %c0_i32_121, %0 : i32
    %c1_i32_122 = arith.constant 1 : i32
    %121 = arith.addi %120, %c1_i32_122 : i32
    %c0_i32_123 = arith.constant 0 : i32
    %122 = arith.addi %121, %c0_i32_123 : i32
    %c0_124 = arith.constant 0 : index
    %123 = arith.index_cast %122 : i32 to index
    %c1_125 = arith.constant 1 : index
    %c0_126 = arith.constant 0 : index
    %124 = vector.load %arg3[%c0_124, %123, %c1_125, %c0_126] : memref<1x36x9x4xbf16, #tpu.memory_space<vmem>>, vector<1x1x8x4xbf16>
    %125 = vector.shape_cast %124 : vector<1x1x8x4xbf16> to vector<8x4xbf16>
    %c0_127 = arith.constant 0 : index
    %c2_128 = arith.constant 2 : index
    %c0_129 = arith.constant 0 : index
    %c0_130 = arith.constant 0 : index
    %126 = vector.load %arg4[%c0_127, %c2_128, %c0_129, %c0_130] : memref<3x3x4x128xbf16, #tpu.memory_space<vmem>>, vector<1x1x4x128xbf16>
    %127 = vector.shape_cast %126 : vector<1x1x4x128xbf16> to vector<4x128xbf16>
    %cst_131 = arith.constant dense<0.000000e+00> : vector<8x128xf32>
    %128 = tpu.matmul %125, %127, %cst_131 {dimension_numbers = #tpu.dot_dimension_numbers<[1], [0], [0], [1], [0, 0, 1, 1], [], []>} : vector<8x4xbf16>, vector<4x128xbf16>, vector<8x128xf32> -> vector<8x128xf32>
    %129 = arith.addf %119, %128 : vector<8x128xf32>
    %c18_i32_132 = arith.constant 18 : i32
    %130 = arith.addi %c18_i32_132, %0 : i32
    %c1_i32_133 = arith.constant 1 : i32
    %131 = arith.addi %130, %c1_i32_133 : i32
    %c0_i32_134 = arith.constant 0 : i32
    %132 = arith.addi %131, %c0_i32_134 : i32
    %c0_135 = arith.constant 0 : index
    %133 = arith.index_cast %132 : i32 to index
    %c0_136 = arith.constant 0 : index
    %c0_137 = arith.constant 0 : index
    %134 = vector.load %arg3[%c0_135, %133, %c0_136, %c0_137] : memref<1x36x9x4xbf16, #tpu.memory_space<vmem>>, vector<1x1x8x4xbf16>
    %135 = vector.shape_cast %134 : vector<1x1x8x4xbf16> to vector<8x4xbf16>
    %c1_138 = arith.constant 1 : index
    %c0_139 = arith.constant 0 : index
    %c0_140 = arith.constant 0 : index
    %c0_141 = arith.constant 0 : index
    %136 = vector.load %arg4[%c1_138, %c0_139, %c0_140, %c0_141] : memref<3x3x4x128xbf16, #tpu.memory_space<vmem>>, vector<1x1x4x128xbf16>
    %137 = vector.shape_cast %136 : vector<1x1x4x128xbf16> to vector<4x128xbf16>
    %cst_142 = arith.constant dense<0.000000e+00> : vector<8x128xf32>
    %138 = tpu.matmul %135, %137, %cst_142 {dimension_numbers = #tpu.dot_dimension_numbers<[1], [0], [0], [1], [0, 0, 1, 1], [], []>} : vector<8x4xbf16>, vector<4x128xbf16>, vector<8x128xf32> -> vector<8x128xf32>
    %139 = arith.addf %129, %138 : vector<8x128xf32>
    %c27_i32_143 = arith.constant 27 : i32
    %140 = arith.addi %c27_i32_143, %0 : i32
    %c1_i32_144 = arith.constant 1 : i32
    %141 = arith.addi %140, %c1_i32_144 : i32
    %c0_i32_145 = arith.constant 0 : i32
    %142 = arith.addi %141, %c0_i32_145 : i32
    %c0_146 = arith.constant 0 : index
    %143 = arith.index_cast %142 : i32 to index
    %c0_147 = arith.constant 0 : index
    %c0_148 = arith.constant 0 : index
    %144 = vector.load %arg3[%c0_146, %143, %c0_147, %c0_148] : memref<1x36x9x4xbf16, #tpu.memory_space<vmem>>, vector<1x1x8x4xbf16>
    %145 = vector.shape_cast %144 : vector<1x1x8x4xbf16> to vector<8x4xbf16>
    %c1_149 = arith.constant 1 : index
    %c1_150 = arith.constant 1 : index
    %c0_151 = arith.constant 0 : index
    %c0_152 = arith.constant 0 : index
    %146 = vector.load %arg4[%c1_149, %c1_150, %c0_151, %c0_152] : memref<3x3x4x128xbf16, #tpu.memory_space<vmem>>, vector<1x1x4x128xbf16>
    %147 = vector.shape_cast %146 : vector<1x1x4x128xbf16> to vector<4x128xbf16>
    %cst_153 = arith.constant dense<0.000000e+00> : vector<8x128xf32>
    %148 = tpu.matmul %145, %147, %cst_153 {dimension_numbers = #tpu.dot_dimension_numbers<[1], [0], [0], [1], [0, 0, 1, 1], [], []>} : vector<8x4xbf16>, vector<4x128xbf16>, vector<8x128xf32> -> vector<8x128xf32>
    %149 = arith.addf %139, %148 : vector<8x128xf32>
    %c18_i32_154 = arith.constant 18 : i32
    %150 = arith.addi %c18_i32_154, %0 : i32
    %c1_i32_155 = arith.constant 1 : i32
    %151 = arith.addi %150, %c1_i32_155 : i32
    %c0_i32_156 = arith.constant 0 : i32
    %152 = arith.addi %151, %c0_i32_156 : i32
    %c0_157 = arith.constant 0 : index
    %153 = arith.index_cast %152 : i32 to index
    %c1_158 = arith.constant 1 : index
    %c0_159 = arith.constant 0 : index
    %154 = vector.load %arg3[%c0_157, %153, %c1_158, %c0_159] : memref<1x36x9x4xbf16, #tpu.memory_space<vmem>>, vector<1x1x8x4xbf16>
    %155 = vector.shape_cast %154 : vector<1x1x8x4xbf16> to vector<8x4xbf16>
    %c1_160 = arith.constant 1 : index
    %c2_161 = arith.constant 2 : index
    %c0_162 = arith.constant 0 : index
    %c0_163 = arith.constant 0 : index
    %156 = vector.load %arg4[%c1_160, %c2_161, %c0_162, %c0_163] : memref<3x3x4x128xbf16, #tpu.memory_space<vmem>>, vector<1x1x4x128xbf16>
    %157 = vector.shape_cast %156 : vector<1x1x4x128xbf16> to vector<4x128xbf16>
    %cst_164 = arith.constant dense<0.000000e+00> : vector<8x128xf32>
    %158 = tpu.matmul %155, %157, %cst_164 {dimension_numbers = #tpu.dot_dimension_numbers<[1], [0], [0], [1], [0, 0, 1, 1], [], []>} : vector<8x4xbf16>, vector<4x128xbf16>, vector<8x128xf32> -> vector<8x128xf32>
    %159 = arith.addf %149, %158 : vector<8x128xf32>
    %c0_i32_165 = arith.constant 0 : i32
    %160 = arith.addi %c0_i32_165, %0 : i32
    %c1_i32_166 = arith.constant 1 : i32
    %161 = arith.addi %160, %c1_i32_166 : i32
    %c1_i32_167 = arith.constant 1 : i32
    %162 = arith.addi %161, %c1_i32_167 : i32
    %c0_168 = arith.constant 0 : index
    %163 = arith.index_cast %162 : i32 to index
    %c0_169 = arith.constant 0 : index
    %c0_170 = arith.constant 0 : index
    %164 = vector.load %arg3[%c0_168, %163, %c0_169, %c0_170] : memref<1x36x9x4xbf16, #tpu.memory_space<vmem>>, vector<1x1x8x4xbf16>
    %165 = vector.shape_cast %164 : vector<1x1x8x4xbf16> to vector<8x4xbf16>
    %c2_171 = arith.constant 2 : index
    %c0_172 = arith.constant 0 : index
    %c0_173 = arith.constant 0 : index
    %c0_174 = arith.constant 0 : index
    %166 = vector.load %arg4[%c2_171, %c0_172, %c0_173, %c0_174] : memref<3x3x4x128xbf16, #tpu.memory_space<vmem>>, vector<1x1x4x128xbf16>
    %167 = vector.shape_cast %166 : vector<1x1x4x128xbf16> to vector<4x128xbf16>
    %cst_175 = arith.constant dense<0.000000e+00> : vector<8x128xf32>
    %168 = tpu.matmul %165, %167, %cst_175 {dimension_numbers = #tpu.dot_dimension_numbers<[1], [0], [0], [1], [0, 0, 1, 1], [], []>} : vector<8x4xbf16>, vector<4x128xbf16>, vector<8x128xf32> -> vector<8x128xf32>
    %169 = arith.addf %159, %168 : vector<8x128xf32>
    %c9_i32_176 = arith.constant 9 : i32
    %170 = arith.addi %c9_i32_176, %0 : i32
    %c1_i32_177 = arith.constant 1 : i32
    %171 = arith.addi %170, %c1_i32_177 : i32
    %c1_i32_178 = arith.constant 1 : i32
    %172 = arith.addi %171, %c1_i32_178 : i32
    %c0_179 = arith.constant 0 : index
    %173 = arith.index_cast %172 : i32 to index
    %c0_180 = arith.constant 0 : index
    %c0_181 = arith.constant 0 : index
    %174 = vector.load %arg3[%c0_179, %173, %c0_180, %c0_181] : memref<1x36x9x4xbf16, #tpu.memory_space<vmem>>, vector<1x1x8x4xbf16>
    %175 = vector.shape_cast %174 : vector<1x1x8x4xbf16> to vector<8x4xbf16>
    %c2_182 = arith.constant 2 : index
    %c1_183 = arith.constant 1 : index
    %c0_184 = arith.constant 0 : index
    %c0_185 = arith.constant 0 : index
    %176 = vector.load %arg4[%c2_182, %c1_183, %c0_184, %c0_185] : memref<3x3x4x128xbf16, #tpu.memory_space<vmem>>, vector<1x1x4x128xbf16>
    %177 = vector.shape_cast %176 : vector<1x1x4x128xbf16> to vector<4x128xbf16>
    %cst_186 = arith.constant dense<0.000000e+00> : vector<8x128xf32>
    %178 = tpu.matmul %175, %177, %cst_186 {dimension_numbers = #tpu.dot_dimension_numbers<[1], [0], [0], [1], [0, 0, 1, 1], [], []>} : vector<8x4xbf16>, vector<4x128xbf16>, vector<8x128xf32> -> vector<8x128xf32>
    %179 = arith.addf %169, %178 : vector<8x128xf32>
    %c0_i32_187 = arith.constant 0 : i32
    %180 = arith.addi %c0_i32_187, %0 : i32
    %c1_i32_188 = arith.constant 1 : i32
    %181 = arith.addi %180, %c1_i32_188 : i32
    %c1_i32_189 = arith.constant 1 : i32
    %182 = arith.addi %181, %c1_i32_189 : i32
    %c0_190 = arith.constant 0 : index
    %183 = arith.index_cast %182 : i32 to index
    %c1_191 = arith.constant 1 : index
    %c0_192 = arith.constant 0 : index
    %184 = vector.load %arg3[%c0_190, %183, %c1_191, %c0_192] : memref<1x36x9x4xbf16, #tpu.memory_space<vmem>>, vector<1x1x8x4xbf16>
    %185 = vector.shape_cast %184 : vector<1x1x8x4xbf16> to vector<8x4xbf16>
    %c2_193 = arith.constant 2 : index
    %c2_194 = arith.constant 2 : index
    %c0_195 = arith.constant 0 : index
    %c0_196 = arith.constant 0 : index
    %186 = vector.load %arg4[%c2_193, %c2_194, %c0_195, %c0_196] : memref<3x3x4x128xbf16, #tpu.memory_space<vmem>>, vector<1x1x4x128xbf16>
    %187 = vector.shape_cast %186 : vector<1x1x4x128xbf16> to vector<4x128xbf16>
    %cst_197 = arith.constant dense<0.000000e+00> : vector<8x128xf32>
    %188 = tpu.matmul %185, %187, %cst_197 {dimension_numbers = #tpu.dot_dimension_numbers<[1], [0], [0], [1], [0, 0, 1, 1], [], []>} : vector<8x4xbf16>, vector<4x128xbf16>, vector<8x128xf32> -> vector<8x128xf32>
    %189 = arith.addf %179, %188 : vector<8x128xf32>
    %190 = vector.broadcast %1 : vector<1x128xf32> to vector<8x128xf32>
    %191 = arith.mulf %189, %190 : vector<8x128xf32>
    %192 = vector.broadcast %2 : vector<1x128xf32> to vector<8x128xf32>
    %193 = arith.addf %191, %192 : vector<8x128xf32>
    %cst_198 = arith.constant 0.000000e+00 : f32
    %194 = vector.broadcast %cst_198 : f32 to vector<8x128xf32>
    %195 = arith.maximumf %193, %194 : vector<8x128xf32>
    %c0_199 = arith.constant 0 : index
    %c1_200 = arith.constant 1 : index
    %c0_201 = arith.constant 0 : index
    %c0_202 = arith.constant 0 : index
    %196 = vector.load %arg7[%c0_199, %c1_200, %c0_201, %c0_202] : memref<1x8x8x128xf32, #tpu.memory_space<vmem>>, vector<1x1x8x128xf32>
    %197 = vector.shape_cast %196 : vector<1x1x8x128xf32> to vector<8x128xf32>
    %198 = vector.shape_cast %195 : vector<8x128xf32> to vector<1x1x8x128xf32>
    tpu.vector_store %arg7[%c0_199, %c1_200, %c0_201, %c0_202], %198 {strides = array<i32>} : memref<1x8x8x128xf32, #tpu.memory_space<vmem>>, vector<1x1x8x128xf32>,
    %c0_i32_203 = arith.constant 0 : i32
    %199 = arith.addi %c0_i32_203, %0 : i32
    %c2_i32 = arith.constant 2 : i32
    %200 = arith.addi %199, %c2_i32 : i32
    %c0_i32_204 = arith.constant 0 : i32
    %201 = arith.addi %200, %c0_i32_204 : i32
    %c0_205 = arith.constant 0 : index
    %202 = arith.index_cast %201 : i32 to index
    %c0_206 = arith.constant 0 : index
    %c0_207 = arith.constant 0 : index
    %203 = vector.load %arg3[%c0_205, %202, %c0_206, %c0_207] : memref<1x36x9x4xbf16, #tpu.memory_space<vmem>>, vector<1x1x8x4xbf16>
    %204 = vector.shape_cast %203 : vector<1x1x8x4xbf16> to vector<8x4xbf16>
    %c0_208 = arith.constant 0 : index
    %c0_209 = arith.constant 0 : index
    %c0_210 = arith.constant 0 : index
    %c0_211 = arith.constant 0 : index
    %205 = vector.load %arg4[%c0_208, %c0_209, %c0_210, %c0_211] : memref<3x3x4x128xbf16, #tpu.memory_space<vmem>>, vector<1x1x4x128xbf16>
    %206 = vector.shape_cast %205 : vector<1x1x4x128xbf16> to vector<4x128xbf16>
    %cst_212 = arith.constant dense<0.000000e+00> : vector<8x128xf32>
    %207 = tpu.matmul %204, %206, %cst_212 {dimension_numbers = #tpu.dot_dimension_numbers<[1], [0], [0], [1], [0, 0, 1, 1], [], []>} : vector<8x4xbf16>, vector<4x128xbf16>, vector<8x128xf32> -> vector<8x128xf32>
    %c9_i32_213 = arith.constant 9 : i32
    %208 = arith.addi %c9_i32_213, %0 : i32
    %c2_i32_214 = arith.constant 2 : i32
    %209 = arith.addi %208, %c2_i32_214 : i32
    %c0_i32_215 = arith.constant 0 : i32
    %210 = arith.addi %209, %c0_i32_215 : i32
    %c0_216 = arith.constant 0 : index
    %211 = arith.index_cast %210 : i32 to index
    %c0_217 = arith.constant 0 : index
    %c0_218 = arith.constant 0 : index
    %212 = vector.load %arg3[%c0_216, %211, %c0_217, %c0_218] : memref<1x36x9x4xbf16, #tpu.memory_space<vmem>>, vector<1x1x8x4xbf16>
    %213 = vector.shape_cast %212 : vector<1x1x8x4xbf16> to vector<8x4xbf16>
    %c0_219 = arith.constant 0 : index
    %c1_220 = arith.constant 1 : index
    %c0_221 = arith.constant 0 : index
    %c0_222 = arith.constant 0 : index
    %214 = vector.load %arg4[%c0_219, %c1_220, %c0_221, %c0_222] : memref<3x3x4x128xbf16, #tpu.memory_space<vmem>>, vector<1x1x4x128xbf16>
    %215 = vector.shape_cast %214 : vector<1x1x4x128xbf16> to vector<4x128xbf16>
    %cst_223 = arith.constant dense<0.000000e+00> : vector<8x128xf32>
    %216 = tpu.matmul %213, %215, %cst_223 {dimension_numbers = #tpu.dot_dimension_numbers<[1], [0], [0], [1], [0, 0, 1, 1], [], []>} : vector<8x4xbf16>, vector<4x128xbf16>, vector<8x128xf32> -> vector<8x128xf32>
    %217 = arith.addf %207, %216 : vector<8x128xf32>
    %c0_i32_224 = arith.constant 0 : i32
    %218 = arith.addi %c0_i32_224, %0 : i32
    %c2_i32_225 = arith.constant 2 : i32
    %219 = arith.addi %218, %c2_i32_225 : i32
    %c0_i32_226 = arith.constant 0 : i32
    %220 = arith.addi %219, %c0_i32_226 : i32
    %c0_227 = arith.constant 0 : index
    %221 = arith.index_cast %220 : i32 to index
    %c1_228 = arith.constant 1 : index
    %c0_229 = arith.constant 0 : index
    %222 = vector.load %arg3[%c0_227, %221, %c1_228, %c0_229] : memref<1x36x9x4xbf16, #tpu.memory_space<vmem>>, vector<1x1x8x4xbf16>
    %223 = vector.shape_cast %222 : vector<1x1x8x4xbf16> to vector<8x4xbf16>
    %c0_230 = arith.constant 0 : index
    %c2_231 = arith.constant 2 : index
    %c0_232 = arith.constant 0 : index
    %c0_233 = arith.constant 0 : index
    %224 = vector.load %arg4[%c0_230, %c2_231, %c0_232, %c0_233] : memref<3x3x4x128xbf16, #tpu.memory_space<vmem>>, vector<1x1x4x128xbf16>
    %225 = vector.shape_cast %224 : vector<1x1x4x128xbf16> to vector<4x128xbf16>
    %cst_234 = arith.constant dense<0.000000e+00> : vector<8x128xf32>
    %226 = tpu.matmul %223, %225, %cst_234 {dimension_numbers = #tpu.dot_dimension_numbers<[1], [0], [0], [1], [0, 0, 1, 1], [], []>} : vector<8x4xbf16>, vector<4x128xbf16>, vector<8x128xf32> -> vector<8x128xf32>
    %227 = arith.addf %217, %226 : vector<8x128xf32>
    %c18_i32_235 = arith.constant 18 : i32
    %228 = arith.addi %c18_i32_235, %0 : i32
    %c2_i32_236 = arith.constant 2 : i32
    %229 = arith.addi %228, %c2_i32_236 : i32
    %c0_i32_237 = arith.constant 0 : i32
    %230 = arith.addi %229, %c0_i32_237 : i32
    %c0_238 = arith.constant 0 : index
    %231 = arith.index_cast %230 : i32 to index
    %c0_239 = arith.constant 0 : index
    %c0_240 = arith.constant 0 : index
    %232 = vector.load %arg3[%c0_238, %231, %c0_239, %c0_240] : memref<1x36x9x4xbf16, #tpu.memory_space<vmem>>, vector<1x1x8x4xbf16>
    %233 = vector.shape_cast %232 : vector<1x1x8x4xbf16> to vector<8x4xbf16>
    %c1_241 = arith.constant 1 : index
    %c0_242 = arith.constant 0 : index
    %c0_243 = arith.constant 0 : index
    %c0_244 = arith.constant 0 : index
    %234 = vector.load %arg4[%c1_241, %c0_242, %c0_243, %c0_244] : memref<3x3x4x128xbf16, #tpu.memory_space<vmem>>, vector<1x1x4x128xbf16>
    %235 = vector.shape_cast %234 : vector<1x1x4x128xbf16> to vector<4x128xbf16>
    %cst_245 = arith.constant dense<0.000000e+00> : vector<8x128xf32>
    %236 = tpu.matmul %233, %235, %cst_245 {dimension_numbers = #tpu.dot_dimension_numbers<[1], [0], [0], [1], [0, 0, 1, 1], [], []>} : vector<8x4xbf16>, vector<4x128xbf16>, vector<8x128xf32> -> vector<8x128xf32>
    %237 = arith.addf %227, %236 : vector<8x128xf32>
    %c27_i32_246 = arith.constant 27 : i32
    %238 = arith.addi %c27_i32_246, %0 : i32
    %c2_i32_247 = arith.constant 2 : i32
    %239 = arith.addi %238, %c2_i32_247 : i32
    %c0_i32_248 = arith.constant 0 : i32
    %240 = arith.addi %239, %c0_i32_248 : i32
    %c0_249 = arith.constant 0 : index
    %241 = arith.index_cast %240 : i32 to index
    %c0_250 = arith.constant 0 : index
    %c0_251 = arith.constant 0 : index
    %242 = vector.load %arg3[%c0_249, %241, %c0_250, %c0_251] : memref<1x36x9x4xbf16, #tpu.memory_space<vmem>>, vector<1x1x8x4xbf16>
    %243 = vector.shape_cast %242 : vector<1x1x8x4xbf16> to vector<8x4xbf16>
    %c1_252 = arith.constant 1 : index
    %c1_253 = arith.constant 1 : index
    %c0_254 = arith.constant 0 : index
    %c0_255 = arith.constant 0 : index
    %244 = vector.load %arg4[%c1_252, %c1_253, %c0_254, %c0_255] : memref<3x3x4x128xbf16, #tpu.memory_space<vmem>>, vector<1x1x4x128xbf16>
    %245 = vector.shape_cast %244 : vector<1x1x4x128xbf16> to vector<4x128xbf16>
    %cst_256 = arith.constant dense<0.000000e+00> : vector<8x128xf32>
    %246 = tpu.matmul %243, %245, %cst_256 {dimension_numbers = #tpu.dot_dimension_numbers<[1], [0], [0], [1], [0, 0, 1, 1], [], []>} : vector<8x4xbf16>, vector<4x128xbf16>, vector<8x128xf32> -> vector<8x128xf32>
    %247 = arith.addf %237, %246 : vector<8x128xf32>
    %c18_i32_257 = arith.constant 18 : i32
    %248 = arith.addi %c18_i32_257, %0 : i32
    %c2_i32_258 = arith.constant 2 : i32
    %249 = arith.addi %248, %c2_i32_258 : i32
    %c0_i32_259 = arith.constant 0 : i32
    %250 = arith.addi %249, %c0_i32_259 : i32
    %c0_260 = arith.constant 0 : index
    %251 = arith.index_cast %250 : i32 to index
    %c1_261 = arith.constant 1 : index
    %c0_262 = arith.constant 0 : index
    %252 = vector.load %arg3[%c0_260, %251, %c1_261, %c0_262] : memref<1x36x9x4xbf16, #tpu.memory_space<vmem>>, vector<1x1x8x4xbf16>
    %253 = vector.shape_cast %252 : vector<1x1x8x4xbf16> to vector<8x4xbf16>
    %c1_263 = arith.constant 1 : index
    %c2_264 = arith.constant 2 : index
    %c0_265 = arith.constant 0 : index
    %c0_266 = arith.constant 0 : index
    %254 = vector.load %arg4[%c1_263, %c2_264, %c0_265, %c0_266] : memref<3x3x4x128xbf16, #tpu.memory_space<vmem>>, vector<1x1x4x128xbf16>
    %255 = vector.shape_cast %254 : vector<1x1x4x128xbf16> to vector<4x128xbf16>
    %cst_267 = arith.constant dense<0.000000e+00> : vector<8x128xf32>
    %256 = tpu.matmul %253, %255, %cst_267 {dimension_numbers = #tpu.dot_dimension_numbers<[1], [0], [0], [1], [0, 0, 1, 1], [], []>} : vector<8x4xbf16>, vector<4x128xbf16>, vector<8x128xf32> -> vector<8x128xf32>
    %257 = arith.addf %247, %256 : vector<8x128xf32>
    %c0_i32_268 = arith.constant 0 : i32
    %258 = arith.addi %c0_i32_268, %0 : i32
    %c2_i32_269 = arith.constant 2 : i32
    %259 = arith.addi %258, %c2_i32_269 : i32
    %c1_i32_270 = arith.constant 1 : i32
    %260 = arith.addi %259, %c1_i32_270 : i32
    %c0_271 = arith.constant 0 : index
    %261 = arith.index_cast %260 : i32 to index
    %c0_272 = arith.constant 0 : index
    %c0_273 = arith.constant 0 : index
    %262 = vector.load %arg3[%c0_271, %261, %c0_272, %c0_273] : memref<1x36x9x4xbf16, #tpu.memory_space<vmem>>, vector<1x1x8x4xbf16>
    %263 = vector.shape_cast %262 : vector<1x1x8x4xbf16> to vector<8x4xbf16>
    %c2_274 = arith.constant 2 : index
    %c0_275 = arith.constant 0 : index
    %c0_276 = arith.constant 0 : index
    %c0_277 = arith.constant 0 : index
    %264 = vector.load %arg4[%c2_274, %c0_275, %c0_276, %c0_277] : memref<3x3x4x128xbf16, #tpu.memory_space<vmem>>, vector<1x1x4x128xbf16>
    %265 = vector.shape_cast %264 : vector<1x1x4x128xbf16> to vector<4x128xbf16>
    %cst_278 = arith.constant dense<0.000000e+00> : vector<8x128xf32>
    %266 = tpu.matmul %263, %265, %cst_278 {dimension_numbers = #tpu.dot_dimension_numbers<[1], [0], [0], [1], [0, 0, 1, 1], [], []>} : vector<8x4xbf16>, vector<4x128xbf16>, vector<8x128xf32> -> vector<8x128xf32>
    %267 = arith.addf %257, %266 : vector<8x128xf32>
    %c9_i32_279 = arith.constant 9 : i32
    %268 = arith.addi %c9_i32_279, %0 : i32
    %c2_i32_280 = arith.constant 2 : i32
    %269 = arith.addi %268, %c2_i32_280 : i32
    %c1_i32_281 = arith.constant 1 : i32
    %270 = arith.addi %269, %c1_i32_281 : i32
    %c0_282 = arith.constant 0 : index
    %271 = arith.index_cast %270 : i32 to index
    %c0_283 = arith.constant 0 : index
    %c0_284 = arith.constant 0 : index
    %272 = vector.load %arg3[%c0_282, %271, %c0_283, %c0_284] : memref<1x36x9x4xbf16, #tpu.memory_space<vmem>>, vector<1x1x8x4xbf16>
    %273 = vector.shape_cast %272 : vector<1x1x8x4xbf16> to vector<8x4xbf16>
    %c2_285 = arith.constant 2 : index
    %c1_286 = arith.constant 1 : index
    %c0_287 = arith.constant 0 : index
    %c0_288 = arith.constant 0 : index
    %274 = vector.load %arg4[%c2_285, %c1_286, %c0_287, %c0_288] : memref<3x3x4x128xbf16, #tpu.memory_space<vmem>>, vector<1x1x4x128xbf16>
    %275 = vector.shape_cast %274 : vector<1x1x4x128xbf16> to vector<4x128xbf16>
    %cst_289 = arith.constant dense<0.000000e+00> : vector<8x128xf32>
    %276 = tpu.matmul %273, %275, %cst_289 {dimension_numbers = #tpu.dot_dimension_numbers<[1], [0], [0], [1], [0, 0, 1, 1], [], []>} : vector<8x4xbf16>, vector<4x128xbf16>, vector<8x128xf32> -> vector<8x128xf32>
    %277 = arith.addf %267, %276 : vector<8x128xf32>
    %c0_i32_290 = arith.constant 0 : i32
    %278 = arith.addi %c0_i32_290, %0 : i32
    %c2_i32_291 = arith.constant 2 : i32
    %279 = arith.addi %278, %c2_i32_291 : i32
    %c1_i32_292 = arith.constant 1 : i32
    %280 = arith.addi %279, %c1_i32_292 : i32
    %c0_293 = arith.constant 0 : index
    %281 = arith.index_cast %280 : i32 to index
    %c1_294 = arith.constant 1 : index
    %c0_295 = arith.constant 0 : index
    %282 = vector.load %arg3[%c0_293, %281, %c1_294, %c0_295] : memref<1x36x9x4xbf16, #tpu.memory_space<vmem>>, vector<1x1x8x4xbf16>
    %283 = vector.shape_cast %282 : vector<1x1x8x4xbf16> to vector<8x4xbf16>
    %c2_296 = arith.constant 2 : index
    %c2_297 = arith.constant 2 : index
    %c0_298 = arith.constant 0 : index
    %c0_299 = arith.constant 0 : index
    %284 = vector.load %arg4[%c2_296, %c2_297, %c0_298, %c0_299] : memref<3x3x4x128xbf16, #tpu.memory_space<vmem>>, vector<1x1x4x128xbf16>
    %285 = vector.shape_cast %284 : vector<1x1x4x128xbf16> to vector<4x128xbf16>
    %cst_300 = arith.constant dense<0.000000e+00> : vector<8x128xf32>
    %286 = tpu.matmul %283, %285, %cst_300 {dimension_numbers = #tpu.dot_dimension_numbers<[1], [0], [0], [1], [0, 0, 1, 1], [], []>} : vector<8x4xbf16>, vector<4x128xbf16>, vector<8x128xf32> -> vector<8x128xf32>
    %287 = arith.addf %277, %286 : vector<8x128xf32>
    %288 = vector.broadcast %1 : vector<1x128xf32> to vector<8x128xf32>
    %289 = arith.mulf %287, %288 : vector<8x128xf32>
    %290 = vector.broadcast %2 : vector<1x128xf32> to vector<8x128xf32>
    %291 = arith.addf %289, %290 : vector<8x128xf32>
    %cst_301 = arith.constant 0.000000e+00 : f32
    %292 = vector.broadcast %cst_301 : f32 to vector<8x128xf32>
    %293 = arith.maximumf %291, %292 : vector<8x128xf32>
    %c0_302 = arith.constant 0 : index
    %c2_303 = arith.constant 2 : index
    %c0_304 = arith.constant 0 : index
    %c0_305 = arith.constant 0 : index
    %294 = vector.load %arg7[%c0_302, %c2_303, %c0_304, %c0_305] : memref<1x8x8x128xf32, #tpu.memory_space<vmem>>, vector<1x1x8x128xf32>
    %295 = vector.shape_cast %294 : vector<1x1x8x128xf32> to vector<8x128xf32>
    %296 = vector.shape_cast %293 : vector<8x128xf32> to vector<1x1x8x128xf32>
    tpu.vector_store %arg7[%c0_302, %c2_303, %c0_304, %c0_305], %296 {strides = array<i32>} : memref<1x8x8x128xf32, #tpu.memory_space<vmem>>, vector<1x1x8x128xf32>,
    %c0_i32_306 = arith.constant 0 : i32
    %297 = arith.addi %c0_i32_306, %0 : i32
    %c3_i32 = arith.constant 3 : i32
    %298 = arith.addi %297, %c3_i32 : i32
    %c0_i32_307 = arith.constant 0 : i32
    %299 = arith.addi %298, %c0_i32_307 : i32
    %c0_308 = arith.constant 0 : index
    %300 = arith.index_cast %299 : i32 to index
    %c0_309 = arith.constant 0 : index
    %c0_310 = arith.constant 0 : index
    %301 = vector.load %arg3[%c0_308, %300, %c0_309, %c0_310] : memref<1x36x9x4xbf16, #tpu.memory_space<vmem>>, vector<1x1x8x4xbf16>
    %302 = vector.shape_cast %301 : vector<1x1x8x4xbf16> to vector<8x4xbf16>
    %c0_311 = arith.constant 0 : index
    %c0_312 = arith.constant 0 : index
    %c0_313 = arith.constant 0 : index
    %c0_314 = arith.constant 0 : index
    %303 = vector.load %arg4[%c0_311, %c0_312, %c0_313, %c0_314] : memref<3x3x4x128xbf16, #tpu.memory_space<vmem>>, vector<1x1x4x128xbf16>
    %304 = vector.shape_cast %303 : vector<1x1x4x128xbf16> to vector<4x128xbf16>
    %cst_315 = arith.constant dense<0.000000e+00> : vector<8x128xf32>
    %305 = tpu.matmul %302, %304, %cst_315 {dimension_numbers = #tpu.dot_dimension_numbers<[1], [0], [0], [1], [0, 0, 1, 1], [], []>} : vector<8x4xbf16>, vector<4x128xbf16>, vector<8x128xf32> -> vector<8x128xf32>
    %c9_i32_316 = arith.constant 9 : i32
    %306 = arith.addi %c9_i32_316, %0 : i32
    %c3_i32_317 = arith.constant 3 : i32
    %307 = arith.addi %306, %c3_i32_317 : i32
    %c0_i32_318 = arith.constant 0 : i32
    %308 = arith.addi %307, %c0_i32_318 : i32
    %c0_319 = arith.constant 0 : index
    %309 = arith.index_cast %308 : i32 to index
    %c0_320 = arith.constant 0 : index
    %c0_321 = arith.constant 0 : index
    %310 = vector.load %arg3[%c0_319, %309, %c0_320, %c0_321] : memref<1x36x9x4xbf16, #tpu.memory_space<vmem>>, vector<1x1x8x4xbf16>
    %311 = vector.shape_cast %310 : vector<1x1x8x4xbf16> to vector<8x4xbf16>
    %c0_322 = arith.constant 0 : index
    %c1_323 = arith.constant 1 : index
    %c0_324 = arith.constant 0 : index
    %c0_325 = arith.constant 0 : index
    %312 = vector.load %arg4[%c0_322, %c1_323, %c0_324, %c0_325] : memref<3x3x4x128xbf16, #tpu.memory_space<vmem>>, vector<1x1x4x128xbf16>
    %313 = vector.shape_cast %312 : vector<1x1x4x128xbf16> to vector<4x128xbf16>
    %cst_326 = arith.constant dense<0.000000e+00> : vector<8x128xf32>
    %314 = tpu.matmul %311, %313, %cst_326 {dimension_numbers = #tpu.dot_dimension_numbers<[1], [0], [0], [1], [0, 0, 1, 1], [], []>} : vector<8x4xbf16>, vector<4x128xbf16>, vector<8x128xf32> -> vector<8x128xf32>
    %315 = arith.addf %305, %314 : vector<8x128xf32>
    %c0_i32_327 = arith.constant 0 : i32
    %316 = arith.addi %c0_i32_327, %0 : i32
    %c3_i32_328 = arith.constant 3 : i32
    %317 = arith.addi %316, %c3_i32_328 : i32
    %c0_i32_329 = arith.constant 0 : i32
    %318 = arith.addi %317, %c0_i32_329 : i32
    %c0_330 = arith.constant 0 : index
    %319 = arith.index_cast %318 : i32 to index
    %c1_331 = arith.constant 1 : index
    %c0_332 = arith.constant 0 : index
    %320 = vector.load %arg3[%c0_330, %319, %c1_331, %c0_332] : memref<1x36x9x4xbf16, #tpu.memory_space<vmem>>, vector<1x1x8x4xbf16>
    %321 = vector.shape_cast %320 : vector<1x1x8x4xbf16> to vector<8x4xbf16>
    %c0_333 = arith.constant 0 : index
    %c2_334 = arith.constant 2 : index
    %c0_335 = arith.constant 0 : index
    %c0_336 = arith.constant 0 : index
    %322 = vector.load %arg4[%c0_333, %c2_334, %c0_335, %c0_336] : memref<3x3x4x128xbf16, #tpu.memory_space<vmem>>, vector<1x1x4x128xbf16>
    %323 = vector.shape_cast %322 : vector<1x1x4x128xbf16> to vector<4x128xbf16>
    %cst_337 = arith.constant dense<0.000000e+00> : vector<8x128xf32>
    %324 = tpu.matmul %321, %323, %cst_337 {dimension_numbers = #tpu.dot_dimension_numbers<[1], [0], [0], [1], [0, 0, 1, 1], [], []>} : vector<8x4xbf16>, vector<4x128xbf16>, vector<8x128xf32> -> vector<8x128xf32>
    %325 = arith.addf %315, %324 : vector<8x128xf32>
    %c18_i32_338 = arith.constant 18 : i32
    %326 = arith.addi %c18_i32_338, %0 : i32
    %c3_i32_339 = arith.constant 3 : i32
    %327 = arith.addi %326, %c3_i32_339 : i32
    %c0_i32_340 = arith.constant 0 : i32
    %328 = arith.addi %327, %c0_i32_340 : i32
    %c0_341 = arith.constant 0 : index
    %329 = arith.index_cast %328 : i32 to index
    %c0_342 = arith.constant 0 : index
    %c0_343 = arith.constant 0 : index
    %330 = vector.load %arg3[%c0_341, %329, %c0_342, %c0_343] : memref<1x36x9x4xbf16, #tpu.memory_space<vmem>>, vector<1x1x8x4xbf16>
    %331 = vector.shape_cast %330 : vector<1x1x8x4xbf16> to vector<8x4xbf16>
    %c1_344 = arith.constant 1 : index
    %c0_345 = arith.constant 0 : index
    %c0_346 = arith.constant 0 : index
    %c0_347 = arith.constant 0 : index
    %332 = vector.load %arg4[%c1_344, %c0_345, %c0_346, %c0_347] : memref<3x3x4x128xbf16, #tpu.memory_space<vmem>>, vector<1x1x4x128xbf16>
    %333 = vector.shape_cast %332 : vector<1x1x4x128xbf16> to vector<4x128xbf16>
    %cst_348 = arith.constant dense<0.000000e+00> : vector<8x128xf32>
    %334 = tpu.matmul %331, %333, %cst_348 {dimension_numbers = #tpu.dot_dimension_numbers<[1], [0], [0], [1], [0, 0, 1, 1], [], []>} : vector<8x4xbf16>, vector<4x128xbf16>, vector<8x128xf32> -> vector<8x128xf32>
    %335 = arith.addf %325, %334 : vector<8x128xf32>
    %c27_i32_349 = arith.constant 27 : i32
    %336 = arith.addi %c27_i32_349, %0 : i32
    %c3_i32_350 = arith.constant 3 : i32
    %337 = arith.addi %336, %c3_i32_350 : i32
    %c0_i32_351 = arith.constant 0 : i32
    %338 = arith.addi %337, %c0_i32_351 : i32
    %c0_352 = arith.constant 0 : index
    %339 = arith.index_cast %338 : i32 to index
    %c0_353 = arith.constant 0 : index
    %c0_354 = arith.constant 0 : index
    %340 = vector.load %arg3[%c0_352, %339, %c0_353, %c0_354] : memref<1x36x9x4xbf16, #tpu.memory_space<vmem>>, vector<1x1x8x4xbf16>
    %341 = vector.shape_cast %340 : vector<1x1x8x4xbf16> to vector<8x4xbf16>
    %c1_355 = arith.constant 1 : index
    %c1_356 = arith.constant 1 : index
    %c0_357 = arith.constant 0 : index
    %c0_358 = arith.constant 0 : index
    %342 = vector.load %arg4[%c1_355, %c1_356, %c0_357, %c0_358] : memref<3x3x4x128xbf16, #tpu.memory_space<vmem>>, vector<1x1x4x128xbf16>
    %343 = vector.shape_cast %342 : vector<1x1x4x128xbf16> to vector<4x128xbf16>
    %cst_359 = arith.constant dense<0.000000e+00> : vector<8x128xf32>
    %344 = tpu.matmul %341, %343, %cst_359 {dimension_numbers = #tpu.dot_dimension_numbers<[1], [0], [0], [1], [0, 0, 1, 1], [], []>} : vector<8x4xbf16>, vector<4x128xbf16>, vector<8x128xf32> -> vector<8x128xf32>
    %345 = arith.addf %335, %344 : vector<8x128xf32>
    %c18_i32_360 = arith.constant 18 : i32
    %346 = arith.addi %c18_i32_360, %0 : i32
    %c3_i32_361 = arith.constant 3 : i32
    %347 = arith.addi %346, %c3_i32_361 : i32
    %c0_i32_362 = arith.constant 0 : i32
    %348 = arith.addi %347, %c0_i32_362 : i32
    %c0_363 = arith.constant 0 : index
    %349 = arith.index_cast %348 : i32 to index
    %c1_364 = arith.constant 1 : index
    %c0_365 = arith.constant 0 : index
    %350 = vector.load %arg3[%c0_363, %349, %c1_364, %c0_365] : memref<1x36x9x4xbf16, #tpu.memory_space<vmem>>, vector<1x1x8x4xbf16>
    %351 = vector.shape_cast %350 : vector<1x1x8x4xbf16> to vector<8x4xbf16>
    %c1_366 = arith.constant 1 : index
    %c2_367 = arith.constant 2 : index
    %c0_368 = arith.constant 0 : index
    %c0_369 = arith.constant 0 : index
    %352 = vector.load %arg4[%c1_366, %c2_367, %c0_368, %c0_369] : memref<3x3x4x128xbf16, #tpu.memory_space<vmem>>, vector<1x1x4x128xbf16>
    %353 = vector.shape_cast %352 : vector<1x1x4x128xbf16> to vector<4x128xbf16>
    %cst_370 = arith.constant dense<0.000000e+00> : vector<8x128xf32>
    %354 = tpu.matmul %351, %353, %cst_370 {dimension_numbers = #tpu.dot_dimension_numbers<[1], [0], [0], [1], [0, 0, 1, 1], [], []>} : vector<8x4xbf16>, vector<4x128xbf16>, vector<8x128xf32> -> vector<8x128xf32>
    %355 = arith.addf %345, %354 : vector<8x128xf32>
    %c0_i32_371 = arith.constant 0 : i32
    %356 = arith.addi %c0_i32_371, %0 : i32
    %c3_i32_372 = arith.constant 3 : i32
    %357 = arith.addi %356, %c3_i32_372 : i32
    %c1_i32_373 = arith.constant 1 : i32
    %358 = arith.addi %357, %c1_i32_373 : i32
    %c0_374 = arith.constant 0 : index
    %359 = arith.index_cast %358 : i32 to index
    %c0_375 = arith.constant 0 : index
    %c0_376 = arith.constant 0 : index
    %360 = vector.load %arg3[%c0_374, %359, %c0_375, %c0_376] : memref<1x36x9x4xbf16, #tpu.memory_space<vmem>>, vector<1x1x8x4xbf16>
    %361 = vector.shape_cast %360 : vector<1x1x8x4xbf16> to vector<8x4xbf16>
    %c2_377 = arith.constant 2 : index
    %c0_378 = arith.constant 0 : index
    %c0_379 = arith.constant 0 : index
    %c0_380 = arith.constant 0 : index
    %362 = vector.load %arg4[%c2_377, %c0_378, %c0_379, %c0_380] : memref<3x3x4x128xbf16, #tpu.memory_space<vmem>>, vector<1x1x4x128xbf16>
    %363 = vector.shape_cast %362 : vector<1x1x4x128xbf16> to vector<4x128xbf16>
    %cst_381 = arith.constant dense<0.000000e+00> : vector<8x128xf32>
    %364 = tpu.matmul %361, %363, %cst_381 {dimension_numbers = #tpu.dot_dimension_numbers<[1], [0], [0], [1], [0, 0, 1, 1], [], []>} : vector<8x4xbf16>, vector<4x128xbf16>, vector<8x128xf32> -> vector<8x128xf32>
    %365 = arith.addf %355, %364 : vector<8x128xf32>
    %c9_i32_382 = arith.constant 9 : i32
    %366 = arith.addi %c9_i32_382, %0 : i32
    %c3_i32_383 = arith.constant 3 : i32
    %367 = arith.addi %366, %c3_i32_383 : i32
    %c1_i32_384 = arith.constant 1 : i32
    %368 = arith.addi %367, %c1_i32_384 : i32
    %c0_385 = arith.constant 0 : index
    %369 = arith.index_cast %368 : i32 to index
    %c0_386 = arith.constant 0 : index
    %c0_387 = arith.constant 0 : index
    %370 = vector.load %arg3[%c0_385, %369, %c0_386, %c0_387] : memref<1x36x9x4xbf16, #tpu.memory_space<vmem>>, vector<1x1x8x4xbf16>
    %371 = vector.shape_cast %370 : vector<1x1x8x4xbf16> to vector<8x4xbf16>
    %c2_388 = arith.constant 2 : index
    %c1_389 = arith.constant 1 : index
    %c0_390 = arith.constant 0 : index
    %c0_391 = arith.constant 0 : index
    %372 = vector.load %arg4[%c2_388, %c1_389, %c0_390, %c0_391] : memref<3x3x4x128xbf16, #tpu.memory_space<vmem>>, vector<1x1x4x128xbf16>
    %373 = vector.shape_cast %372 : vector<1x1x4x128xbf16> to vector<4x128xbf16>
    %cst_392 = arith.constant dense<0.000000e+00> : vector<8x128xf32>
    %374 = tpu.matmul %371, %373, %cst_392 {dimension_numbers = #tpu.dot_dimension_numbers<[1], [0], [0], [1], [0, 0, 1, 1], [], []>} : vector<8x4xbf16>, vector<4x128xbf16>, vector<8x128xf32> -> vector<8x128xf32>
    %375 = arith.addf %365, %374 : vector<8x128xf32>
    %c0_i32_393 = arith.constant 0 : i32
    %376 = arith.addi %c0_i32_393, %0 : i32
    %c3_i32_394 = arith.constant 3 : i32
    %377 = arith.addi %376, %c3_i32_394 : i32
    %c1_i32_395 = arith.constant 1 : i32
    %378 = arith.addi %377, %c1_i32_395 : i32
    %c0_396 = arith.constant 0 : index
    %379 = arith.index_cast %378 : i32 to index
    %c1_397 = arith.constant 1 : index
    %c0_398 = arith.constant 0 : index
    %380 = vector.load %arg3[%c0_396, %379, %c1_397, %c0_398] : memref<1x36x9x4xbf16, #tpu.memory_space<vmem>>, vector<1x1x8x4xbf16>
    %381 = vector.shape_cast %380 : vector<1x1x8x4xbf16> to vector<8x4xbf16>
    %c2_399 = arith.constant 2 : index
    %c2_400 = arith.constant 2 : index
    %c0_401 = arith.constant 0 : index
    %c0_402 = arith.constant 0 : index
    %382 = vector.load %arg4[%c2_399, %c2_400, %c0_401, %c0_402] : memref<3x3x4x128xbf16, #tpu.memory_space<vmem>>, vector<1x1x4x128xbf16>
    %383 = vector.shape_cast %382 : vector<1x1x4x128xbf16> to vector<4x128xbf16>
    %cst_403 = arith.constant dense<0.000000e+00> : vector<8x128xf32>
    %384 = tpu.matmul %381, %383, %cst_403 {dimension_numbers = #tpu.dot_dimension_numbers<[1], [0], [0], [1], [0, 0, 1, 1], [], []>} : vector<8x4xbf16>, vector<4x128xbf16>, vector<8x128xf32> -> vector<8x128xf32>
    %385 = arith.addf %375, %384 : vector<8x128xf32>
    %386 = vector.broadcast %1 : vector<1x128xf32> to vector<8x128xf32>
    %387 = arith.mulf %385, %386 : vector<8x128xf32>
    %388 = vector.broadcast %2 : vector<1x128xf32> to vector<8x128xf32>
    %389 = arith.addf %387, %388 : vector<8x128xf32>
    %cst_404 = arith.constant 0.000000e+00 : f32
    %390 = vector.broadcast %cst_404 : f32 to vector<8x128xf32>
    %391 = arith.maximumf %389, %390 : vector<8x128xf32>
    %c0_405 = arith.constant 0 : index
    %c3 = arith.constant 3 : index
    %c0_406 = arith.constant 0 : index
    %c0_407 = arith.constant 0 : index
    %392 = vector.load %arg7[%c0_405, %c3, %c0_406, %c0_407] : memref<1x8x8x128xf32, #tpu.memory_space<vmem>>, vector<1x1x8x128xf32>
    %393 = vector.shape_cast %392 : vector<1x1x8x128xf32> to vector<8x128xf32>
    %394 = vector.shape_cast %391 : vector<8x128xf32> to vector<1x1x8x128xf32>
    tpu.vector_store %arg7[%c0_405, %c3, %c0_406, %c0_407], %394 {strides = array<i32>} : memref<1x8x8x128xf32, #tpu.memory_space<vmem>>, vector<1x1x8x128xf32>,
    %c0_i32_408 = arith.constant 0 : i32
    %395 = arith.addi %c0_i32_408, %0 : i32
    %c4_i32 = arith.constant 4 : i32
    %396 = arith.addi %395, %c4_i32 : i32
    %c0_i32_409 = arith.constant 0 : i32
    %397 = arith.addi %396, %c0_i32_409 : i32
    %c0_410 = arith.constant 0 : index
    %398 = arith.index_cast %397 : i32 to index
    %c0_411 = arith.constant 0 : index
    %c0_412 = arith.constant 0 : index
    %399 = vector.load %arg3[%c0_410, %398, %c0_411, %c0_412] : memref<1x36x9x4xbf16, #tpu.memory_space<vmem>>, vector<1x1x8x4xbf16>
    %400 = vector.shape_cast %399 : vector<1x1x8x4xbf16> to vector<8x4xbf16>
    %c0_413 = arith.constant 0 : index
    %c0_414 = arith.constant 0 : index
    %c0_415 = arith.constant 0 : index
    %c0_416 = arith.constant 0 : index
    %401 = vector.load %arg4[%c0_413, %c0_414, %c0_415, %c0_416] : memref<3x3x4x128xbf16, #tpu.memory_space<vmem>>, vector<1x1x4x128xbf16>
    %402 = vector.shape_cast %401 : vector<1x1x4x128xbf16> to vector<4x128xbf16>
    %cst_417 = arith.constant dense<0.000000e+00> : vector<8x128xf32>
    %403 = tpu.matmul %400, %402, %cst_417 {dimension_numbers = #tpu.dot_dimension_numbers<[1], [0], [0], [1], [0, 0, 1, 1], [], []>} : vector<8x4xbf16>, vector<4x128xbf16>, vector<8x128xf32> -> vector<8x128xf32>
    %c9_i32_418 = arith.constant 9 : i32
    %404 = arith.addi %c9_i32_418, %0 : i32
    %c4_i32_419 = arith.constant 4 : i32
    %405 = arith.addi %404, %c4_i32_419 : i32
    %c0_i32_420 = arith.constant 0 : i32
    %406 = arith.addi %405, %c0_i32_420 : i32
    %c0_421 = arith.constant 0 : index
    %407 = arith.index_cast %406 : i32 to index
    %c0_422 = arith.constant 0 : index
    %c0_423 = arith.constant 0 : index
    %408 = vector.load %arg3[%c0_421, %407, %c0_422, %c0_423] : memref<1x36x9x4xbf16, #tpu.memory_space<vmem>>, vector<1x1x8x4xbf16>
    %409 = vector.shape_cast %408 : vector<1x1x8x4xbf16> to vector<8x4xbf16>
    %c0_424 = arith.constant 0 : index
    %c1_425 = arith.constant 1 : index
    %c0_426 = arith.constant 0 : index
    %c0_427 = arith.constant 0 : index
    %410 = vector.load %arg4[%c0_424, %c1_425, %c0_426, %c0_427] : memref<3x3x4x128xbf16, #tpu.memory_space<vmem>>, vector<1x1x4x128xbf16>
    %411 = vector.shape_cast %410 : vector<1x1x4x128xbf16> to vector<4x128xbf16>
    %cst_428 = arith.constant dense<0.000000e+00> : vector<8x128xf32>
    %412 = tpu.matmul %409, %411, %cst_428 {dimension_numbers = #tpu.dot_dimension_numbers<[1], [0], [0], [1], [0, 0, 1, 1], [], []>} : vector<8x4xbf16>, vector<4x128xbf16>, vector<8x128xf32> -> vector<8x128xf32>
    %413 = arith.addf %403, %412 : vector<8x128xf32>
    %c0_i32_429 = arith.constant 0 : i32
    %414 = arith.addi %c0_i32_429, %0 : i32
    %c4_i32_430 = arith.constant 4 : i32
    %415 = arith.addi %414, %c4_i32_430 : i32
    %c0_i32_431 = arith.constant 0 : i32
    %416 = arith.addi %415, %c0_i32_431 : i32
    %c0_432 = arith.constant 0 : index
    %417 = arith.index_cast %416 : i32 to index
    %c1_433 = arith.constant 1 : index
    %c0_434 = arith.constant 0 : index
    %418 = vector.load %arg3[%c0_432, %417, %c1_433, %c0_434] : memref<1x36x9x4xbf16, #tpu.memory_space<vmem>>, vector<1x1x8x4xbf16>
    %419 = vector.shape_cast %418 : vector<1x1x8x4xbf16> to vector<8x4xbf16>
    %c0_435 = arith.constant 0 : index
    %c2_436 = arith.constant 2 : index
    %c0_437 = arith.constant 0 : index
    %c0_438 = arith.constant 0 : index
    %420 = vector.load %arg4[%c0_435, %c2_436, %c0_437, %c0_438] : memref<3x3x4x128xbf16, #tpu.memory_space<vmem>>, vector<1x1x4x128xbf16>
    %421 = vector.shape_cast %420 : vector<1x1x4x128xbf16> to vector<4x128xbf16>
    %cst_439 = arith.constant dense<0.000000e+00> : vector<8x128xf32>
    %422 = tpu.matmul %419, %421, %cst_439 {dimension_numbers = #tpu.dot_dimension_numbers<[1], [0], [0], [1], [0, 0, 1, 1], [], []>} : vector<8x4xbf16>, vector<4x128xbf16>, vector<8x128xf32> -> vector<8x128xf32>
    %423 = arith.addf %413, %422 : vector<8x128xf32>
    %c18_i32_440 = arith.constant 18 : i32
    %424 = arith.addi %c18_i32_440, %0 : i32
    %c4_i32_441 = arith.constant 4 : i32
    %425 = arith.addi %424, %c4_i32_441 : i32
    %c0_i32_442 = arith.constant 0 : i32
    %426 = arith.addi %425, %c0_i32_442 : i32
    %c0_443 = arith.constant 0 : index
    %427 = arith.index_cast %426 : i32 to index
    %c0_444 = arith.constant 0 : index
    %c0_445 = arith.constant 0 : index
    %428 = vector.load %arg3[%c0_443, %427, %c0_444, %c0_445] : memref<1x36x9x4xbf16, #tpu.memory_space<vmem>>, vector<1x1x8x4xbf16>
    %429 = vector.shape_cast %428 : vector<1x1x8x4xbf16> to vector<8x4xbf16>
    %c1_446 = arith.constant 1 : index
    %c0_447 = arith.constant 0 : index
    %c0_448 = arith.constant 0 : index
    %c0_449 = arith.constant 0 : index
    %430 = vector.load %arg4[%c1_446, %c0_447, %c0_448, %c0_449] : memref<3x3x4x128xbf16, #tpu.memory_space<vmem>>, vector<1x1x4x128xbf16>
    %431 = vector.shape_cast %430 : vector<1x1x4x128xbf16> to vector<4x128xbf16>
    %cst_450 = arith.constant dense<0.000000e+00> : vector<8x128xf32>
    %432 = tpu.matmul %429, %431, %cst_450 {dimension_numbers = #tpu.dot_dimension_numbers<[1], [0], [0], [1], [0, 0, 1, 1], [], []>} : vector<8x4xbf16>, vector<4x128xbf16>, vector<8x128xf32> -> vector<8x128xf32>
    %433 = arith.addf %423, %432 : vector<8x128xf32>
    %c27_i32_451 = arith.constant 27 : i32
    %434 = arith.addi %c27_i32_451, %0 : i32
    %c4_i32_452 = arith.constant 4 : i32
    %435 = arith.addi %434, %c4_i32_452 : i32
    %c0_i32_453 = arith.constant 0 : i32
    %436 = arith.addi %435, %c0_i32_453 : i32
    %c0_454 = arith.constant 0 : index
    %437 = arith.index_cast %436 : i32 to index
    %c0_455 = arith.constant 0 : index
    %c0_456 = arith.constant 0 : index
    %438 = vector.load %arg3[%c0_454, %437, %c0_455, %c0_456] : memref<1x36x9x4xbf16, #tpu.memory_space<vmem>>, vector<1x1x8x4xbf16>
    %439 = vector.shape_cast %438 : vector<1x1x8x4xbf16> to vector<8x4xbf16>
    %c1_457 = arith.constant 1 : index
    %c1_458 = arith.constant 1 : index
    %c0_459 = arith.constant 0 : index
    %c0_460 = arith.constant 0 : index
    %440 = vector.load %arg4[%c1_457, %c1_458, %c0_459, %c0_460] : memref<3x3x4x128xbf16, #tpu.memory_space<vmem>>, vector<1x1x4x128xbf16>
    %441 = vector.shape_cast %440 : vector<1x1x4x128xbf16> to vector<4x128xbf16>
    %cst_461 = arith.constant dense<0.000000e+00> : vector<8x128xf32>
    %442 = tpu.matmul %439, %441, %cst_461 {dimension_numbers = #tpu.dot_dimension_numbers<[1], [0], [0], [1], [0, 0, 1, 1], [], []>} : vector<8x4xbf16>, vector<4x128xbf16>, vector<8x128xf32> -> vector<8x128xf32>
    %443 = arith.addf %433, %442 : vector<8x128xf32>
    %c18_i32_462 = arith.constant 18 : i32
    %444 = arith.addi %c18_i32_462, %0 : i32
    %c4_i32_463 = arith.constant 4 : i32
    %445 = arith.addi %444, %c4_i32_463 : i32
    %c0_i32_464 = arith.constant 0 : i32
    %446 = arith.addi %445, %c0_i32_464 : i32
    %c0_465 = arith.constant 0 : index
    %447 = arith.index_cast %446 : i32 to index
    %c1_466 = arith.constant 1 : index
    %c0_467 = arith.constant 0 : index
    %448 = vector.load %arg3[%c0_465, %447, %c1_466, %c0_467] : memref<1x36x9x4xbf16, #tpu.memory_space<vmem>>, vector<1x1x8x4xbf16>
    %449 = vector.shape_cast %448 : vector<1x1x8x4xbf16> to vector<8x4xbf16>
    %c1_468 = arith.constant 1 : index
    %c2_469 = arith.constant 2 : index
    %c0_470 = arith.constant 0 : index
    %c0_471 = arith.constant 0 : index
    %450 = vector.load %arg4[%c1_468, %c2_469, %c0_470, %c0_471] : memref<3x3x4x128xbf16, #tpu.memory_space<vmem>>, vector<1x1x4x128xbf16>
    %451 = vector.shape_cast %450 : vector<1x1x4x128xbf16> to vector<4x128xbf16>
    %cst_472 = arith.constant dense<0.000000e+00> : vector<8x128xf32>
    %452 = tpu.matmul %449, %451, %cst_472 {dimension_numbers = #tpu.dot_dimension_numbers<[1], [0], [0], [1], [0, 0, 1, 1], [], []>} : vector<8x4xbf16>, vector<4x128xbf16>, vector<8x128xf32> -> vector<8x128xf32>
    %453 = arith.addf %443, %452 : vector<8x128xf32>
    %c0_i32_473 = arith.constant 0 : i32
    %454 = arith.addi %c0_i32_473, %0 : i32
    %c4_i32_474 = arith.constant 4 : i32
    %455 = arith.addi %454, %c4_i32_474 : i32
    %c1_i32_475 = arith.constant 1 : i32
    %456 = arith.addi %455, %c1_i32_475 : i32
    %c0_476 = arith.constant 0 : index
    %457 = arith.index_cast %456 : i32 to index
    %c0_477 = arith.constant 0 : index
    %c0_478 = arith.constant 0 : index
    %458 = vector.load %arg3[%c0_476, %457, %c0_477, %c0_478] : memref<1x36x9x4xbf16, #tpu.memory_space<vmem>>, vector<1x1x8x4xbf16>
    %459 = vector.shape_cast %458 : vector<1x1x8x4xbf16> to vector<8x4xbf16>
    %c2_479 = arith.constant 2 : index
    %c0_480 = arith.constant 0 : index
    %c0_481 = arith.constant 0 : index
    %c0_482 = arith.constant 0 : index
    %460 = vector.load %arg4[%c2_479, %c0_480, %c0_481, %c0_482] : memref<3x3x4x128xbf16, #tpu.memory_space<vmem>>, vector<1x1x4x128xbf16>
    %461 = vector.shape_cast %460 : vector<1x1x4x128xbf16> to vector<4x128xbf16>
    %cst_483 = arith.constant dense<0.000000e+00> : vector<8x128xf32>
    %462 = tpu.matmul %459, %461, %cst_483 {dimension_numbers = #tpu.dot_dimension_numbers<[1], [0], [0], [1], [0, 0, 1, 1], [], []>} : vector<8x4xbf16>, vector<4x128xbf16>, vector<8x128xf32> -> vector<8x128xf32>
    %463 = arith.addf %453, %462 : vector<8x128xf32>
    %c9_i32_484 = arith.constant 9 : i32
    %464 = arith.addi %c9_i32_484, %0 : i32
    %c4_i32_485 = arith.constant 4 : i32
    %465 = arith.addi %464, %c4_i32_485 : i32
    %c1_i32_486 = arith.constant 1 : i32
    %466 = arith.addi %465, %c1_i32_486 : i32
    %c0_487 = arith.constant 0 : index
    %467 = arith.index_cast %466 : i32 to index
    %c0_488 = arith.constant 0 : index
    %c0_489 = arith.constant 0 : index
    %468 = vector.load %arg3[%c0_487, %467, %c0_488, %c0_489] : memref<1x36x9x4xbf16, #tpu.memory_space<vmem>>, vector<1x1x8x4xbf16>
    %469 = vector.shape_cast %468 : vector<1x1x8x4xbf16> to vector<8x4xbf16>
    %c2_490 = arith.constant 2 : index
    %c1_491 = arith.constant 1 : index
    %c0_492 = arith.constant 0 : index
    %c0_493 = arith.constant 0 : index
    %470 = vector.load %arg4[%c2_490, %c1_491, %c0_492, %c0_493] : memref<3x3x4x128xbf16, #tpu.memory_space<vmem>>, vector<1x1x4x128xbf16>
    %471 = vector.shape_cast %470 : vector<1x1x4x128xbf16> to vector<4x128xbf16>
    %cst_494 = arith.constant dense<0.000000e+00> : vector<8x128xf32>
    %472 = tpu.matmul %469, %471, %cst_494 {dimension_numbers = #tpu.dot_dimension_numbers<[1], [0], [0], [1], [0, 0, 1, 1], [], []>} : vector<8x4xbf16>, vector<4x128xbf16>, vector<8x128xf32> -> vector<8x128xf32>
    %473 = arith.addf %463, %472 : vector<8x128xf32>
    %c0_i32_495 = arith.constant 0 : i32
    %474 = arith.addi %c0_i32_495, %0 : i32
    %c4_i32_496 = arith.constant 4 : i32
    %475 = arith.addi %474, %c4_i32_496 : i32
    %c1_i32_497 = arith.constant 1 : i32
    %476 = arith.addi %475, %c1_i32_497 : i32
    %c0_498 = arith.constant 0 : index
    %477 = arith.index_cast %476 : i32 to index
    %c1_499 = arith.constant 1 : index
    %c0_500 = arith.constant 0 : index
    %478 = vector.load %arg3[%c0_498, %477, %c1_499, %c0_500] : memref<1x36x9x4xbf16, #tpu.memory_space<vmem>>, vector<1x1x8x4xbf16>
    %479 = vector.shape_cast %478 : vector<1x1x8x4xbf16> to vector<8x4xbf16>
    %c2_501 = arith.constant 2 : index
    %c2_502 = arith.constant 2 : index
    %c0_503 = arith.constant 0 : index
    %c0_504 = arith.constant 0 : index
    %480 = vector.load %arg4[%c2_501, %c2_502, %c0_503, %c0_504] : memref<3x3x4x128xbf16, #tpu.memory_space<vmem>>, vector<1x1x4x128xbf16>
    %481 = vector.shape_cast %480 : vector<1x1x4x128xbf16> to vector<4x128xbf16>
    %cst_505 = arith.constant dense<0.000000e+00> : vector<8x128xf32>
    %482 = tpu.matmul %479, %481, %cst_505 {dimension_numbers = #tpu.dot_dimension_numbers<[1], [0], [0], [1], [0, 0, 1, 1], [], []>} : vector<8x4xbf16>, vector<4x128xbf16>, vector<8x128xf32> -> vector<8x128xf32>
    %483 = arith.addf %473, %482 : vector<8x128xf32>
    %484 = vector.broadcast %1 : vector<1x128xf32> to vector<8x128xf32>
    %485 = arith.mulf %483, %484 : vector<8x128xf32>
    %486 = vector.broadcast %2 : vector<1x128xf32> to vector<8x128xf32>
    %487 = arith.addf %485, %486 : vector<8x128xf32>
    %cst_506 = arith.constant 0.000000e+00 : f32
    %488 = vector.broadcast %cst_506 : f32 to vector<8x128xf32>
    %489 = arith.maximumf %487, %488 : vector<8x128xf32>
    %c0_507 = arith.constant 0 : index
    %c4 = arith.constant 4 : index
    %c0_508 = arith.constant 0 : index
    %c0_509 = arith.constant 0 : index
    %490 = vector.load %arg7[%c0_507, %c4, %c0_508, %c0_509] : memref<1x8x8x128xf32, #tpu.memory_space<vmem>>, vector<1x1x8x128xf32>
    %491 = vector.shape_cast %490 : vector<1x1x8x128xf32> to vector<8x128xf32>
    %492 = vector.shape_cast %489 : vector<8x128xf32> to vector<1x1x8x128xf32>
    tpu.vector_store %arg7[%c0_507, %c4, %c0_508, %c0_509], %492 {strides = array<i32>} : memref<1x8x8x128xf32, #tpu.memory_space<vmem>>, vector<1x1x8x128xf32>,
    %c0_i32_510 = arith.constant 0 : i32
    %493 = arith.addi %c0_i32_510, %0 : i32
    %c5_i32 = arith.constant 5 : i32
    %494 = arith.addi %493, %c5_i32 : i32
    %c0_i32_511 = arith.constant 0 : i32
    %495 = arith.addi %494, %c0_i32_511 : i32
    %c0_512 = arith.constant 0 : index
    %496 = arith.index_cast %495 : i32 to index
    %c0_513 = arith.constant 0 : index
    %c0_514 = arith.constant 0 : index
    %497 = vector.load %arg3[%c0_512, %496, %c0_513, %c0_514] : memref<1x36x9x4xbf16, #tpu.memory_space<vmem>>, vector<1x1x8x4xbf16>
    %498 = vector.shape_cast %497 : vector<1x1x8x4xbf16> to vector<8x4xbf16>
    %c0_515 = arith.constant 0 : index
    %c0_516 = arith.constant 0 : index
    %c0_517 = arith.constant 0 : index
    %c0_518 = arith.constant 0 : index
    %499 = vector.load %arg4[%c0_515, %c0_516, %c0_517, %c0_518] : memref<3x3x4x128xbf16, #tpu.memory_space<vmem>>, vector<1x1x4x128xbf16>
    %500 = vector.shape_cast %499 : vector<1x1x4x128xbf16> to vector<4x128xbf16>
    %cst_519 = arith.constant dense<0.000000e+00> : vector<8x128xf32>
    %501 = tpu.matmul %498, %500, %cst_519 {dimension_numbers = #tpu.dot_dimension_numbers<[1], [0], [0], [1], [0, 0, 1, 1], [], []>} : vector<8x4xbf16>, vector<4x128xbf16>, vector<8x128xf32> -> vector<8x128xf32>
    %c9_i32_520 = arith.constant 9 : i32
    %502 = arith.addi %c9_i32_520, %0 : i32
    %c5_i32_521 = arith.constant 5 : i32
    %503 = arith.addi %502, %c5_i32_521 : i32
    %c0_i32_522 = arith.constant 0 : i32
    %504 = arith.addi %503, %c0_i32_522 : i32
    %c0_523 = arith.constant 0 : index
    %505 = arith.index_cast %504 : i32 to index
    %c0_524 = arith.constant 0 : index
    %c0_525 = arith.constant 0 : index
    %506 = vector.load %arg3[%c0_523, %505, %c0_524, %c0_525] : memref<1x36x9x4xbf16, #tpu.memory_space<vmem>>, vector<1x1x8x4xbf16>
    %507 = vector.shape_cast %506 : vector<1x1x8x4xbf16> to vector<8x4xbf16>
    %c0_526 = arith.constant 0 : index
    %c1_527 = arith.constant 1 : index
    %c0_528 = arith.constant 0 : index
    %c0_529 = arith.constant 0 : index
    %508 = vector.load %arg4[%c0_526, %c1_527, %c0_528, %c0_529] : memref<3x3x4x128xbf16, #tpu.memory_space<vmem>>, vector<1x1x4x128xbf16>
    %509 = vector.shape_cast %508 : vector<1x1x4x128xbf16> to vector<4x128xbf16>
    %cst_530 = arith.constant dense<0.000000e+00> : vector<8x128xf32>
    %510 = tpu.matmul %507, %509, %cst_530 {dimension_numbers = #tpu.dot_dimension_numbers<[1], [0], [0], [1], [0, 0, 1, 1], [], []>} : vector<8x4xbf16>, vector<4x128xbf16>, vector<8x128xf32> -> vector<8x128xf32>
    %511 = arith.addf %501, %510 : vector<8x128xf32>
    %c0_i32_531 = arith.constant 0 : i32
    %512 = arith.addi %c0_i32_531, %0 : i32
    %c5_i32_532 = arith.constant 5 : i32
    %513 = arith.addi %512, %c5_i32_532 : i32
    %c0_i32_533 = arith.constant 0 : i32
    %514 = arith.addi %513, %c0_i32_533 : i32
    %c0_534 = arith.constant 0 : index
    %515 = arith.index_cast %514 : i32 to index
    %c1_535 = arith.constant 1 : index
    %c0_536 = arith.constant 0 : index
    %516 = vector.load %arg3[%c0_534, %515, %c1_535, %c0_536] : memref<1x36x9x4xbf16, #tpu.memory_space<vmem>>, vector<1x1x8x4xbf16>
    %517 = vector.shape_cast %516 : vector<1x1x8x4xbf16> to vector<8x4xbf16>
    %c0_537 = arith.constant 0 : index
    %c2_538 = arith.constant 2 : index
    %c0_539 = arith.constant 0 : index
    %c0_540 = arith.constant 0 : index
    %518 = vector.load %arg4[%c0_537, %c2_538, %c0_539, %c0_540] : memref<3x3x4x128xbf16, #tpu.memory_space<vmem>>, vector<1x1x4x128xbf16>
    %519 = vector.shape_cast %518 : vector<1x1x4x128xbf16> to vector<4x128xbf16>
    %cst_541 = arith.constant dense<0.000000e+00> : vector<8x128xf32>
    %520 = tpu.matmul %517, %519, %cst_541 {dimension_numbers = #tpu.dot_dimension_numbers<[1], [0], [0], [1], [0, 0, 1, 1], [], []>} : vector<8x4xbf16>, vector<4x128xbf16>, vector<8x128xf32> -> vector<8x128xf32>
    %521 = arith.addf %511, %520 : vector<8x128xf32>
    %c18_i32_542 = arith.constant 18 : i32
    %522 = arith.addi %c18_i32_542, %0 : i32
    %c5_i32_543 = arith.constant 5 : i32
    %523 = arith.addi %522, %c5_i32_543 : i32
    %c0_i32_544 = arith.constant 0 : i32
    %524 = arith.addi %523, %c0_i32_544 : i32
    %c0_545 = arith.constant 0 : index
    %525 = arith.index_cast %524 : i32 to index
    %c0_546 = arith.constant 0 : index
    %c0_547 = arith.constant 0 : index
    %526 = vector.load %arg3[%c0_545, %525, %c0_546, %c0_547] : memref<1x36x9x4xbf16, #tpu.memory_space<vmem>>, vector<1x1x8x4xbf16>
    %527 = vector.shape_cast %526 : vector<1x1x8x4xbf16> to vector<8x4xbf16>
    %c1_548 = arith.constant 1 : index
    %c0_549 = arith.constant 0 : index
    %c0_550 = arith.constant 0 : index
    %c0_551 = arith.constant 0 : index
    %528 = vector.load %arg4[%c1_548, %c0_549, %c0_550, %c0_551] : memref<3x3x4x128xbf16, #tpu.memory_space<vmem>>, vector<1x1x4x128xbf16>
    %529 = vector.shape_cast %528 : vector<1x1x4x128xbf16> to vector<4x128xbf16>
    %cst_552 = arith.constant dense<0.000000e+00> : vector<8x128xf32>
    %530 = tpu.matmul %527, %529, %cst_552 {dimension_numbers = #tpu.dot_dimension_numbers<[1], [0], [0], [1], [0, 0, 1, 1], [], []>} : vector<8x4xbf16>, vector<4x128xbf16>, vector<8x128xf32> -> vector<8x128xf32>
    %531 = arith.addf %521, %530 : vector<8x128xf32>
    %c27_i32_553 = arith.constant 27 : i32
    %532 = arith.addi %c27_i32_553, %0 : i32
    %c5_i32_554 = arith.constant 5 : i32
    %533 = arith.addi %532, %c5_i32_554 : i32
    %c0_i32_555 = arith.constant 0 : i32
    %534 = arith.addi %533, %c0_i32_555 : i32
    %c0_556 = arith.constant 0 : index
    %535 = arith.index_cast %534 : i32 to index
    %c0_557 = arith.constant 0 : index
    %c0_558 = arith.constant 0 : index
    %536 = vector.load %arg3[%c0_556, %535, %c0_557, %c0_558] : memref<1x36x9x4xbf16, #tpu.memory_space<vmem>>, vector<1x1x8x4xbf16>
    %537 = vector.shape_cast %536 : vector<1x1x8x4xbf16> to vector<8x4xbf16>
    %c1_559 = arith.constant 1 : index
    %c1_560 = arith.constant 1 : index
    %c0_561 = arith.constant 0 : index
    %c0_562 = arith.constant 0 : index
    %538 = vector.load %arg4[%c1_559, %c1_560, %c0_561, %c0_562] : memref<3x3x4x128xbf16, #tpu.memory_space<vmem>>, vector<1x1x4x128xbf16>
    %539 = vector.shape_cast %538 : vector<1x1x4x128xbf16> to vector<4x128xbf16>
    %cst_563 = arith.constant dense<0.000000e+00> : vector<8x128xf32>
    %540 = tpu.matmul %537, %539, %cst_563 {dimension_numbers = #tpu.dot_dimension_numbers<[1], [0], [0], [1], [0, 0, 1, 1], [], []>} : vector<8x4xbf16>, vector<4x128xbf16>, vector<8x128xf32> -> vector<8x128xf32>
    %541 = arith.addf %531, %540 : vector<8x128xf32>
    %c18_i32_564 = arith.constant 18 : i32
    %542 = arith.addi %c18_i32_564, %0 : i32
    %c5_i32_565 = arith.constant 5 : i32
    %543 = arith.addi %542, %c5_i32_565 : i32
    %c0_i32_566 = arith.constant 0 : i32
    %544 = arith.addi %543, %c0_i32_566 : i32
    %c0_567 = arith.constant 0 : index
    %545 = arith.index_cast %544 : i32 to index
    %c1_568 = arith.constant 1 : index
    %c0_569 = arith.constant 0 : index
    %546 = vector.load %arg3[%c0_567, %545, %c1_568, %c0_569] : memref<1x36x9x4xbf16, #tpu.memory_space<vmem>>, vector<1x1x8x4xbf16>
    %547 = vector.shape_cast %546 : vector<1x1x8x4xbf16> to vector<8x4xbf16>
    %c1_570 = arith.constant 1 : index
    %c2_571 = arith.constant 2 : index
    %c0_572 = arith.constant 0 : index
    %c0_573 = arith.constant 0 : index
    %548 = vector.load %arg4[%c1_570, %c2_571, %c0_572, %c0_573] : memref<3x3x4x128xbf16, #tpu.memory_space<vmem>>, vector<1x1x4x128xbf16>
    %549 = vector.shape_cast %548 : vector<1x1x4x128xbf16> to vector<4x128xbf16>
    %cst_574 = arith.constant dense<0.000000e+00> : vector<8x128xf32>
    %550 = tpu.matmul %547, %549, %cst_574 {dimension_numbers = #tpu.dot_dimension_numbers<[1], [0], [0], [1], [0, 0, 1, 1], [], []>} : vector<8x4xbf16>, vector<4x128xbf16>, vector<8x128xf32> -> vector<8x128xf32>
    %551 = arith.addf %541, %550 : vector<8x128xf32>
    %c0_i32_575 = arith.constant 0 : i32
    %552 = arith.addi %c0_i32_575, %0 : i32
    %c5_i32_576 = arith.constant 5 : i32
    %553 = arith.addi %552, %c5_i32_576 : i32
    %c1_i32_577 = arith.constant 1 : i32
    %554 = arith.addi %553, %c1_i32_577 : i32
    %c0_578 = arith.constant 0 : index
    %555 = arith.index_cast %554 : i32 to index
    %c0_579 = arith.constant 0 : index
    %c0_580 = arith.constant 0 : index
    %556 = vector.load %arg3[%c0_578, %555, %c0_579, %c0_580] : memref<1x36x9x4xbf16, #tpu.memory_space<vmem>>, vector<1x1x8x4xbf16>
    %557 = vector.shape_cast %556 : vector<1x1x8x4xbf16> to vector<8x4xbf16>
    %c2_581 = arith.constant 2 : index
    %c0_582 = arith.constant 0 : index
    %c0_583 = arith.constant 0 : index
    %c0_584 = arith.constant 0 : index
    %558 = vector.load %arg4[%c2_581, %c0_582, %c0_583, %c0_584] : memref<3x3x4x128xbf16, #tpu.memory_space<vmem>>, vector<1x1x4x128xbf16>
    %559 = vector.shape_cast %558 : vector<1x1x4x128xbf16> to vector<4x128xbf16>
    %cst_585 = arith.constant dense<0.000000e+00> : vector<8x128xf32>
    %560 = tpu.matmul %557, %559, %cst_585 {dimension_numbers = #tpu.dot_dimension_numbers<[1], [0], [0], [1], [0, 0, 1, 1], [], []>} : vector<8x4xbf16>, vector<4x128xbf16>, vector<8x128xf32> -> vector<8x128xf32>
    %561 = arith.addf %551, %560 : vector<8x128xf32>
    %c9_i32_586 = arith.constant 9 : i32
    %562 = arith.addi %c9_i32_586, %0 : i32
    %c5_i32_587 = arith.constant 5 : i32
    %563 = arith.addi %562, %c5_i32_587 : i32
    %c1_i32_588 = arith.constant 1 : i32
    %564 = arith.addi %563, %c1_i32_588 : i32
    %c0_589 = arith.constant 0 : index
    %565 = arith.index_cast %564 : i32 to index
    %c0_590 = arith.constant 0 : index
    %c0_591 = arith.constant 0 : index
    %566 = vector.load %arg3[%c0_589, %565, %c0_590, %c0_591] : memref<1x36x9x4xbf16, #tpu.memory_space<vmem>>, vector<1x1x8x4xbf16>
    %567 = vector.shape_cast %566 : vector<1x1x8x4xbf16> to vector<8x4xbf16>
    %c2_592 = arith.constant 2 : index
    %c1_593 = arith.constant 1 : index
    %c0_594 = arith.constant 0 : index
    %c0_595 = arith.constant 0 : index
    %568 = vector.load %arg4[%c2_592, %c1_593, %c0_594, %c0_595] : memref<3x3x4x128xbf16, #tpu.memory_space<vmem>>, vector<1x1x4x128xbf16>
    %569 = vector.shape_cast %568 : vector<1x1x4x128xbf16> to vector<4x128xbf16>
    %cst_596 = arith.constant dense<0.000000e+00> : vector<8x128xf32>
    %570 = tpu.matmul %567, %569, %cst_596 {dimension_numbers = #tpu.dot_dimension_numbers<[1], [0], [0], [1], [0, 0, 1, 1], [], []>} : vector<8x4xbf16>, vector<4x128xbf16>, vector<8x128xf32> -> vector<8x128xf32>
    %571 = arith.addf %561, %570 : vector<8x128xf32>
    %c0_i32_597 = arith.constant 0 : i32
    %572 = arith.addi %c0_i32_597, %0 : i32
    %c5_i32_598 = arith.constant 5 : i32
    %573 = arith.addi %572, %c5_i32_598 : i32
    %c1_i32_599 = arith.constant 1 : i32
    %574 = arith.addi %573, %c1_i32_599 : i32
    %c0_600 = arith.constant 0 : index
    %575 = arith.index_cast %574 : i32 to index
    %c1_601 = arith.constant 1 : index
    %c0_602 = arith.constant 0 : index
    %576 = vector.load %arg3[%c0_600, %575, %c1_601, %c0_602] : memref<1x36x9x4xbf16, #tpu.memory_space<vmem>>, vector<1x1x8x4xbf16>
    %577 = vector.shape_cast %576 : vector<1x1x8x4xbf16> to vector<8x4xbf16>
    %c2_603 = arith.constant 2 : index
    %c2_604 = arith.constant 2 : index
    %c0_605 = arith.constant 0 : index
    %c0_606 = arith.constant 0 : index
    %578 = vector.load %arg4[%c2_603, %c2_604, %c0_605, %c0_606] : memref<3x3x4x128xbf16, #tpu.memory_space<vmem>>, vector<1x1x4x128xbf16>
    %579 = vector.shape_cast %578 : vector<1x1x4x128xbf16> to vector<4x128xbf16>
    %cst_607 = arith.constant dense<0.000000e+00> : vector<8x128xf32>
    %580 = tpu.matmul %577, %579, %cst_607 {dimension_numbers = #tpu.dot_dimension_numbers<[1], [0], [0], [1], [0, 0, 1, 1], [], []>} : vector<8x4xbf16>, vector<4x128xbf16>, vector<8x128xf32> -> vector<8x128xf32>
    %581 = arith.addf %571, %580 : vector<8x128xf32>
    %582 = vector.broadcast %1 : vector<1x128xf32> to vector<8x128xf32>
    %583 = arith.mulf %581, %582 : vector<8x128xf32>
    %584 = vector.broadcast %2 : vector<1x128xf32> to vector<8x128xf32>
    %585 = arith.addf %583, %584 : vector<8x128xf32>
    %cst_608 = arith.constant 0.000000e+00 : f32
    %586 = vector.broadcast %cst_608 : f32 to vector<8x128xf32>
    %587 = arith.maximumf %585, %586 : vector<8x128xf32>
    %c0_609 = arith.constant 0 : index
    %c5 = arith.constant 5 : index
    %c0_610 = arith.constant 0 : index
    %c0_611 = arith.constant 0 : index
    %588 = vector.load %arg7[%c0_609, %c5, %c0_610, %c0_611] : memref<1x8x8x128xf32, #tpu.memory_space<vmem>>, vector<1x1x8x128xf32>
    %589 = vector.shape_cast %588 : vector<1x1x8x128xf32> to vector<8x128xf32>
    %590 = vector.shape_cast %587 : vector<8x128xf32> to vector<1x1x8x128xf32>
    tpu.vector_store %arg7[%c0_609, %c5, %c0_610, %c0_611], %590 {strides = array<i32>} : memref<1x8x8x128xf32, #tpu.memory_space<vmem>>, vector<1x1x8x128xf32>,
    %c0_i32_612 = arith.constant 0 : i32
    %591 = arith.addi %c0_i32_612, %0 : i32
    %c6_i32 = arith.constant 6 : i32
    %592 = arith.addi %591, %c6_i32 : i32
    %c0_i32_613 = arith.constant 0 : i32
    %593 = arith.addi %592, %c0_i32_613 : i32
    %c0_614 = arith.constant 0 : index
    %594 = arith.index_cast %593 : i32 to index
    %c0_615 = arith.constant 0 : index
    %c0_616 = arith.constant 0 : index
    %595 = vector.load %arg3[%c0_614, %594, %c0_615, %c0_616] : memref<1x36x9x4xbf16, #tpu.memory_space<vmem>>, vector<1x1x8x4xbf16>
    %596 = vector.shape_cast %595 : vector<1x1x8x4xbf16> to vector<8x4xbf16>
    %c0_617 = arith.constant 0 : index
    %c0_618 = arith.constant 0 : index
    %c0_619 = arith.constant 0 : index
    %c0_620 = arith.constant 0 : index
    %597 = vector.load %arg4[%c0_617, %c0_618, %c0_619, %c0_620] : memref<3x3x4x128xbf16, #tpu.memory_space<vmem>>, vector<1x1x4x128xbf16>
    %598 = vector.shape_cast %597 : vector<1x1x4x128xbf16> to vector<4x128xbf16>
    %cst_621 = arith.constant dense<0.000000e+00> : vector<8x128xf32>
    %599 = tpu.matmul %596, %598, %cst_621 {dimension_numbers = #tpu.dot_dimension_numbers<[1], [0], [0], [1], [0, 0, 1, 1], [], []>} : vector<8x4xbf16>, vector<4x128xbf16>, vector<8x128xf32> -> vector<8x128xf32>
    %c9_i32_622 = arith.constant 9 : i32
    %600 = arith.addi %c9_i32_622, %0 : i32
    %c6_i32_623 = arith.constant 6 : i32
    %601 = arith.addi %600, %c6_i32_623 : i32
    %c0_i32_624 = arith.constant 0 : i32
    %602 = arith.addi %601, %c0_i32_624 : i32
    %c0_625 = arith.constant 0 : index
    %603 = arith.index_cast %602 : i32 to index
    %c0_626 = arith.constant 0 : index
    %c0_627 = arith.constant 0 : index
    %604 = vector.load %arg3[%c0_625, %603, %c0_626, %c0_627] : memref<1x36x9x4xbf16, #tpu.memory_space<vmem>>, vector<1x1x8x4xbf16>
    %605 = vector.shape_cast %604 : vector<1x1x8x4xbf16> to vector<8x4xbf16>
    %c0_628 = arith.constant 0 : index
    %c1_629 = arith.constant 1 : index
    %c0_630 = arith.constant 0 : index
    %c0_631 = arith.constant 0 : index
    %606 = vector.load %arg4[%c0_628, %c1_629, %c0_630, %c0_631] : memref<3x3x4x128xbf16, #tpu.memory_space<vmem>>, vector<1x1x4x128xbf16>
    %607 = vector.shape_cast %606 : vector<1x1x4x128xbf16> to vector<4x128xbf16>
    %cst_632 = arith.constant dense<0.000000e+00> : vector<8x128xf32>
    %608 = tpu.matmul %605, %607, %cst_632 {dimension_numbers = #tpu.dot_dimension_numbers<[1], [0], [0], [1], [0, 0, 1, 1], [], []>} : vector<8x4xbf16>, vector<4x128xbf16>, vector<8x128xf32> -> vector<8x128xf32>
    %609 = arith.addf %599, %608 : vector<8x128xf32>
    %c0_i32_633 = arith.constant 0 : i32
    %610 = arith.addi %c0_i32_633, %0 : i32
    %c6_i32_634 = arith.constant 6 : i32
    %611 = arith.addi %610, %c6_i32_634 : i32
    %c0_i32_635 = arith.constant 0 : i32
    %612 = arith.addi %611, %c0_i32_635 : i32
    %c0_636 = arith.constant 0 : index
    %613 = arith.index_cast %612 : i32 to index
    %c1_637 = arith.constant 1 : index
    %c0_638 = arith.constant 0 : index
    %614 = vector.load %arg3[%c0_636, %613, %c1_637, %c0_638] : memref<1x36x9x4xbf16, #tpu.memory_space<vmem>>, vector<1x1x8x4xbf16>
    %615 = vector.shape_cast %614 : vector<1x1x8x4xbf16> to vector<8x4xbf16>
    %c0_639 = arith.constant 0 : index
    %c2_640 = arith.constant 2 : index
    %c0_641 = arith.constant 0 : index
    %c0_642 = arith.constant 0 : index
    %616 = vector.load %arg4[%c0_639, %c2_640, %c0_641, %c0_642] : memref<3x3x4x128xbf16, #tpu.memory_space<vmem>>, vector<1x1x4x128xbf16>
    %617 = vector.shape_cast %616 : vector<1x1x4x128xbf16> to vector<4x128xbf16>
    %cst_643 = arith.constant dense<0.000000e+00> : vector<8x128xf32>
    %618 = tpu.matmul %615, %617, %cst_643 {dimension_numbers = #tpu.dot_dimension_numbers<[1], [0], [0], [1], [0, 0, 1, 1], [], []>} : vector<8x4xbf16>, vector<4x128xbf16>, vector<8x128xf32> -> vector<8x128xf32>
    %619 = arith.addf %609, %618 : vector<8x128xf32>
    %c18_i32_644 = arith.constant 18 : i32
    %620 = arith.addi %c18_i32_644, %0 : i32
    %c6_i32_645 = arith.constant 6 : i32
    %621 = arith.addi %620, %c6_i32_645 : i32
    %c0_i32_646 = arith.constant 0 : i32
    %622 = arith.addi %621, %c0_i32_646 : i32
    %c0_647 = arith.constant 0 : index
    %623 = arith.index_cast %622 : i32 to index
    %c0_648 = arith.constant 0 : index
    %c0_649 = arith.constant 0 : index
    %624 = vector.load %arg3[%c0_647, %623, %c0_648, %c0_649] : memref<1x36x9x4xbf16, #tpu.memory_space<vmem>>, vector<1x1x8x4xbf16>
    %625 = vector.shape_cast %624 : vector<1x1x8x4xbf16> to vector<8x4xbf16>
    %c1_650 = arith.constant 1 : index
    %c0_651 = arith.constant 0 : index
    %c0_652 = arith.constant 0 : index
    %c0_653 = arith.constant 0 : index
    %626 = vector.load %arg4[%c1_650, %c0_651, %c0_652, %c0_653] : memref<3x3x4x128xbf16, #tpu.memory_space<vmem>>, vector<1x1x4x128xbf16>
    %627 = vector.shape_cast %626 : vector<1x1x4x128xbf16> to vector<4x128xbf16>
    %cst_654 = arith.constant dense<0.000000e+00> : vector<8x128xf32>
    %628 = tpu.matmul %625, %627, %cst_654 {dimension_numbers = #tpu.dot_dimension_numbers<[1], [0], [0], [1], [0, 0, 1, 1], [], []>} : vector<8x4xbf16>, vector<4x128xbf16>, vector<8x128xf32> -> vector<8x128xf32>
    %629 = arith.addf %619, %628 : vector<8x128xf32>
    %c27_i32_655 = arith.constant 27 : i32
    %630 = arith.addi %c27_i32_655, %0 : i32
    %c6_i32_656 = arith.constant 6 : i32
    %631 = arith.addi %630, %c6_i32_656 : i32
    %c0_i32_657 = arith.constant 0 : i32
    %632 = arith.addi %631, %c0_i32_657 : i32
    %c0_658 = arith.constant 0 : index
    %633 = arith.index_cast %632 : i32 to index
    %c0_659 = arith.constant 0 : index
    %c0_660 = arith.constant 0 : index
    %634 = vector.load %arg3[%c0_658, %633, %c0_659, %c0_660] : memref<1x36x9x4xbf16, #tpu.memory_space<vmem>>, vector<1x1x8x4xbf16>
    %635 = vector.shape_cast %634 : vector<1x1x8x4xbf16> to vector<8x4xbf16>
    %c1_661 = arith.constant 1 : index
    %c1_662 = arith.constant 1 : index
    %c0_663 = arith.constant 0 : index
    %c0_664 = arith.constant 0 : index
    %636 = vector.load %arg4[%c1_661, %c1_662, %c0_663, %c0_664] : memref<3x3x4x128xbf16, #tpu.memory_space<vmem>>, vector<1x1x4x128xbf16>
    %637 = vector.shape_cast %636 : vector<1x1x4x128xbf16> to vector<4x128xbf16>
    %cst_665 = arith.constant dense<0.000000e+00> : vector<8x128xf32>
    %638 = tpu.matmul %635, %637, %cst_665 {dimension_numbers = #tpu.dot_dimension_numbers<[1], [0], [0], [1], [0, 0, 1, 1], [], []>} : vector<8x4xbf16>, vector<4x128xbf16>, vector<8x128xf32> -> vector<8x128xf32>
    %639 = arith.addf %629, %638 : vector<8x128xf32>
    %c18_i32_666 = arith.constant 18 : i32
    %640 = arith.addi %c18_i32_666, %0 : i32
    %c6_i32_667 = arith.constant 6 : i32
    %641 = arith.addi %640, %c6_i32_667 : i32
    %c0_i32_668 = arith.constant 0 : i32
    %642 = arith.addi %641, %c0_i32_668 : i32
    %c0_669 = arith.constant 0 : index
    %643 = arith.index_cast %642 : i32 to index
    %c1_670 = arith.constant 1 : index
    %c0_671 = arith.constant 0 : index
    %644 = vector.load %arg3[%c0_669, %643, %c1_670, %c0_671] : memref<1x36x9x4xbf16, #tpu.memory_space<vmem>>, vector<1x1x8x4xbf16>
    %645 = vector.shape_cast %644 : vector<1x1x8x4xbf16> to vector<8x4xbf16>
    %c1_672 = arith.constant 1 : index
    %c2_673 = arith.constant 2 : index
    %c0_674 = arith.constant 0 : index
    %c0_675 = arith.constant 0 : index
    %646 = vector.load %arg4[%c1_672, %c2_673, %c0_674, %c0_675] : memref<3x3x4x128xbf16, #tpu.memory_space<vmem>>, vector<1x1x4x128xbf16>
    %647 = vector.shape_cast %646 : vector<1x1x4x128xbf16> to vector<4x128xbf16>
    %cst_676 = arith.constant dense<0.000000e+00> : vector<8x128xf32>
    %648 = tpu.matmul %645, %647, %cst_676 {dimension_numbers = #tpu.dot_dimension_numbers<[1], [0], [0], [1], [0, 0, 1, 1], [], []>} : vector<8x4xbf16>, vector<4x128xbf16>, vector<8x128xf32> -> vector<8x128xf32>
    %649 = arith.addf %639, %648 : vector<8x128xf32>
    %c0_i32_677 = arith.constant 0 : i32
    %650 = arith.addi %c0_i32_677, %0 : i32
    %c6_i32_678 = arith.constant 6 : i32
    %651 = arith.addi %650, %c6_i32_678 : i32
    %c1_i32_679 = arith.constant 1 : i32
    %652 = arith.addi %651, %c1_i32_679 : i32
    %c0_680 = arith.constant 0 : index
    %653 = arith.index_cast %652 : i32 to index
    %c0_681 = arith.constant 0 : index
    %c0_682 = arith.constant 0 : index
    %654 = vector.load %arg3[%c0_680, %653, %c0_681, %c0_682] : memref<1x36x9x4xbf16, #tpu.memory_space<vmem>>, vector<1x1x8x4xbf16>
    %655 = vector.shape_cast %654 : vector<1x1x8x4xbf16> to vector<8x4xbf16>
    %c2_683 = arith.constant 2 : index
    %c0_684 = arith.constant 0 : index
    %c0_685 = arith.constant 0 : index
    %c0_686 = arith.constant 0 : index
    %656 = vector.load %arg4[%c2_683, %c0_684, %c0_685, %c0_686] : memref<3x3x4x128xbf16, #tpu.memory_space<vmem>>, vector<1x1x4x128xbf16>
    %657 = vector.shape_cast %656 : vector<1x1x4x128xbf16> to vector<4x128xbf16>
    %cst_687 = arith.constant dense<0.000000e+00> : vector<8x128xf32>
    %658 = tpu.matmul %655, %657, %cst_687 {dimension_numbers = #tpu.dot_dimension_numbers<[1], [0], [0], [1], [0, 0, 1, 1], [], []>} : vector<8x4xbf16>, vector<4x128xbf16>, vector<8x128xf32> -> vector<8x128xf32>
    %659 = arith.addf %649, %658 : vector<8x128xf32>
    %c9_i32_688 = arith.constant 9 : i32
    %660 = arith.addi %c9_i32_688, %0 : i32
    %c6_i32_689 = arith.constant 6 : i32
    %661 = arith.addi %660, %c6_i32_689 : i32
    %c1_i32_690 = arith.constant 1 : i32
    %662 = arith.addi %661, %c1_i32_690 : i32
    %c0_691 = arith.constant 0 : index
    %663 = arith.index_cast %662 : i32 to index
    %c0_692 = arith.constant 0 : index
    %c0_693 = arith.constant 0 : index
    %664 = vector.load %arg3[%c0_691, %663, %c0_692, %c0_693] : memref<1x36x9x4xbf16, #tpu.memory_space<vmem>>, vector<1x1x8x4xbf16>
    %665 = vector.shape_cast %664 : vector<1x1x8x4xbf16> to vector<8x4xbf16>
    %c2_694 = arith.constant 2 : index
    %c1_695 = arith.constant 1 : index
    %c0_696 = arith.constant 0 : index
    %c0_697 = arith.constant 0 : index
    %666 = vector.load %arg4[%c2_694, %c1_695, %c0_696, %c0_697] : memref<3x3x4x128xbf16, #tpu.memory_space<vmem>>, vector<1x1x4x128xbf16>
    %667 = vector.shape_cast %666 : vector<1x1x4x128xbf16> to vector<4x128xbf16>
    %cst_698 = arith.constant dense<0.000000e+00> : vector<8x128xf32>
    %668 = tpu.matmul %665, %667, %cst_698 {dimension_numbers = #tpu.dot_dimension_numbers<[1], [0], [0], [1], [0, 0, 1, 1], [], []>} : vector<8x4xbf16>, vector<4x128xbf16>, vector<8x128xf32> -> vector<8x128xf32>
    %669 = arith.addf %659, %668 : vector<8x128xf32>
    %c0_i32_699 = arith.constant 0 : i32
    %670 = arith.addi %c0_i32_699, %0 : i32
    %c6_i32_700 = arith.constant 6 : i32
    %671 = arith.addi %670, %c6_i32_700 : i32
    %c1_i32_701 = arith.constant 1 : i32
    %672 = arith.addi %671, %c1_i32_701 : i32
    %c0_702 = arith.constant 0 : index
    %673 = arith.index_cast %672 : i32 to index
    %c1_703 = arith.constant 1 : index
    %c0_704 = arith.constant 0 : index
    %674 = vector.load %arg3[%c0_702, %673, %c1_703, %c0_704] : memref<1x36x9x4xbf16, #tpu.memory_space<vmem>>, vector<1x1x8x4xbf16>
    %675 = vector.shape_cast %674 : vector<1x1x8x4xbf16> to vector<8x4xbf16>
    %c2_705 = arith.constant 2 : index
    %c2_706 = arith.constant 2 : index
    %c0_707 = arith.constant 0 : index
    %c0_708 = arith.constant 0 : index
    %676 = vector.load %arg4[%c2_705, %c2_706, %c0_707, %c0_708] : memref<3x3x4x128xbf16, #tpu.memory_space<vmem>>, vector<1x1x4x128xbf16>
    %677 = vector.shape_cast %676 : vector<1x1x4x128xbf16> to vector<4x128xbf16>
    %cst_709 = arith.constant dense<0.000000e+00> : vector<8x128xf32>
    %678 = tpu.matmul %675, %677, %cst_709 {dimension_numbers = #tpu.dot_dimension_numbers<[1], [0], [0], [1], [0, 0, 1, 1], [], []>} : vector<8x4xbf16>, vector<4x128xbf16>, vector<8x128xf32> -> vector<8x128xf32>
    %679 = arith.addf %669, %678 : vector<8x128xf32>
    %680 = vector.broadcast %1 : vector<1x128xf32> to vector<8x128xf32>
    %681 = arith.mulf %679, %680 : vector<8x128xf32>
    %682 = vector.broadcast %2 : vector<1x128xf32> to vector<8x128xf32>
    %683 = arith.addf %681, %682 : vector<8x128xf32>
    %cst_710 = arith.constant 0.000000e+00 : f32
    %684 = vector.broadcast %cst_710 : f32 to vector<8x128xf32>
    %685 = arith.maximumf %683, %684 : vector<8x128xf32>
    %c0_711 = arith.constant 0 : index
    %c6 = arith.constant 6 : index
    %c0_712 = arith.constant 0 : index
    %c0_713 = arith.constant 0 : index
    %686 = vector.load %arg7[%c0_711, %c6, %c0_712, %c0_713] : memref<1x8x8x128xf32, #tpu.memory_space<vmem>>, vector<1x1x8x128xf32>
    %687 = vector.shape_cast %686 : vector<1x1x8x128xf32> to vector<8x128xf32>
    %688 = vector.shape_cast %685 : vector<8x128xf32> to vector<1x1x8x128xf32>
    tpu.vector_store %arg7[%c0_711, %c6, %c0_712, %c0_713], %688 {strides = array<i32>} : memref<1x8x8x128xf32, #tpu.memory_space<vmem>>, vector<1x1x8x128xf32>,
    %c0_i32_714 = arith.constant 0 : i32
    %689 = arith.addi %c0_i32_714, %0 : i32
    %c7_i32 = arith.constant 7 : i32
    %690 = arith.addi %689, %c7_i32 : i32
    %c0_i32_715 = arith.constant 0 : i32
    %691 = arith.addi %690, %c0_i32_715 : i32
    %c0_716 = arith.constant 0 : index
    %692 = arith.index_cast %691 : i32 to index
    %c0_717 = arith.constant 0 : index
    %c0_718 = arith.constant 0 : index
    %693 = vector.load %arg3[%c0_716, %692, %c0_717, %c0_718] : memref<1x36x9x4xbf16, #tpu.memory_space<vmem>>, vector<1x1x8x4xbf16>
    %694 = vector.shape_cast %693 : vector<1x1x8x4xbf16> to vector<8x4xbf16>
    %c0_719 = arith.constant 0 : index
    %c0_720 = arith.constant 0 : index
    %c0_721 = arith.constant 0 : index
    %c0_722 = arith.constant 0 : index
    %695 = vector.load %arg4[%c0_719, %c0_720, %c0_721, %c0_722] : memref<3x3x4x128xbf16, #tpu.memory_space<vmem>>, vector<1x1x4x128xbf16>
    %696 = vector.shape_cast %695 : vector<1x1x4x128xbf16> to vector<4x128xbf16>
    %cst_723 = arith.constant dense<0.000000e+00> : vector<8x128xf32>
    %697 = tpu.matmul %694, %696, %cst_723 {dimension_numbers = #tpu.dot_dimension_numbers<[1], [0], [0], [1], [0, 0, 1, 1], [], []>} : vector<8x4xbf16>, vector<4x128xbf16>, vector<8x128xf32> -> vector<8x128xf32>
    %c9_i32_724 = arith.constant 9 : i32
    %698 = arith.addi %c9_i32_724, %0 : i32
    %c7_i32_725 = arith.constant 7 : i32
    %699 = arith.addi %698, %c7_i32_725 : i32
    %c0_i32_726 = arith.constant 0 : i32
    %700 = arith.addi %699, %c0_i32_726 : i32
    %c0_727 = arith.constant 0 : index
    %701 = arith.index_cast %700 : i32 to index
    %c0_728 = arith.constant 0 : index
    %c0_729 = arith.constant 0 : index
    %702 = vector.load %arg3[%c0_727, %701, %c0_728, %c0_729] : memref<1x36x9x4xbf16, #tpu.memory_space<vmem>>, vector<1x1x8x4xbf16>
    %703 = vector.shape_cast %702 : vector<1x1x8x4xbf16> to vector<8x4xbf16>
    %c0_730 = arith.constant 0 : index
    %c1_731 = arith.constant 1 : index
    %c0_732 = arith.constant 0 : index
    %c0_733 = arith.constant 0 : index
    %704 = vector.load %arg4[%c0_730, %c1_731, %c0_732, %c0_733] : memref<3x3x4x128xbf16, #tpu.memory_space<vmem>>, vector<1x1x4x128xbf16>
    %705 = vector.shape_cast %704 : vector<1x1x4x128xbf16> to vector<4x128xbf16>
    %cst_734 = arith.constant dense<0.000000e+00> : vector<8x128xf32>
    %706 = tpu.matmul %703, %705, %cst_734 {dimension_numbers = #tpu.dot_dimension_numbers<[1], [0], [0], [1], [0, 0, 1, 1], [], []>} : vector<8x4xbf16>, vector<4x128xbf16>, vector<8x128xf32> -> vector<8x128xf32>
    %707 = arith.addf %697, %706 : vector<8x128xf32>
    %c0_i32_735 = arith.constant 0 : i32
    %708 = arith.addi %c0_i32_735, %0 : i32
    %c7_i32_736 = arith.constant 7 : i32
    %709 = arith.addi %708, %c7_i32_736 : i32
    %c0_i32_737 = arith.constant 0 : i32
    %710 = arith.addi %709, %c0_i32_737 : i32
    %c0_738 = arith.constant 0 : index
    %711 = arith.index_cast %710 : i32 to index
    %c1_739 = arith.constant 1 : index
    %c0_740 = arith.constant 0 : index
    %712 = vector.load %arg3[%c0_738, %711, %c1_739, %c0_740] : memref<1x36x9x4xbf16, #tpu.memory_space<vmem>>, vector<1x1x8x4xbf16>
    %713 = vector.shape_cast %712 : vector<1x1x8x4xbf16> to vector<8x4xbf16>
    %c0_741 = arith.constant 0 : index
    %c2_742 = arith.constant 2 : index
    %c0_743 = arith.constant 0 : index
    %c0_744 = arith.constant 0 : index
    %714 = vector.load %arg4[%c0_741, %c2_742, %c0_743, %c0_744] : memref<3x3x4x128xbf16, #tpu.memory_space<vmem>>, vector<1x1x4x128xbf16>
    %715 = vector.shape_cast %714 : vector<1x1x4x128xbf16> to vector<4x128xbf16>
    %cst_745 = arith.constant dense<0.000000e+00> : vector<8x128xf32>
    %716 = tpu.matmul %713, %715, %cst_745 {dimension_numbers = #tpu.dot_dimension_numbers<[1], [0], [0], [1], [0, 0, 1, 1], [], []>} : vector<8x4xbf16>, vector<4x128xbf16>, vector<8x128xf32> -> vector<8x128xf32>
    %717 = arith.addf %707, %716 : vector<8x128xf32>
    %c18_i32_746 = arith.constant 18 : i32
    %718 = arith.addi %c18_i32_746, %0 : i32
    %c7_i32_747 = arith.constant 7 : i32
    %719 = arith.addi %718, %c7_i32_747 : i32
    %c0_i32_748 = arith.constant 0 : i32
    %720 = arith.addi %719, %c0_i32_748 : i32
    %c0_749 = arith.constant 0 : index
    %721 = arith.index_cast %720 : i32 to index
    %c0_750 = arith.constant 0 : index
    %c0_751 = arith.constant 0 : index
    %722 = vector.load %arg3[%c0_749, %721, %c0_750, %c0_751] : memref<1x36x9x4xbf16, #tpu.memory_space<vmem>>, vector<1x1x8x4xbf16>
    %723 = vector.shape_cast %722 : vector<1x1x8x4xbf16> to vector<8x4xbf16>
    %c1_752 = arith.constant 1 : index
    %c0_753 = arith.constant 0 : index
    %c0_754 = arith.constant 0 : index
    %c0_755 = arith.constant 0 : index
    %724 = vector.load %arg4[%c1_752, %c0_753, %c0_754, %c0_755] : memref<3x3x4x128xbf16, #tpu.memory_space<vmem>>, vector<1x1x4x128xbf16>
    %725 = vector.shape_cast %724 : vector<1x1x4x128xbf16> to vector<4x128xbf16>
    %cst_756 = arith.constant dense<0.000000e+00> : vector<8x128xf32>
    %726 = tpu.matmul %723, %725, %cst_756 {dimension_numbers = #tpu.dot_dimension_numbers<[1], [0], [0], [1], [0, 0, 1, 1], [], []>} : vector<8x4xbf16>, vector<4x128xbf16>, vector<8x128xf32> -> vector<8x128xf32>
    %727 = arith.addf %717, %726 : vector<8x128xf32>
    %c27_i32_757 = arith.constant 27 : i32
    %728 = arith.addi %c27_i32_757, %0 : i32
    %c7_i32_758 = arith.constant 7 : i32
    %729 = arith.addi %728, %c7_i32_758 : i32
    %c0_i32_759 = arith.constant 0 : i32
    %730 = arith.addi %729, %c0_i32_759 : i32
    %c0_760 = arith.constant 0 : index
    %731 = arith.index_cast %730 : i32 to index
    %c0_761 = arith.constant 0 : index
    %c0_762 = arith.constant 0 : index
    %732 = vector.load %arg3[%c0_760, %731, %c0_761, %c0_762] : memref<1x36x9x4xbf16, #tpu.memory_space<vmem>>, vector<1x1x8x4xbf16>
    %733 = vector.shape_cast %732 : vector<1x1x8x4xbf16> to vector<8x4xbf16>
    %c1_763 = arith.constant 1 : index
    %c1_764 = arith.constant 1 : index
    %c0_765 = arith.constant 0 : index
    %c0_766 = arith.constant 0 : index
    %734 = vector.load %arg4[%c1_763, %c1_764, %c0_765, %c0_766] : memref<3x3x4x128xbf16, #tpu.memory_space<vmem>>, vector<1x1x4x128xbf16>
    %735 = vector.shape_cast %734 : vector<1x1x4x128xbf16> to vector<4x128xbf16>
    %cst_767 = arith.constant dense<0.000000e+00> : vector<8x128xf32>
    %736 = tpu.matmul %733, %735, %cst_767 {dimension_numbers = #tpu.dot_dimension_numbers<[1], [0], [0], [1], [0, 0, 1, 1], [], []>} : vector<8x4xbf16>, vector<4x128xbf16>, vector<8x128xf32> -> vector<8x128xf32>
    %737 = arith.addf %727, %736 : vector<8x128xf32>
    %c18_i32_768 = arith.constant 18 : i32
    %738 = arith.addi %c18_i32_768, %0 : i32
    %c7_i32_769 = arith.constant 7 : i32
    %739 = arith.addi %738, %c7_i32_769 : i32
    %c0_i32_770 = arith.constant 0 : i32
    %740 = arith.addi %739, %c0_i32_770 : i32
    %c0_771 = arith.constant 0 : index
    %741 = arith.index_cast %740 : i32 to index
    %c1_772 = arith.constant 1 : index
    %c0_773 = arith.constant 0 : index
    %742 = vector.load %arg3[%c0_771, %741, %c1_772, %c0_773] : memref<1x36x9x4xbf16, #tpu.memory_space<vmem>>, vector<1x1x8x4xbf16>
    %743 = vector.shape_cast %742 : vector<1x1x8x4xbf16> to vector<8x4xbf16>
    %c1_774 = arith.constant 1 : index
    %c2_775 = arith.constant 2 : index
    %c0_776 = arith.constant 0 : index
    %c0_777 = arith.constant 0 : index
    %744 = vector.load %arg4[%c1_774, %c2_775, %c0_776, %c0_777] : memref<3x3x4x128xbf16, #tpu.memory_space<vmem>>, vector<1x1x4x128xbf16>
    %745 = vector.shape_cast %744 : vector<1x1x4x128xbf16> to vector<4x128xbf16>
    %cst_778 = arith.constant dense<0.000000e+00> : vector<8x128xf32>
    %746 = tpu.matmul %743, %745, %cst_778 {dimension_numbers = #tpu.dot_dimension_numbers<[1], [0], [0], [1], [0, 0, 1, 1], [], []>} : vector<8x4xbf16>, vector<4x128xbf16>, vector<8x128xf32> -> vector<8x128xf32>
    %747 = arith.addf %737, %746 : vector<8x128xf32>
    %c0_i32_779 = arith.constant 0 : i32
    %748 = arith.addi %c0_i32_779, %0 : i32
    %c7_i32_780 = arith.constant 7 : i32
    %749 = arith.addi %748, %c7_i32_780 : i32
    %c1_i32_781 = arith.constant 1 : i32
    %750 = arith.addi %749, %c1_i32_781 : i32
    %c0_782 = arith.constant 0 : index
    %751 = arith.index_cast %750 : i32 to index
    %c0_783 = arith.constant 0 : index
    %c0_784 = arith.constant 0 : index
    %752 = vector.load %arg3[%c0_782, %751, %c0_783, %c0_784] : memref<1x36x9x4xbf16, #tpu.memory_space<vmem>>, vector<1x1x8x4xbf16>
    %753 = vector.shape_cast %752 : vector<1x1x8x4xbf16> to vector<8x4xbf16>
    %c2_785 = arith.constant 2 : index
    %c0_786 = arith.constant 0 : index
    %c0_787 = arith.constant 0 : index
    %c0_788 = arith.constant 0 : index
    %754 = vector.load %arg4[%c2_785, %c0_786, %c0_787, %c0_788] : memref<3x3x4x128xbf16, #tpu.memory_space<vmem>>, vector<1x1x4x128xbf16>
    %755 = vector.shape_cast %754 : vector<1x1x4x128xbf16> to vector<4x128xbf16>
    %cst_789 = arith.constant dense<0.000000e+00> : vector<8x128xf32>
    %756 = tpu.matmul %753, %755, %cst_789 {dimension_numbers = #tpu.dot_dimension_numbers<[1], [0], [0], [1], [0, 0, 1, 1], [], []>} : vector<8x4xbf16>, vector<4x128xbf16>, vector<8x128xf32> -> vector<8x128xf32>
    %757 = arith.addf %747, %756 : vector<8x128xf32>
    %c9_i32_790 = arith.constant 9 : i32
    %758 = arith.addi %c9_i32_790, %0 : i32
    %c7_i32_791 = arith.constant 7 : i32
    %759 = arith.addi %758, %c7_i32_791 : i32
    %c1_i32_792 = arith.constant 1 : i32
    %760 = arith.addi %759, %c1_i32_792 : i32
    %c0_793 = arith.constant 0 : index
    %761 = arith.index_cast %760 : i32 to index
    %c0_794 = arith.constant 0 : index
    %c0_795 = arith.constant 0 : index
    %762 = vector.load %arg3[%c0_793, %761, %c0_794, %c0_795] : memref<1x36x9x4xbf16, #tpu.memory_space<vmem>>, vector<1x1x8x4xbf16>
    %763 = vector.shape_cast %762 : vector<1x1x8x4xbf16> to vector<8x4xbf16>
    %c2_796 = arith.constant 2 : index
    %c1_797 = arith.constant 1 : index
    %c0_798 = arith.constant 0 : index
    %c0_799 = arith.constant 0 : index
    %764 = vector.load %arg4[%c2_796, %c1_797, %c0_798, %c0_799] : memref<3x3x4x128xbf16, #tpu.memory_space<vmem>>, vector<1x1x4x128xbf16>
    %765 = vector.shape_cast %764 : vector<1x1x4x128xbf16> to vector<4x128xbf16>
    %cst_800 = arith.constant dense<0.000000e+00> : vector<8x128xf32>
    %766 = tpu.matmul %763, %765, %cst_800 {dimension_numbers = #tpu.dot_dimension_numbers<[1], [0], [0], [1], [0, 0, 1, 1], [], []>} : vector<8x4xbf16>, vector<4x128xbf16>, vector<8x128xf32> -> vector<8x128xf32>
    %767 = arith.addf %757, %766 : vector<8x128xf32>
    %c0_i32_801 = arith.constant 0 : i32
    %768 = arith.addi %c0_i32_801, %0 : i32
    %c7_i32_802 = arith.constant 7 : i32
    %769 = arith.addi %768, %c7_i32_802 : i32
    %c1_i32_803 = arith.constant 1 : i32
    %770 = arith.addi %769, %c1_i32_803 : i32
    %c0_804 = arith.constant 0 : index
    %771 = arith.index_cast %770 : i32 to index
    %c1_805 = arith.constant 1 : index
    %c0_806 = arith.constant 0 : index
    %772 = vector.load %arg3[%c0_804, %771, %c1_805, %c0_806] : memref<1x36x9x4xbf16, #tpu.memory_space<vmem>>, vector<1x1x8x4xbf16>
    %773 = vector.shape_cast %772 : vector<1x1x8x4xbf16> to vector<8x4xbf16>
    %c2_807 = arith.constant 2 : index
    %c2_808 = arith.constant 2 : index
    %c0_809 = arith.constant 0 : index
    %c0_810 = arith.constant 0 : index
    %774 = vector.load %arg4[%c2_807, %c2_808, %c0_809, %c0_810] : memref<3x3x4x128xbf16, #tpu.memory_space<vmem>>, vector<1x1x4x128xbf16>
    %775 = vector.shape_cast %774 : vector<1x1x4x128xbf16> to vector<4x128xbf16>
    %cst_811 = arith.constant dense<0.000000e+00> : vector<8x128xf32>
    %776 = tpu.matmul %773, %775, %cst_811 {dimension_numbers = #tpu.dot_dimension_numbers<[1], [0], [0], [1], [0, 0, 1, 1], [], []>} : vector<8x4xbf16>, vector<4x128xbf16>, vector<8x128xf32> -> vector<8x128xf32>
    %777 = arith.addf %767, %776 : vector<8x128xf32>
    %778 = vector.broadcast %1 : vector<1x128xf32> to vector<8x128xf32>
    %779 = arith.mulf %777, %778 : vector<8x128xf32>
    %780 = vector.broadcast %2 : vector<1x128xf32> to vector<8x128xf32>
    %781 = arith.addf %779, %780 : vector<8x128xf32>
    %cst_812 = arith.constant 0.000000e+00 : f32
    %782 = vector.broadcast %cst_812 : f32 to vector<8x128xf32>
    %783 = arith.maximumf %781, %782 : vector<8x128xf32>
    %c0_813 = arith.constant 0 : index
    %c7 = arith.constant 7 : index
    %c0_814 = arith.constant 0 : index
    %c0_815 = arith.constant 0 : index
    %784 = vector.load %arg7[%c0_813, %c7, %c0_814, %c0_815] : memref<1x8x8x128xf32, #tpu.memory_space<vmem>>, vector<1x1x8x128xf32>
    %785 = vector.shape_cast %784 : vector<1x1x8x128xf32> to vector<8x128xf32>
    %786 = vector.shape_cast %783 : vector<8x128xf32> to vector<1x1x8x128xf32>
    tpu.vector_store %arg7[%c0_813, %c7, %c0_814, %c0_815], %786 {strides = array<i32>} : memref<1x8x8x128xf32, #tpu.memory_space<vmem>>, vector<1x1x8x128xf32>,
    return
  }
  func.func @transform_0(%arg0: i32, %arg1: i32, %arg2: i32) -> (i32, i32, i32, i32) {
    %c0_i32 = arith.constant 0 : i32
    %c0_i32_0 = arith.constant 0 : i32
    %c0_i32_1 = arith.constant 0 : i32
    %c0_i32_2 = arith.constant 0 : i32
    return %arg1, %c0_i32, %c0_i32_0, %c0_i32_1 : i32, i32, i32, i32
  }
  func.func @transform_1(%arg0: i32, %arg1: i32, %arg2: i32) -> (i32, i32, i32, i32) {
    %c0_i32 = arith.constant 0 : i32
    %c0_i32_0 = arith.constant 0 : i32
    %c0_i32_1 = arith.constant 0 : i32
    %c0_i32_2 = arith.constant 0 : i32
    return %c0_i32, %c0_i32_0, %c0_i32_1, %arg0 : i32, i32, i32, i32
  }
  func.func @transform_2(%arg0: i32, %arg1: i32, %arg2: i32) -> (i32, i32) {
    %c0_i32 = arith.constant 0 : i32
    %c0_i32_0 = arith.constant 0 : i32
    return %c0_i32, %arg0 : i32, i32
  }
  func.func @transform_3(%arg0: i32, %arg1: i32, %arg2: i32) -> (i32, i32) {
    %c0_i32 = arith.constant 0 : i32
    %c0_i32_0 = arith.constant 0 : i32
    return %c0_i32, %arg0 : i32, i32
  }
  func.func @transform_4(%arg0: i32, %arg1: i32, %arg2: i32) -> (i32, i32, i32, i32) {
    %c0_i32 = arith.constant 0 : i32
    %c0_i32_0 = arith.constant 0 : i32
    return %arg1, %arg2, %c0_i32, %arg0 : i32, i32, i32, i32
  }
}

</mosaic_0001>

<llo_original>
// kernel: basic_conv2d_forward.1
$region0: #{basic_conv2d_forward.1}
  #allocation0 [shape = 'u32[]', space=smem, size = 0x4, offset = 0x4, fixed_abs, tag = 'smem constant byte address 0x4 - core index']
  #allocation1 [shape = 'u32[72,128]{1,0:T(1,128)}', space=vmem, size = 0x9000, scoped, tag = 'internal scratch']
  %s0 = inlined_call_operand.vmem [shape: bf16[2,36,9,4], index: 0, kind: input, shape index: {}]
  %s1 = inlined_call_operand.vmem [shape: bf16[3,3,4,128], index: 1, kind: input, shape index: {}]
  %s2 = inlined_call_operand.vmem [shape: f32[1,128], index: 2, kind: input, shape index: {}]
  %s3 = inlined_call_operand.vmem [shape: f32[1,128], index: 3, kind: input, shape index: {}]
  %s4 = inlined_call_operand.vmem [shape: f32[2,8,8,128], index: 4, kind: output, shape index: {}]
  %s5 = sld [smem:[#allocation0]]
  $region49: #{basic_conv2d_forward.1} parent=0
    _
  %s7 = ssub.s32 1, %s5
  %s8 = scalar_select 0, %s7, %s5
  loop: start=0, step=1, limit=4
  $region2: #{basic_conv2d_forward.1} parent=0 // loop_pre_header
    _
  $region3: #{basic_conv2d_forward.1} parent=0 // loop_header
    %s10 = sphi 0, %s14
    %p11 = scmp.ge.s32.totalorder %s10, 4
    %s17 = sphi 0, %s36
    %s18 = sphi 0, %s32
    %s19 = sphi 0, %s28
    %s20 = sphi 0, %s17
    %s21 = sphi 0, %s18
    %s22 = sphi 0, %s19
    %s23 = sphi 0, %s20
    %s24 = sphi 0, %s21
    %s25 = sphi 0, %s22
    %s39 = sphi 0, %s41
    %s42 = sphi 0, %s39
    %s43 = sphi 0, %s42
    %s59 = sphi 0, %s43
    %s65 = sphi 0, %s67
    %s68 = sphi 0, %s65
    %s69 = sphi 0, %s68
    %s85 = sphi 0, %s69
    %s91 = sphi 0, %s93
    %s94 = sphi 0, %s91
    %s95 = sphi 0, %s94
    %s111 = sphi 0, %s95
    %s117 = sphi 0, %s119
    %s120 = sphi 0, %s117
    %s121 = sphi 0, %s120
    %s137 = sphi 0, %s121
    %s147 = sphi 0, %s149
    %s150 = sphi 0, %s147
    %s151 = sphi 0, %s150
    %s167 = sphi 0, %s151
  $region4: #{basic_conv2d_forward.1} parent=0 // loop_header_branch
    %13 = sbr.rel (%p11) target = $region8
  $region5: #{basic_conv2d_forward.1} parent=0 // loop_body
    %s15 = ssub.s32 %s10, 1
    %s16 = ssub.s32 %s10, 2
    %s26 = sadd.s32 1, %s19
    %p27 = scmp.ge.s32.totalorder %s26, 1
    %s28 = scalar_select %p27, 0, %s26
    %s29 = sadd.s32 1, %s18
    %s30 = scalar_select %p27, %s29, %s18
    %p31 = scmp.ge.s32.totalorder %s30, 2
    %s32 = scalar_select %p31, 0, %s30
    %s33 = sadd.s32 1, %s17
    %s34 = scalar_select %p31, %s33, %s17
    %p35 = scmp.ge.s32.totalorder %s34, 1
    %s36 = scalar_select %p35, 0, %s34
    %s37 = ssub.s32 %s18, %s32
    %p38 = scmp.eq.s32.totalorder %s37, 0
    %s40 = sadd.s32 %s39, 1
    %s41 = scalar_select %p38, %s39, %s40
    %p44 = pneg %p38
    %p45 = scmp.eq.s32.totalorder %s10, 1
    %p46 = por %p44, %p45
    %p47 = scmp.ne.s32.totalorder %s39, %s42
    %p48 = scmp.eq.s32.totalorder %s10, 0
    %p49 = por %p47, %p48
    %p50 = scmp.ne.s32.totalorder %s39, %s42
    %p51 = scmp.eq.s32.totalorder %s15, 1
    %p52 = por %p50, %p51
    %p53 = scmp.ne.s32.totalorder %s42, %s43
    %p54 = scmp.eq.s32.totalorder %s15, 0
    %p55 = por %p53, %p54
    %p56 = scmp.ne.s32.totalorder %s42, %s43
    %p57 = scmp.eq.s32.totalorder %s16, 1
    %p58 = por %p56, %p57
    %p60 = scmp.ne.s32.totalorder %s43, %s59
    %p61 = scmp.eq.s32.totalorder %s16, 0
    %p62 = por %p60, %p61
    %s63 = ssub.s32 %s17, %s36
    %p64 = scmp.eq.s32.totalorder %s63, 0
    %s66 = sadd.s32 %s65, 1
    %s67 = scalar_select %p64, %s65, %s66
    %p70 = pneg %p64
    %p71 = scmp.eq.s32.totalorder %s10, 1
    %p72 = por %p70, %p71
    %p73 = scmp.ne.s32.totalorder %s65, %s68
    %p74 = scmp.eq.s32.totalorder %s10, 0
    %p75 = por %p73, %p74
    %p76 = scmp.ne.s32.totalorder %s65, %s68
    %p77 = scmp.eq.s32.totalorder %s15, 1
    %p78 = por %p76, %p77
    %p79 = scmp.ne.s32.totalorder %s68, %s69
    %p80 = scmp.eq.s32.totalorder %s15, 0
    %p81 = por %p79, %p80
    %p82 = scmp.ne.s32.totalorder %s68, %s69
    %p83 = scmp.eq.s32.totalorder %s16, 1
    %p84 = por %p82, %p83
    %p86 = scmp.ne.s32.totalorder %s69, %s85
    %p87 = scmp.eq.s32.totalorder %s16, 0
    %p88 = por %p86, %p87
    %s89 = ssub.s32 %s17, %s36
    %p90 = scmp.eq.s32.totalorder %s89, 0
    %s92 = sadd.s32 %s91, 1
    %s93 = scalar_select %p90, %s91, %s92
    %p96 = pneg %p90
    %p97 = scmp.eq.s32.totalorder %s10, 1
    %p98 = por %p96, %p97
    %p99 = scmp.ne.s32.totalorder %s91, %s94
    %p100 = scmp.eq.s32.totalorder %s10, 0
    %p101 = por %p99, %p100
    %p102 = scmp.ne.s32.totalorder %s91, %s94
    %p103 = scmp.eq.s32.totalorder %s15, 1
    %p104 = por %p102, %p103
    %p105 = scmp.ne.s32.totalorder %s94, %s95
    %p106 = scmp.eq.s32.totalorder %s15, 0
    %p107 = por %p105, %p106
    %p108 = scmp.ne.s32.totalorder %s94, %s95
    %p109 = scmp.eq.s32.totalorder %s16, 1
    %p110 = por %p108, %p109
    %p112 = scmp.ne.s32.totalorder %s95, %s111
    %p113 = scmp.eq.s32.totalorder %s16, 0
    %p114 = por %p112, %p113
    %s115 = ssub.s32 %s17, %s36
    %p116 = scmp.eq.s32.totalorder %s115, 0
    %s118 = sadd.s32 %s117, 1
    %s119 = scalar_select %p116, %s117, %s118
    %p122 = pneg %p116
    %p123 = scmp.eq.s32.totalorder %s10, 1
    %p124 = por %p122, %p123
    %p125 = scmp.ne.s32.totalorder %s117, %s120
    %p126 = scmp.eq.s32.totalorder %s10, 0
    %p127 = por %p125, %p126
    %p128 = scmp.ne.s32.totalorder %s117, %s120
    %p129 = scmp.eq.s32.totalorder %s15, 1
    %p130 = por %p128, %p129
    %p131 = scmp.ne.s32.totalorder %s120, %s121
    %p132 = scmp.eq.s32.totalorder %s15, 0
    %p133 = por %p131, %p132
    %p134 = scmp.ne.s32.totalorder %s120, %s121
    %p135 = scmp.eq.s32.totalorder %s16, 1
    %p136 = por %p134, %p135
    %p138 = scmp.ne.s32.totalorder %s121, %s137
    %p139 = scmp.eq.s32.totalorder %s16, 0
    %p140 = por %p138, %p139
    %s141 = ssub.s32 %s18, %s32
    %s142 = ssub.s32 %s19, %s28
    %s143 = sor.u32 %s141, %s142
    %s144 = ssub.s32 %s17, %s36
    %s145 = sor.u32 %s143, %s144
    %p146 = scmp.eq.s32.totalorder %s145, 0
    %s148 = sadd.s32 %s147, 1
    %s149 = scalar_select %p146, %s147, %s148
    %p152 = pneg %p146
    %p153 = scmp.eq.s32.totalorder %s10, 1
    %p154 = por %p152, %p153
    %p155 = scmp.ne.s32.totalorder %s147, %s150
    %p156 = scmp.eq.s32.totalorder %s10, 0
    %p157 = por %p155, %p156
    %p158 = scmp.ne.s32.totalorder %s147, %s150
    %p159 = scmp.eq.s32.totalorder %s15, 1
    %p160 = por %p158, %p159
    %p161 = scmp.ne.s32.totalorder %s150, %s151
    %p162 = scmp.eq.s32.totalorder %s15, 0
    %p163 = por %p161, %p162
    %p164 = scmp.ne.s32.totalorder %s150, %s151
    %p165 = scmp.eq.s32.totalorder %s16, 1
    %p166 = por %p164, %p165
    %p168 = scmp.ne.s32.totalorder %s151, %s167
    %p169 = scmp.eq.s32.totalorder %s16, 0
    %p170 = por %p168, %p169
    %p171 = scmp.le.s32.totalorder 1, %s10
    %p172 = scmp.lt.s32.totalorder %s10, 3
    %p173 = pnand %p171, %p172
    %p174 = pneg %p173
    // Predicated region
    $region9: #{basic_conv2d_forward.1} parent=5 // pred_check
      _
    $region10: #{basic_conv2d_forward.1} parent=5 // pred_check_branch
      %176 = sbr.rel (%p173) target = $region12
    $region11: #{basic_conv2d_forward.1} parent=5 // pred_region
      %s177 = ssub.s32 %s10, 1
      // Predicated region
      $region13: #{basic_conv2d_forward.1} parent=11 // pred_check
        %p178 = pneg %p81
      $region14: #{basic_conv2d_forward.1} parent=11 // pred_check_branch
        %180 = sbr.rel (%p178) target = $region16
      $region15: #{basic_conv2d_forward.1} parent=11 // pred_region
        %p181 = scmp.lt.s32.totalorder %s20, 0
        %s182 = scalar_select %p181, %s20, 0
        %s183 = smul.addr %s182, 2
        %s184 = scalar_lea.vmem %s1, %s183
      $region16: #{basic_conv2d_forward.1} parent=11 // pred_fallthru
        _
      // Predicated region
      $region17: #{basic_conv2d_forward.1} parent=11 // pred_check
        %p185 = pneg %p107
      $region18: #{basic_conv2d_forward.1} parent=11 // pred_check_branch
        %187 = sbr.rel (%p185) target = $region20
      $region19: #{basic_conv2d_forward.1} parent=11 // pred_region
        %p188 = scmp.lt.s32.totalorder %s20, 0
        %s189 = scalar_select %p188, %s20, 0
        %s190 = scalar_lea.vmem %s2, %s189
      $region20: #{basic_conv2d_forward.1} parent=11 // pred_fallthru
        _
      // Predicated region
      $region21: #{basic_conv2d_forward.1} parent=11 // pred_check
        %p191 = pneg %p133
      $region22: #{basic_conv2d_forward.1} parent=11 // pred_check_branch
        %193 = sbr.rel (%p191) target = $region24
      $region23: #{basic_conv2d_forward.1} parent=11 // pred_region
        %p194 = scmp.lt.s32.totalorder %s20, 0
        %s195 = scalar_select %p194, %s20, 0
        %s196 = scalar_lea.vmem %s3, %s195
      $region24: #{basic_conv2d_forward.1} parent=11 // pred_fallthru
        _
    $region12: #{basic_conv2d_forward.1} parent=5 // pred_fallthru
      _
    %p197 = scmp.lt.s32.totalorder %s10, 2
    // Predicated region
    $region25: #{basic_conv2d_forward.1} parent=5 // pred_check
      %p198 = pneg %p197
    $region26: #{basic_conv2d_forward.1} parent=5 // pred_check_branch
      %200 = sbr.rel (%p198) target = $region28
    $region27: #{basic_conv2d_forward.1} parent=5 // pred_region
      // Predicated region
      $region29: #{basic_conv2d_forward.1} parent=27 // pred_check
        %p201 = pneg %p49
      $region30: #{basic_conv2d_forward.1} parent=27 // pred_check_branch
        %203 = sbr.rel (%p201) target = $region32
      $region31: #{basic_conv2d_forward.1} parent=27 // pred_region
        %p204 = scmp.lt.s32.totalorder %s18, 1
        %s205 = scalar_select %p204, %s18, 1
        %s206 = smul.addr %s205, 72
        %s207 = smul.addr %s206, 4
        %s208 = scalar_lea.vmem %s0, %s207
      $region32: #{basic_conv2d_forward.1} parent=27 // pred_fallthru
        _
    $region28: #{basic_conv2d_forward.1} parent=5 // pred_fallthru
      _
    %p209 = scmp.le.s32.totalorder 1, %s10
    %p210 = scmp.lt.s32.totalorder %s10, 3
    %p211 = pnand %p209, %p210
    %p212 = pneg %p211
    // Predicated region
    $region33: #{basic_conv2d_forward.1} parent=5 // pred_check
      _
    $region34: #{basic_conv2d_forward.1} parent=5 // pred_check_branch
      %214 = sbr.rel (%p211) target = $region36
    $region35: #{basic_conv2d_forward.1} parent=5 // pred_region
      %s215 = ssub.s32 %s10, 1
      %p216 = scmp.lt.s32.totalorder %s21, 1
      %s217 = scalar_select %p216, %s21, 1
      %s218 = smul.addr %s217, 72
      %s219 = smul.addr %s218, 4
      %s220 = scalar_lea.vmem %s0, %s219
      %p221 = pneg %p55
      %p222 = pneg %p52
      %p223 = scmp.lt.s32.totalorder %s20, 0
      %s224 = scalar_select %p223, %s20, 0
      %s225 = smul.addr %s224, 2
      %s226 = scalar_lea.vmem %s1, %s225
      %p227 = pneg %p81
      %p228 = pneg %p78
      %p229 = scmp.lt.s32.totalorder %s20, 0
      %s230 = scalar_select %p229, %s20, 0
      %s231 = scalar_lea.vmem %s2, %s230
      %p232 = pneg %p107
      %p233 = pneg %p104
      %p234 = scmp.lt.s32.totalorder %s20, 0
      %s235 = scalar_select %p234, %s20, 0
      %s236 = scalar_lea.vmem %s3, %s235
      %p237 = pneg %p133
      %p238 = pneg %p130
      %p239 = pneg %p163
      %p240 = pneg %p160
      %s241 = smul.u32 8, %s22
      %p242 = scmp.lt.s32.totalorder %s21, 1
      %s243 = scalar_select %p242, %s21, 1
      %p244 = scmp.lt.s32.totalorder %s241, 7
      %s245 = scalar_select %p244, %s241, 7
      %p246 = scmp.lt.s32.totalorder %s20, 0
      %s247 = scalar_select %p246, %s20, 0
      %s248 = sadd.s32 %s247, %s245
      %s249 = smul.addr %s243, 8
      %s250 = sadd.s32 %s248, %s249
      %s251 = smul.addr %s250, 8
      %s252 = scalar_lea.vmem %s4, %s251
      %p253 = scmp.lt.s32.totalorder %s21, 1
      %s254 = scalar_select %p253, %s21, 1
      %s255 = smul.addr %s254, 72
      %s256 = smul.addr %s255, 4
      %s257 = scalar_lea.vmem %s0, %s256
      %p258 = scmp.lt.s32.totalorder %s20, 0
      %s259 = scalar_select %p258, %s20, 0
      %s260 = smul.addr %s259, 2
      %s261 = scalar_lea.vmem %s1, %s260
      %p262 = scmp.lt.s32.totalorder %s20, 0
      %s263 = scalar_select %p262, %s20, 0
      %s264 = scalar_lea.vmem %s2, %s263
      %p265 = scmp.lt.s32.totalorder %s20, 0
      %s266 = scalar_select %p265, %s20, 0
      %s267 = scalar_lea.vmem %s3, %s266
      %s268 = smul.u32 8, %s22
      %p269 = scmp.lt.s32.totalorder %s21, 1
      %s270 = scalar_select %p269, %s21, 1
      %p271 = scmp.lt.s32.totalorder %s268, 7
      %s272 = scalar_select %p271, %s268, 7
      %p273 = scmp.lt.s32.totalorder %s20, 0
      %s274 = scalar_select %p273, %s20, 0
      %s275 = sadd.s32 %s274, %s272
      %s276 = smul.addr %s270, 8
      %s277 = sadd.s32 %s275, %s276
      %s278 = smul.addr %s277, 8
      %s279 = scalar_lea.vmem %s4, %s278
      %s280 = smul.u32 8, %s22
      %s282 = smul.u32 %s22, 8
      %v283 = vld [vmem:[%s264] sm:$0x1]
      %v284 = vld [vmem:[%s267] sm:$0x1]
      %s285 = smul.u32 %s282, 2
      %s286 = smul.addr %s285, 4
      %s287 = scalar_lea.vmem %s257, %s286
      %v288 = vld [vmem:[%s287] sm:$0xf]
      %v289 = vld [vmem:[%s261] sm:$0x3]
      %s290 = sadd.s32 %s282, 9
      %s291 = smul.u32 %s290, 2
      %s292 = smul.addr %s291, 4
      %s293 = scalar_lea.vmem %s257, %s292
      %v294 = vld [vmem:[%s293] sm:$0xf]
      %s295 = scalar_lea.vmem %s261, 2
      %v296 = vld [vmem:[%s295] sm:$0x3]
      %vm297 = vcmask 31744
      %v299 = vsel %vm297, %v294, 0
      %vm301 = vcmask 1041408
      %v303 = vsel %vm301, %v296, 0
      %305 = vmatpush.bf16.msra.mxu0 0
      %306 = vmatpush.bf16.msra.mxu0 0
      %307 = vmatpush.bf16.msra.mxu0 0
      %308 = vmatpush.bf16.msra.mxu0 0
      %309 = vmatpush.bf16.msra.mxu0 0
      %310 = vmatpush.bf16.msra.mxu0 0
      %311 = vmatpush.bf16.msra.mxu0 0
      %312 = vmatpush.bf16.msra.mxu0 %v303
      %313 = vmatmul.bf16.gmra.mxu0 %v299
      %v314 = vpop.f32.mrf.mxu0
      %v315 = vadd.f32 0.0, %v314
      %v316 = vpop.f32.mrf.mxu0
      %317 = vdwg.mxu0
      %v319 = vsel %vm297, %v288, 0
      %v322 = vsel %vm301, %v289, 0
      %324 = vmatpush.bf16.msra.mxu0 0
      %325 = vmatpush.bf16.msra.mxu0 0
      %326 = vmatpush.bf16.msra.mxu0 0
      %327 = vmatpush.bf16.msra.mxu0 0
      %328 = vmatpush.bf16.msra.mxu0 0
      %329 = vmatpush.bf16.msra.mxu0 0
      %330 = vmatpush.bf16.msra.mxu0 0
      %331 = vmatpush.bf16.msra.mxu0 %v322
      %332 = vmatmul.bf16.gmra.mxu0 %v319
      %v333 = vpop.f32.mrf.mxu0
      %v334 = vadd.f32 %v315, %v333
      %v335 = vpop.f32.mrf.mxu0
      %336 = vdwg.mxu0
      %v337 = vld [vmem:[%s287] sm:$0xf]
      %v338 = vld [vmem:[%s287 + $0x4] sm:$0x1]
      %s339 = scalar_lea.vmem %s261, 4
      %v340 = vld [vmem:[%s339] sm:$0x3]
      %v343 = vunpack.c.l.b16 %v337
      %v344 = vunpack.c.l.b16 %v338
      %v345 = vpack.c.b16 %v344, %v343
      %v347 = vshrl.u32 %v345, 16
      %v349 = vshll.u32 %v345, 16
      %v351 = vrot.slane %v349, 1
      %v352 = vor.u32 %v347, %v351
      %v354 = vsel %vm297, %v352, 0
      %v357 = vsel %vm301, %v340, 0
      %359 = vmatpush.bf16.msra.mxu0 0
      %360 = vmatpush.bf16.msra.mxu0 0
      %361 = vmatpush.bf16.msra.mxu0 0
      %362 = vmatpush.bf16.msra.mxu0 0
      %363 = vmatpush.bf16.msra.mxu0 0
      %364 = vmatpush.bf16.msra.mxu0 0
      %365 = vmatpush.bf16.msra.mxu0 0
      %366 = vmatpush.bf16.msra.mxu0 %v357
      %367 = vmatmul.bf16.gmra.mxu0 %v354
      %v368 = vpop.f32.mrf.mxu0
      %v369 = vadd.f32 0.0, %v368
      %v370 = vpop.f32.mrf.mxu0
      %371 = vdwg.mxu0
      %v372 = vadd.f32 %v334, %v369
      %s373 = sadd.s32 %s282, 18
      %s374 = smul.u32 %s373, 2
      %s375 = smul.addr %s374, 4
      %s376 = scalar_lea.vmem %s257, %s375
      %v377 = vld [vmem:[%s376] sm:$0xf]
      %s378 = scalar_lea.vmem %s261, 6
      %v379 = vld [vmem:[%s378] sm:$0x3]
      %v381 = vsel %vm297, %v377, 0
      %v384 = vsel %vm301, %v379, 0
      %386 = vmatpush.bf16.msra.mxu0 0
      %387 = vmatpush.bf16.msra.mxu0 0
      %388 = vmatpush.bf16.msra.mxu0 0
      %389 = vmatpush.bf16.msra.mxu0 0
      %390 = vmatpush.bf16.msra.mxu0 0
      %391 = vmatpush.bf16.msra.mxu0 0
      %392 = vmatpush.bf16.msra.mxu0 0
      %393 = vmatpush.bf16.msra.mxu0 %v384
      %394 = vmatmul.bf16.gmra.mxu0 %v381
      %v395 = vpop.f32.mrf.mxu0
      %v396 = vadd.f32 0.0, %v395
      %v397 = vpop.f32.mrf.mxu0
      %398 = vdwg.mxu0
      %v399 = vadd.f32 %v372, %v396
      %s400 = sadd.s32 %s282, 27
      %s401 = smul.u32 %s400, 2
      %s402 = smul.addr %s401, 4
      %s403 = scalar_lea.vmem %s257, %s402
      %v404 = vld [vmem:[%s403] sm:$0xf]
      %s405 = scalar_lea.vmem %s261, 8
      %v406 = vld [vmem:[%s405] sm:$0x3]
      %v408 = vsel %vm297, %v404, 0
      %v411 = vsel %vm301, %v406, 0
      %413 = vmatpush.bf16.msra.mxu0 0
      %414 = vmatpush.bf16.msra.mxu0 0
      %415 = vmatpush.bf16.msra.mxu0 0
      %416 = vmatpush.bf16.msra.mxu0 0
      %417 = vmatpush.bf16.msra.mxu0 0
      %418 = vmatpush.bf16.msra.mxu0 0
      %419 = vmatpush.bf16.msra.mxu0 0
      %420 = vmatpush.bf16.msra.mxu0 %v411
      %421 = vmatmul.bf16.gmra.mxu0 %v408
      %v422 = vpop.f32.mrf.mxu0
      %v423 = vadd.f32 0.0, %v422
      %v424 = vpop.f32.mrf.mxu0
      %425 = vdwg.mxu0
      %v426 = vadd.f32 %v399, %v423
      %v427 = vld [vmem:[%s376] sm:$0xf]
      %v428 = vld [vmem:[%s376 + $0x4] sm:$0x1]
      %s429 = scalar_lea.vmem %s261, 10
      %v430 = vld [vmem:[%s429] sm:$0x3]
      %v433 = vunpack.c.l.b16 %v427
      %v434 = vunpack.c.l.b16 %v428
      %v435 = vpack.c.b16 %v434, %v433
      %v437 = vshrl.u32 %v435, 16
      %v439 = vshll.u32 %v435, 16
      %v441 = vrot.slane %v439, 1
      %v442 = vor.u32 %v437, %v441
      %v444 = vsel %vm297, %v442, 0
      %v447 = vsel %vm301, %v430, 0
      %449 = vmatpush.bf16.msra.mxu0 0
      %450 = vmatpush.bf16.msra.mxu0 0
      %451 = vmatpush.bf16.msra.mxu0 0
      %452 = vmatpush.bf16.msra.mxu0 0
      %453 = vmatpush.bf16.msra.mxu0 0
      %454 = vmatpush.bf16.msra.mxu0 0
      %455 = vmatpush.bf16.msra.mxu0 0
      %456 = vmatpush.bf16.msra.mxu0 %v447
      %457 = vmatmul.bf16.gmra.mxu0 %v444
      %v458 = vpop.f32.mrf.mxu0
      %v459 = vadd.f32 0.0, %v458
      %v460 = vpop.f32.mrf.mxu0
      %461 = vdwg.mxu0
      %v462 = vadd.f32 %v426, %v459
      %s463 = sadd.s32 %s282, 1
      %s464 = smul.u32 %s463, 2
      %s465 = smul.addr %s464, 4
      %s466 = scalar_lea.vmem %s257, %s465
      %v467 = vld [vmem:[%s466] sm:$0xf]
      %s468 = scalar_lea.vmem %s261, 12
      %v469 = vld [vmem:[%s468] sm:$0x3]
      %v471 = vsel %vm297, %v467, 0
      %v474 = vsel %vm301, %v469, 0
      %476 = vmatpush.bf16.msra.mxu0 0
      %477 = vmatpush.bf16.msra.mxu0 0
      %478 = vmatpush.bf16.msra.mxu0 0
      %479 = vmatpush.bf16.msra.mxu0 0
      %480 = vmatpush.bf16.msra.mxu0 0
      %481 = vmatpush.bf16.msra.mxu0 0
      %482 = vmatpush.bf16.msra.mxu0 0
      %483 = vmatpush.bf16.msra.mxu0 %v474
      %484 = vmatmul.bf16.gmra.mxu0 %v471
      %v485 = vpop.f32.mrf.mxu0
      %v486 = vadd.f32 0.0, %v485
      %v487 = vpop.f32.mrf.mxu0
      %488 = vdwg.mxu0
      %v489 = vadd.f32 %v462, %v486
      %s490 = sadd.s32 %s282, 10
      %s491 = smul.u32 %s490, 2
      %s492 = smul.addr %s491, 4
      %s493 = scalar_lea.vmem %s257, %s492
      %v494 = vld [vmem:[%s493] sm:$0xf]
      %s495 = scalar_lea.vmem %s261, 14
      %v496 = vld [vmem:[%s495] sm:$0x3]
      %v498 = vsel %vm297, %v494, 0
      %v501 = vsel %vm301, %v496, 0
      %503 = vmatpush.bf16.msra.mxu0 0
      %504 = vmatpush.bf16.msra.mxu0 0
      %505 = vmatpush.bf16.msra.mxu0 0
      %506 = vmatpush.bf16.msra.mxu0 0
      %507 = vmatpush.bf16.msra.mxu0 0
      %508 = vmatpush.bf16.msra.mxu0 0
      %509 = vmatpush.bf16.msra.mxu0 0
      %510 = vmatpush.bf16.msra.mxu0 %v501
      %511 = vmatmul.bf16.gmra.mxu0 %v498
      %v512 = vpop.f32.mrf.mxu0
      %v513 = vadd.f32 0.0, %v512
      %v514 = vpop.f32.mrf.mxu0
      %515 = vdwg.mxu0
      %v516 = vadd.f32 %v489, %v513
      %v517 = vld [vmem:[%s466] sm:$0xf]
      %v518 = vld [vmem:[%s466 + $0x4] sm:$0x1]
      %s519 = scalar_lea.vmem %s261, 16
      %v520 = vld [vmem:[%s519] sm:$0x3]
      %v523 = vunpack.c.l.b16 %v517
      %v524 = vunpack.c.l.b16 %v518
      %v525 = vpack.c.b16 %v524, %v523
      %v527 = vshrl.u32 %v525, 16
      %v529 = vshll.u32 %v525, 16
      %v531 = vrot.slane %v529, 1
      %v532 = vor.u32 %v527, %v531
      %v534 = vsel %vm297, %v532, 0
      %v537 = vsel %vm301, %v520, 0
      %539 = vmatpush.bf16.msra.mxu0 0
      %540 = vmatpush.bf16.msra.mxu0 0
      %541 = vmatpush.bf16.msra.mxu0 0
      %542 = vmatpush.bf16.msra.mxu0 0
      %543 = vmatpush.bf16.msra.mxu0 0
      %544 = vmatpush.bf16.msra.mxu0 0
      %545 = vmatpush.bf16.msra.mxu0 0
      %546 = vmatpush.bf16.msra.mxu0 %v537
      %547 = vmatmul.bf16.gmra.mxu0 %v534
      %v548 = vpop.f32.mrf.mxu0
      %v549 = vadd.f32 0.0, %v548
      %v550 = vpop.f32.mrf.mxu0
      %551 = vdwg.mxu0
      %v552 = vadd.f32 %v516, %v549
      %v554 = vperm.slane %v283, 0
      %v556 = vmul.f32 %v552, %v554
      %v558 = vperm.slane %v284, 0
      %v560 = vadd.f32 %v556, %v558
      %v561 = vmax.f32 %v560, 0.0
      %562 = vst [vmem:[%s279] sm:$0xff] %v561
      %v563 = vld [vmem:[%s466] sm:$0xf]
      %v564 = vld [vmem:[%s261] sm:$0x3]
      %v565 = vld [vmem:[%s493] sm:$0xf]
      %v566 = vld [vmem:[%s295] sm:$0x3]
      %v568 = vsel %vm297, %v565, 0
      %v571 = vsel %vm301, %v566, 0
      %573 = vmatpush.bf16.msra.mxu0 0
      %574 = vmatpush.bf16.msra.mxu0 0
      %575 = vmatpush.bf16.msra.mxu0 0
      %576 = vmatpush.bf16.msra.mxu0 0
      %577 = vmatpush.bf16.msra.mxu0 0
      %578 = vmatpush.bf16.msra.mxu0 0
      %579 = vmatpush.bf16.msra.mxu0 0
      %580 = vmatpush.bf16.msra.mxu0 %v571
      %581 = vmatmul.bf16.gmra.mxu0 %v568
      %v582 = vpop.f32.mrf.mxu0
      %v583 = vadd.f32 0.0, %v582
      %v584 = vpop.f32.mrf.mxu0
      %585 = vdwg.mxu0
      %v587 = vsel %vm297, %v563, 0
      %v590 = vsel %vm301, %v564, 0
      %592 = vmatpush.bf16.msra.mxu0 0
      %593 = vmatpush.bf16.msra.mxu0 0
      %594 = vmatpush.bf16.msra.mxu0 0
      %595 = vmatpush.bf16.msra.mxu0 0
      %596 = vmatpush.bf16.msra.mxu0 0
      %597 = vmatpush.bf16.msra.mxu0 0
      %598 = vmatpush.bf16.msra.mxu0 0
      %599 = vmatpush.bf16.msra.mxu0 %v590
      %600 = vmatmul.bf16.gmra.mxu0 %v587
      %v601 = vpop.f32.mrf.mxu0
      %v602 = vadd.f32 %v583, %v601
      %v603 = vpop.f32.mrf.mxu0
      %604 = vdwg.mxu0
      %v605 = vld [vmem:[%s466] sm:$0xf]
      %v606 = vld [vmem:[%s466 + $0x4] sm:$0x1]
      %v607 = vld [vmem:[%s339] sm:$0x3]
      %v610 = vunpack.c.l.b16 %v605
      %v611 = vunpack.c.l.b16 %v606
      %v612 = vpack.c.b16 %v611, %v610
      %v614 = vshrl.u32 %v612, 16
      %v616 = vshll.u32 %v612, 16
      %v618 = vrot.slane %v616, 1
      %v619 = vor.u32 %v614, %v618
      %v621 = vsel %vm297, %v619, 0
      %v624 = vsel %vm301, %v607, 0
      %626 = vmatpush.bf16.msra.mxu0 0
      %627 = vmatpush.bf16.msra.mxu0 0
      %628 = vmatpush.bf16.msra.mxu0 0
      %629 = vmatpush.bf16.msra.mxu0 0
      %630 = vmatpush.bf16.msra.mxu0 0
      %631 = vmatpush.bf16.msra.mxu0 0
      %632 = vmatpush.bf16.msra.mxu0 0
      %633 = vmatpush.bf16.msra.mxu0 %v624
      %634 = vmatmul.bf16.gmra.mxu0 %v621
      %v635 = vpop.f32.mrf.mxu0
      %v636 = vadd.f32 0.0, %v635
      %v637 = vpop.f32.mrf.mxu0
      %638 = vdwg.mxu0
      %v639 = vadd.f32 %v602, %v636
      %s640 = sadd.s32 %s282, 19
      %s641 = smul.u32 %s640, 2
      %s642 = smul.addr %s641, 4
      %s643 = scalar_lea.vmem %s257, %s642
      %v644 = vld [vmem:[%s643] sm:$0xf]
      %v645 = vld [vmem:[%s378] sm:$0x3]
      %v647 = vsel %vm297, %v644, 0
      %v650 = vsel %vm301, %v645, 0
      %652 = vmatpush.bf16.msra.mxu0 0
      %653 = vmatpush.bf16.msra.mxu0 0
      %654 = vmatpush.bf16.msra.mxu0 0
      %655 = vmatpush.bf16.msra.mxu0 0
      %656 = vmatpush.bf16.msra.mxu0 0
      %657 = vmatpush.bf16.msra.mxu0 0
      %658 = vmatpush.bf16.msra.mxu0 0
      %659 = vmatpush.bf16.msra.mxu0 %v650
      %660 = vmatmul.bf16.gmra.mxu0 %v647
      %v661 = vpop.f32.mrf.mxu0
      %v662 = vadd.f32 0.0, %v661
      %v663 = vpop.f32.mrf.mxu0
      %664 = vdwg.mxu0
      %v665 = vadd.f32 %v639, %v662
      %s666 = sadd.s32 %s282, 28
      %s667 = smul.u32 %s666, 2
      %s668 = smul.addr %s667, 4
      %s669 = scalar_lea.vmem %s257, %s668
      %v670 = vld [vmem:[%s669] sm:$0xf]
      %v671 = vld [vmem:[%s405] sm:$0x3]
      %v673 = vsel %vm297, %v670, 0
      %v676 = vsel %vm301, %v671, 0
      %678 = vmatpush.bf16.msra.mxu0 0
      %679 = vmatpush.bf16.msra.mxu0 0
      %680 = vmatpush.bf16.msra.mxu0 0
      %681 = vmatpush.bf16.msra.mxu0 0
      %682 = vmatpush.bf16.msra.mxu0 0
      %683 = vmatpush.bf16.msra.mxu0 0
      %684 = vmatpush.bf16.msra.mxu0 0
      %685 = vmatpush.bf16.msra.mxu0 %v676
      %686 = vmatmul.bf16.gmra.mxu0 %v673
      %v687 = vpop.f32.mrf.mxu0
      %v688 = vadd.f32 0.0, %v687
      %v689 = vpop.f32.mrf.mxu0
      %690 = vdwg.mxu0
      %v691 = vadd.f32 %v665, %v688
      %v692 = vld [vmem:[%s643] sm:$0xf]
      %v693 = vld [vmem:[%s643 + $0x4] sm:$0x1]
      %v694 = vld [vmem:[%s429] sm:$0x3]
      %v697 = vunpack.c.l.b16 %v692
      %v698 = vunpack.c.l.b16 %v693
      %v699 = vpack.c.b16 %v698, %v697
      %v701 = vshrl.u32 %v699, 16
      %v703 = vshll.u32 %v699, 16
      %v705 = vrot.slane %v703, 1
      %v706 = vor.u32 %v701, %v705
      %v708 = vsel %vm297, %v706, 0
      %v711 = vsel %vm301, %v694, 0
      %713 = vmatpush.bf16.msra.mxu0 0
      %714 = vmatpush.bf16.msra.mxu0 0
      %715 = vmatpush.bf16.msra.mxu0 0
      %716 = vmatpush.bf16.msra.mxu0 0
      %717 = vmatpush.bf16.msra.mxu0 0
      %718 = vmatpush.bf16.msra.mxu0 0
      %719 = vmatpush.bf16.msra.mxu0 0
      %720 = vmatpush.bf16.msra.mxu0 %v711
      %721 = vmatmul.bf16.gmra.mxu0 %v708
      %v722 = vpop.f32.mrf.mxu0
      %v723 = vadd.f32 0.0, %v722
      %v724 = vpop.f32.mrf.mxu0
      %725 = vdwg.mxu0
      %v726 = vadd.f32 %v691, %v723
      %s727 = sadd.s32 %s282, 2
      %s728 = smul.u32 %s727, 2
      %s729 = smul.addr %s728, 4
      %s730 = scalar_lea.vmem %s257, %s729
      %v731 = vld [vmem:[%s730] sm:$0xf]
      %v732 = vld [vmem:[%s468] sm:$0x3]
      %v734 = vsel %vm297, %v731, 0
      %v737 = vsel %vm301, %v732, 0
      %739 = vmatpush.bf16.msra.mxu0 0
      %740 = vmatpush.bf16.msra.mxu0 0
      %741 = vmatpush.bf16.msra.mxu0 0
      %742 = vmatpush.bf16.msra.mxu0 0
      %743 = vmatpush.bf16.msra.mxu0 0
      %744 = vmatpush.bf16.msra.mxu0 0
      %745 = vmatpush.bf16.msra.mxu0 0
      %746 = vmatpush.bf16.msra.mxu0 %v737
      %747 = vmatmul.bf16.gmra.mxu0 %v734
      %v748 = vpop.f32.mrf.mxu0
      %v749 = vadd.f32 0.0, %v748
      %v750 = vpop.f32.mrf.mxu0
      %751 = vdwg.mxu0
      %v752 = vadd.f32 %v726, %v749
      %s753 = sadd.s32 %s282, 11
      %s754 = smul.u32 %s753, 2
      %s755 = smul.addr %s754, 4
      %s756 = scalar_lea.vmem %s257, %s755
      %v757 = vld [vmem:[%s756] sm:$0xf]
      %v758 = vld [vmem:[%s495] sm:$0x3]
      %v760 = vsel %vm297, %v757, 0
      %v763 = vsel %vm301, %v758, 0
      %765 = vmatpush.bf16.msra.mxu0 0
      %766 = vmatpush.bf16.msra.mxu0 0
      %767 = vmatpush.bf16.msra.mxu0 0
      %768 = vmatpush.bf16.msra.mxu0 0
      %769 = vmatpush.bf16.msra.mxu0 0
      %770 = vmatpush.bf16.msra.mxu0 0
      %771 = vmatpush.bf16.msra.mxu0 0
      %772 = vmatpush.bf16.msra.mxu0 %v763
      %773 = vmatmul.bf16.gmra.mxu0 %v760
      %v774 = vpop.f32.mrf.mxu0
      %v775 = vadd.f32 0.0, %v774
      %v776 = vpop.f32.mrf.mxu0
      %777 = vdwg.mxu0
      %v778 = vadd.f32 %v752, %v775
      %v779 = vld [vmem:[%s730] sm:$0xf]
      %v780 = vld [vmem:[%s730 + $0x4] sm:$0x1]
      %v781 = vld [vmem:[%s519] sm:$0x3]
      %v784 = vunpack.c.l.b16 %v779
      %v785 = vunpack.c.l.b16 %v780
      %v786 = vpack.c.b16 %v785, %v784
      %v788 = vshrl.u32 %v786, 16
      %v790 = vshll.u32 %v786, 16
      %v792 = vrot.slane %v790, 1
      %v793 = vor.u32 %v788, %v792
      %v795 = vsel %vm297, %v793, 0
      %v798 = vsel %vm301, %v781, 0
      %800 = vmatpush.bf16.msra.mxu0 0
      %801 = vmatpush.bf16.msra.mxu0 0
      %802 = vmatpush.bf16.msra.mxu0 0
      %803 = vmatpush.bf16.msra.mxu0 0
      %804 = vmatpush.bf16.msra.mxu0 0
      %805 = vmatpush.bf16.msra.mxu0 0
      %806 = vmatpush.bf16.msra.mxu0 0
      %807 = vmatpush.bf16.msra.mxu0 %v798
      %808 = vmatmul.bf16.gmra.mxu0 %v795
      %v809 = vpop.f32.mrf.mxu0
      %v810 = vadd.f32 0.0, %v809
      %v811 = vpop.f32.mrf.mxu0
      %812 = vdwg.mxu0
      %v813 = vadd.f32 %v778, %v810
      %v814 = vmul.f32 %v813, %v554
      %v815 = vadd.f32 %v814, %v558
      %v816 = vmax.f32 %v815, 0.0
      %s817 = scalar_lea.vmem %s279, 8
      %818 = vst [vmem:[%s817] sm:$0xff] %v816
      %v819 = vld [vmem:[%s730] sm:$0xf]
      %v820 = vld [vmem:[%s261] sm:$0x3]
      %v821 = vld [vmem:[%s756] sm:$0xf]
      %v822 = vld [vmem:[%s295] sm:$0x3]
      %v824 = vsel %vm297, %v821, 0
      %v827 = vsel %vm301, %v822, 0
      %829 = vmatpush.bf16.msra.mxu0 0
      %830 = vmatpush.bf16.msra.mxu0 0
      %831 = vmatpush.bf16.msra.mxu0 0
      %832 = vmatpush.bf16.msra.mxu0 0
      %833 = vmatpush.bf16.msra.mxu0 0
      %834 = vmatpush.bf16.msra.mxu0 0
      %835 = vmatpush.bf16.msra.mxu0 0
      %836 = vmatpush.bf16.msra.mxu0 %v827
      %837 = vmatmul.bf16.gmra.mxu0 %v824
      %v838 = vpop.f32.mrf.mxu0
      %v839 = vadd.f32 0.0, %v838
      %v840 = vpop.f32.mrf.mxu0
      %841 = vdwg.mxu0
      %v843 = vsel %vm297, %v819, 0
      %v846 = vsel %vm301, %v820, 0
      %848 = vmatpush.bf16.msra.mxu0 0
      %849 = vmatpush.bf16.msra.mxu0 0
      %850 = vmatpush.bf16.msra.mxu0 0
      %851 = vmatpush.bf16.msra.mxu0 0
      %852 = vmatpush.bf16.msra.mxu0 0
      %853 = vmatpush.bf16.msra.mxu0 0
      %854 = vmatpush.bf16.msra.mxu0 0
      %855 = vmatpush.bf16.msra.mxu0 %v846
      %856 = vmatmul.bf16.gmra.mxu0 %v843
      %v857 = vpop.f32.mrf.mxu0
      %v858 = vadd.f32 %v839, %v857
      %v859 = vpop.f32.mrf.mxu0
      %860 = vdwg.mxu0
      %v861 = vld [vmem:[%s730] sm:$0xf]
      %v862 = vld [vmem:[%s730 + $0x4] sm:$0x1]
      %v863 = vld [vmem:[%s339] sm:$0x3]
      %v866 = vunpack.c.l.b16 %v861
      %v867 = vunpack.c.l.b16 %v862
      %v868 = vpack.c.b16 %v867, %v866
      %v870 = vshrl.u32 %v868, 16
      %v872 = vshll.u32 %v868, 16
      %v874 = vrot.slane %v872, 1
      %v875 = vor.u32 %v870, %v874
      %v877 = vsel %vm297, %v875, 0
      %v880 = vsel %vm301, %v863, 0
      %882 = vmatpush.bf16.msra.mxu0 0
      %883 = vmatpush.bf16.msra.mxu0 0
      %884 = vmatpush.bf16.msra.mxu0 0
      %885 = vmatpush.bf16.msra.mxu0 0
      %886 = vmatpush.bf16.msra.mxu0 0
      %887 = vmatpush.bf16.msra.mxu0 0
      %888 = vmatpush.bf16.msra.mxu0 0
      %889 = vmatpush.bf16.msra.mxu0 %v880
      %890 = vmatmul.bf16.gmra.mxu0 %v877
      %v891 = vpop.f32.mrf.mxu0
      %v892 = vadd.f32 0.0, %v891
      %v893 = vpop.f32.mrf.mxu0
      %894 = vdwg.mxu0
      %v895 = vadd.f32 %v858, %v892
      %s896 = sadd.s32 %s282, 20
      %s897 = smul.u32 %s896, 2
      %s898 = smul.addr %s897, 4
      %s899 = scalar_lea.vmem %s257, %s898
      %v900 = vld [vmem:[%s899] sm:$0xf]
      %v901 = vld [vmem:[%s378] sm:$0x3]
      %v903 = vsel %vm297, %v900, 0
      %v906 = vsel %vm301, %v901, 0
      %908 = vmatpush.bf16.msra.mxu0 0
      %909 = vmatpush.bf16.msra.mxu0 0
      %910 = vmatpush.bf16.msra.mxu0 0
      %911 = vmatpush.bf16.msra.mxu0 0
      %912 = vmatpush.bf16.msra.mxu0 0
      %913 = vmatpush.bf16.msra.mxu0 0
      %914 = vmatpush.bf16.msra.mxu0 0
      %915 = vmatpush.bf16.msra.mxu0 %v906
      %916 = vmatmul.bf16.gmra.mxu0 %v903
      %v917 = vpop.f32.mrf.mxu0
      %v918 = vadd.f32 0.0, %v917
      %v919 = vpop.f32.mrf.mxu0
      %920 = vdwg.mxu0
      %v921 = vadd.f32 %v895, %v918
      %s922 = sadd.s32 %s282, 29
      %s923 = smul.u32 %s922, 2
      %s924 = smul.addr %s923, 4
      %s925 = scalar_lea.vmem %s257, %s924
      %v926 = vld [vmem:[%s925] sm:$0xf]
      %v927 = vld [vmem:[%s405] sm:$0x3]
      %v929 = vsel %vm297, %v926, 0
      %v932 = vsel %vm301, %v927, 0
      %934 = vmatpush.bf16.msra.mxu0 0
      %935 = vmatpush.bf16.msra.mxu0 0
      %936 = vmatpush.bf16.msra.mxu0 0
      %937 = vmatpush.bf16.msra.mxu0 0
      %938 = vmatpush.bf16.msra.mxu0 0
      %939 = vmatpush.bf16.msra.mxu0 0
      %940 = vmatpush.bf16.msra.mxu0 0
      %941 = vmatpush.bf16.msra.mxu0 %v932
      %942 = vmatmul.bf16.gmra.mxu0 %v929
      %v943 = vpop.f32.mrf.mxu0
      %v944 = vadd.f32 0.0, %v943
      %v945 = vpop.f32.mrf.mxu0
      %946 = vdwg.mxu0
      %v947 = vadd.f32 %v921, %v944
      %v948 = vld [vmem:[%s899] sm:$0xf]
      %v949 = vld [vmem:[%s899 + $0x4] sm:$0x1]
      %v950 = vld [vmem:[%s429] sm:$0x3]
      %v953 = vunpack.c.l.b16 %v948
      %v954 = vunpack.c.l.b16 %v949
      %v955 = vpack.c.b16 %v954, %v953
      %v957 = vshrl.u32 %v955, 16
      %v959 = vshll.u32 %v955, 16
      %v961 = vrot.slane %v959, 1
      %v962 = vor.u32 %v957, %v961
      %v964 = vsel %vm297, %v962, 0
      %v967 = vsel %vm301, %v950, 0
      %969 = vmatpush.bf16.msra.mxu0 0
      %970 = vmatpush.bf16.msra.mxu0 0
      %971 = vmatpush.bf16.msra.mxu0 0
      %972 = vmatpush.bf16.msra.mxu0 0
      %973 = vmatpush.bf16.msra.mxu0 0
      %974 = vmatpush.bf16.msra.mxu0 0
      %975 = vmatpush.bf16.msra.mxu0 0
      %976 = vmatpush.bf16.msra.mxu0 %v967
      %977 = vmatmul.bf16.gmra.mxu0 %v964
      %v978 = vpop.f32.mrf.mxu0
      %v979 = vadd.f32 0.0, %v978
      %v980 = vpop.f32.mrf.mxu0
      %981 = vdwg.mxu0
      %v982 = vadd.f32 %v947, %v979
      %s983 = sadd.s32 %s282, 3
      %s984 = smul.u32 %s983, 2
      %s985 = smul.addr %s984, 4
      %s986 = scalar_lea.vmem %s257, %s985
      %v987 = vld [vmem:[%s986] sm:$0xf]
      %v988 = vld [vmem:[%s468] sm:$0x3]
      %v990 = vsel %vm297, %v987, 0
      %v993 = vsel %vm301, %v988, 0
      %995 = vmatpush.bf16.msra.mxu0 0
      %996 = vmatpush.bf16.msra.mxu0 0
      %997 = vmatpush.bf16.msra.mxu0 0
      %998 = vmatpush.bf16.msra.mxu0 0
      %999 = vmatpush.bf16.msra.mxu0 0
      %1000 = vmatpush.bf16.msra.mxu0 0
      %1001 = vmatpush.bf16.msra.mxu0 0
      %1002 = vmatpush.bf16.msra.mxu0 %v993
      %1003 = vmatmul.bf16.gmra.mxu0 %v990
      %v1004 = vpop.f32.mrf.mxu0
      %v1005 = vadd.f32 0.0, %v1004
      %v1006 = vpop.f32.mrf.mxu0
      %1007 = vdwg.mxu0
      %v1008 = vadd.f32 %v982, %v1005
      %s1009 = sadd.s32 %s282, 12
      %s1010 = smul.u32 %s1009, 2
      %s1011 = smul.addr %s1010, 4
      %s1012 = scalar_lea.vmem %s257, %s1011
      %v1013 = vld [vmem:[%s1012] sm:$0xf]
      %v1014 = vld [vmem:[%s495] sm:$0x3]
      %v1016 = vsel %vm297, %v1013, 0
      %v1019 = vsel %vm301, %v1014, 0
      %1021 = vmatpush.bf16.msra.mxu0 0
      %1022 = vmatpush.bf16.msra.mxu0 0
      %1023 = vmatpush.bf16.msra.mxu0 0
      %1024 = vmatpush.bf16.msra.mxu0 0
      %1025 = vmatpush.bf16.msra.mxu0 0
      %1026 = vmatpush.bf16.msra.mxu0 0
      %1027 = vmatpush.bf16.msra.mxu0 0
      %1028 = vmatpush.bf16.msra.mxu0 %v1019
      %1029 = vmatmul.bf16.gmra.mxu0 %v1016
      %v1030 = vpop.f32.mrf.mxu0
      %v1031 = vadd.f32 0.0, %v1030
      %v1032 = vpop.f32.mrf.mxu0
      %1033 = vdwg.mxu0
      %v1034 = vadd.f32 %v1008, %v1031
      %v1035 = vld [vmem:[%s986] sm:$0xf]
      %v1036 = vld [vmem:[%s986 + $0x4] sm:$0x1]
      %v1037 = vld [vmem:[%s519] sm:$0x3]
      %v1040 = vunpack.c.l.b16 %v1035
      %v1041 = vunpack.c.l.b16 %v1036
      %v1042 = vpack.c.b16 %v1041, %v1040
      %v1044 = vshrl.u32 %v1042, 16
      %v1046 = vshll.u32 %v1042, 16
      %v1048 = vrot.slane %v1046, 1
      %v1049 = vor.u32 %v1044, %v1048
      %v1051 = vsel %vm297, %v1049, 0
      %v1054 = vsel %vm301, %v1037, 0
      %1056 = vmatpush.bf16.msra.mxu0 0
      %1057 = vmatpush.bf16.msra.mxu0 0
      %1058 = vmatpush.bf16.msra.mxu0 0
      %1059 = vmatpush.bf16.msra.mxu0 0
      %1060 = vmatpush.bf16.msra.mxu0 0
      %1061 = vmatpush.bf16.msra.mxu0 0
      %1062 = vmatpush.bf16.msra.mxu0 0
      %1063 = vmatpush.bf16.msra.mxu0 %v1054
      %1064 = vmatmul.bf16.gmra.mxu0 %v1051
      %v1065 = vpop.f32.mrf.mxu0
      %v1066 = vadd.f32 0.0, %v1065
      %v1067 = vpop.f32.mrf.mxu0
      %1068 = vdwg.mxu0
      %v1069 = vadd.f32 %v1034, %v1066
      %v1070 = vmul.f32 %v1069, %v554
      %v1071 = vadd.f32 %v1070, %v558
      %v1072 = vmax.f32 %v1071, 0.0
      %s1073 = scalar_lea.vmem %s279, 16
      %1074 = vst [vmem:[%s1073] sm:$0xff] %v1072
      %v1075 = vld [vmem:[%s986] sm:$0xf]
      %v1076 = vld [vmem:[%s261] sm:$0x3]
      %v1077 = vld [vmem:[%s1012] sm:$0xf]
      %v1078 = vld [vmem:[%s295] sm:$0x3]
      %v1080 = vsel %vm297, %v1077, 0
      %v1083 = vsel %vm301, %v1078, 0
      %1085 = vmatpush.bf16.msra.mxu0 0
      %1086 = vmatpush.bf16.msra.mxu0 0
      %1087 = vmatpush.bf16.msra.mxu0 0
      %1088 = vmatpush.bf16.msra.mxu0 0
      %1089 = vmatpush.bf16.msra.mxu0 0
      %1090 = vmatpush.bf16.msra.mxu0 0
      %1091 = vmatpush.bf16.msra.mxu0 0
      %1092 = vmatpush.bf16.msra.mxu0 %v1083
      %1093 = vmatmul.bf16.gmra.mxu0 %v1080
      %v1094 = vpop.f32.mrf.mxu0
      %v1095 = vadd.f32 0.0, %v1094
      %v1096 = vpop.f32.mrf.mxu0
      %1097 = vdwg.mxu0
      %v1099 = vsel %vm297, %v1075, 0
      %v1102 = vsel %vm301, %v1076, 0
      %1104 = vmatpush.bf16.msra.mxu0 0
      %1105 = vmatpush.bf16.msra.mxu0 0
      %1106 = vmatpush.bf16.msra.mxu0 0
      %1107 = vmatpush.bf16.msra.mxu0 0
      %1108 = vmatpush.bf16.msra.mxu0 0
      %1109 = vmatpush.bf16.msra.mxu0 0
      %1110 = vmatpush.bf16.msra.mxu0 0
      %1111 = vmatpush.bf16.msra.mxu0 %v1102
      %1112 = vmatmul.bf16.gmra.mxu0 %v1099
      %v1113 = vpop.f32.mrf.mxu0
      %v1114 = vadd.f32 %v1095, %v1113
      %v1115 = vpop.f32.mrf.mxu0
      %1116 = vdwg.mxu0
      %v1117 = vld [vmem:[%s986] sm:$0xf]
      %v1118 = vld [vmem:[%s986 + $0x4] sm:$0x1]
      %v1119 = vld [vmem:[%s339] sm:$0x3]
      %v1122 = vunpack.c.l.b16 %v1117
      %v1123 = vunpack.c.l.b16 %v1118
      %v1124 = vpack.c.b16 %v1123, %v1122
      %v1126 = vshrl.u32 %v1124, 16
      %v1128 = vshll.u32 %v1124, 16
      %v1130 = vrot.slane %v1128, 1
      %v1131 = vor.u32 %v1126, %v1130
      %v1133 = vsel %vm297, %v1131, 0
      %v1136 = vsel %vm301, %v1119, 0
      %1138 = vmatpush.bf16.msra.mxu0 0
      %1139 = vmatpush.bf16.msra.mxu0 0
      %1140 = vmatpush.bf16.msra.mxu0 0
      %1141 = vmatpush.bf16.msra.mxu0 0
      %1142 = vmatpush.bf16.msra.mxu0 0
      %1143 = vmatpush.bf16.msra.mxu0 0
      %1144 = vmatpush.bf16.msra.mxu0 0
      %1145 = vmatpush.bf16.msra.mxu0 %v1136
      %1146 = vmatmul.bf16.gmra.mxu0 %v1133
      %v1147 = vpop.f32.mrf.mxu0
      %v1148 = vadd.f32 0.0, %v1147
      %v1149 = vpop.f32.mrf.mxu0
      %1150 = vdwg.mxu0
      %v1151 = vadd.f32 %v1114, %v1148
      %s1152 = sadd.s32 %s282, 21
      %s1153 = smul.u32 %s1152, 2
      %s1154 = smul.addr %s1153, 4
      %s1155 = scalar_lea.vmem %s257, %s1154
      %v1156 = vld [vmem:[%s1155] sm:$0xf]
      %v1157 = vld [vmem:[%s378] sm:$0x3]
      %v1159 = vsel %vm297, %v1156, 0
      %v1162 = vsel %vm301, %v1157, 0
      %1164 = vmatpush.bf16.msra.mxu0 0
      %1165 = vmatpush.bf16.msra.mxu0 0
      %1166 = vmatpush.bf16.msra.mxu0 0
      %1167 = vmatpush.bf16.msra.mxu0 0
      %1168 = vmatpush.bf16.msra.mxu0 0
      %1169 = vmatpush.bf16.msra.mxu0 0
      %1170 = vmatpush.bf16.msra.mxu0 0
      %1171 = vmatpush.bf16.msra.mxu0 %v1162
      %1172 = vmatmul.bf16.gmra.mxu0 %v1159
      %v1173 = vpop.f32.mrf.mxu0
      %v1174 = vadd.f32 0.0, %v1173
      %v1175 = vpop.f32.mrf.mxu0
      %1176 = vdwg.mxu0
      %v1177 = vadd.f32 %v1151, %v1174
      %s1178 = sadd.s32 %s282, 30
      %s1179 = smul.u32 %s1178, 2
      %s1180 = smul.addr %s1179, 4
      %s1181 = scalar_lea.vmem %s257, %s1180
      %v1182 = vld [vmem:[%s1181] sm:$0xf]
      %v1183 = vld [vmem:[%s405] sm:$0x3]
      %v1185 = vsel %vm297, %v1182, 0
      %v1188 = vsel %vm301, %v1183, 0
      %1190 = vmatpush.bf16.msra.mxu0 0
      %1191 = vmatpush.bf16.msra.mxu0 0
      %1192 = vmatpush.bf16.msra.mxu0 0
      %1193 = vmatpush.bf16.msra.mxu0 0
      %1194 = vmatpush.bf16.msra.mxu0 0
      %1195 = vmatpush.bf16.msra.mxu0 0
      %1196 = vmatpush.bf16.msra.mxu0 0
      %1197 = vmatpush.bf16.msra.mxu0 %v1188
      %1198 = vmatmul.bf16.gmra.mxu0 %v1185
      %v1199 = vpop.f32.mrf.mxu0
      %v1200 = vadd.f32 0.0, %v1199
      %v1201 = vpop.f32.mrf.mxu0
      %1202 = vdwg.mxu0
      %v1203 = vadd.f32 %v1177, %v1200
      %v1204 = vld [vmem:[%s1155] sm:$0xf]
      %v1205 = vld [vmem:[%s1155 + $0x4] sm:$0x1]
      %v1206 = vld [vmem:[%s429] sm:$0x3]
      %v1209 = vunpack.c.l.b16 %v1204
      %v1210 = vunpack.c.l.b16 %v1205
      %v1211 = vpack.c.b16 %v1210, %v1209
      %v1213 = vshrl.u32 %v1211, 16
      %v1215 = vshll.u32 %v1211, 16
      %v1217 = vrot.slane %v1215, 1
      %v1218 = vor.u32 %v1213, %v1217
      %v1220 = vsel %vm297, %v1218, 0
      %v1223 = vsel %vm301, %v1206, 0
      %1225 = vmatpush.bf16.msra.mxu0 0
      %1226 = vmatpush.bf16.msra.mxu0 0
      %1227 = vmatpush.bf16.msra.mxu0 0
      %1228 = vmatpush.bf16.msra.mxu0 0
      %1229 = vmatpush.bf16.msra.mxu0 0
      %1230 = vmatpush.bf16.msra.mxu0 0
      %1231 = vmatpush.bf16.msra.mxu0 0
      %1232 = vmatpush.bf16.msra.mxu0 %v1223
      %1233 = vmatmul.bf16.gmra.mxu0 %v1220
      %v1234 = vpop.f32.mrf.mxu0
      %v1235 = vadd.f32 0.0, %v1234
      %v1236 = vpop.f32.mrf.mxu0
      %1237 = vdwg.mxu0
      %v1238 = vadd.f32 %v1203, %v1235
      %s1239 = sadd.s32 %s282, 4
      %s1240 = smul.u32 %s1239, 2
      %s1241 = smul.addr %s1240, 4
      %s1242 = scalar_lea.vmem %s257, %s1241
      %v1243 = vld [vmem:[%s1242] sm:$0xf]
      %v1244 = vld [vmem:[%s468] sm:$0x3]
      %v1246 = vsel %vm297, %v1243, 0
      %v1249 = vsel %vm301, %v1244, 0
      %1251 = vmatpush.bf16.msra.mxu0 0
      %1252 = vmatpush.bf16.msra.mxu0 0
      %1253 = vmatpush.bf16.msra.mxu0 0
      %1254 = vmatpush.bf16.msra.mxu0 0
      %1255 = vmatpush.bf16.msra.mxu0 0
      %1256 = vmatpush.bf16.msra.mxu0 0
      %1257 = vmatpush.bf16.msra.mxu0 0
      %1258 = vmatpush.bf16.msra.mxu0 %v1249
      %1259 = vmatmul.bf16.gmra.mxu0 %v1246
      %v1260 = vpop.f32.mrf.mxu0
      %v1261 = vadd.f32 0.0, %v1260
      %v1262 = vpop.f32.mrf.mxu0
      %1263 = vdwg.mxu0
      %v1264 = vadd.f32 %v1238, %v1261
      %s1265 = sadd.s32 %s282, 13
      %s1266 = smul.u32 %s1265, 2
      %s1267 = smul.addr %s1266, 4
      %s1268 = scalar_lea.vmem %s257, %s1267
      %v1269 = vld [vmem:[%s1268] sm:$0xf]
      %v1270 = vld [vmem:[%s495] sm:$0x3]
      %v1272 = vsel %vm297, %v1269, 0
      %v1275 = vsel %vm301, %v1270, 0
      %1277 = vmatpush.bf16.msra.mxu0 0
      %1278 = vmatpush.bf16.msra.mxu0 0
      %1279 = vmatpush.bf16.msra.mxu0 0
      %1280 = vmatpush.bf16.msra.mxu0 0
      %1281 = vmatpush.bf16.msra.mxu0 0
      %1282 = vmatpush.bf16.msra.mxu0 0
      %1283 = vmatpush.bf16.msra.mxu0 0
      %1284 = vmatpush.bf16.msra.mxu0 %v1275
      %1285 = vmatmul.bf16.gmra.mxu0 %v1272
      %v1286 = vpop.f32.mrf.mxu0
      %v1287 = vadd.f32 0.0, %v1286
      %v1288 = vpop.f32.mrf.mxu0
      %1289 = vdwg.mxu0
      %v1290 = vadd.f32 %v1264, %v1287
      %v1291 = vld [vmem:[%s1242] sm:$0xf]
      %v1292 = vld [vmem:[%s1242 + $0x4] sm:$0x1]
      %v1293 = vld [vmem:[%s519] sm:$0x3]
      %v1296 = vunpack.c.l.b16 %v1291
      %v1297 = vunpack.c.l.b16 %v1292
      %v1298 = vpack.c.b16 %v1297, %v1296
      %v1300 = vshrl.u32 %v1298, 16
      %v1302 = vshll.u32 %v1298, 16
      %v1304 = vrot.slane %v1302, 1
      %v1305 = vor.u32 %v1300, %v1304
      %v1307 = vsel %vm297, %v1305, 0
      %v1310 = vsel %vm301, %v1293, 0
      %1312 = vmatpush.bf16.msra.mxu0 0
      %1313 = vmatpush.bf16.msra.mxu0 0
      %1314 = vmatpush.bf16.msra.mxu0 0
      %1315 = vmatpush.bf16.msra.mxu0 0
      %1316 = vmatpush.bf16.msra.mxu0 0
      %1317 = vmatpush.bf16.msra.mxu0 0
      %1318 = vmatpush.bf16.msra.mxu0 0
      %1319 = vmatpush.bf16.msra.mxu0 %v1310
      %1320 = vmatmul.bf16.gmra.mxu0 %v1307
      %v1321 = vpop.f32.mrf.mxu0
      %v1322 = vadd.f32 0.0, %v1321
      %v1323 = vpop.f32.mrf.mxu0
      %1324 = vdwg.mxu0
      %v1325 = vadd.f32 %v1290, %v1322
      %v1326 = vmul.f32 %v1325, %v554
      %v1327 = vadd.f32 %v1326, %v558
      %v1328 = vmax.f32 %v1327, 0.0
      %s1329 = scalar_lea.vmem %s279, 24
      %1330 = vst [vmem:[%s1329] sm:$0xff] %v1328
      %v1331 = vld [vmem:[%s1242] sm:$0xf]
      %v1332 = vld [vmem:[%s261] sm:$0x3]
      %v1333 = vld [vmem:[%s1268] sm:$0xf]
      %v1334 = vld [vmem:[%s295] sm:$0x3]
      %v1336 = vsel %vm297, %v1333, 0
      %v1339 = vsel %vm301, %v1334, 0
      %1341 = vmatpush.bf16.msra.mxu0 0
      %1342 = vmatpush.bf16.msra.mxu0 0
      %1343 = vmatpush.bf16.msra.mxu0 0
      %1344 = vmatpush.bf16.msra.mxu0 0
      %1345 = vmatpush.bf16.msra.mxu0 0
      %1346 = vmatpush.bf16.msra.mxu0 0
      %1347 = vmatpush.bf16.msra.mxu0 0
      %1348 = vmatpush.bf16.msra.mxu0 %v1339
      %1349 = vmatmul.bf16.gmra.mxu0 %v1336
      %v1350 = vpop.f32.mrf.mxu0
      %v1351 = vadd.f32 0.0, %v1350
      %v1352 = vpop.f32.mrf.mxu0
      %1353 = vdwg.mxu0
      %v1355 = vsel %vm297, %v1331, 0
      %v1358 = vsel %vm301, %v1332, 0
      %1360 = vmatpush.bf16.msra.mxu0 0
      %1361 = vmatpush.bf16.msra.mxu0 0
      %1362 = vmatpush.bf16.msra.mxu0 0
      %1363 = vmatpush.bf16.msra.mxu0 0
      %1364 = vmatpush.bf16.msra.mxu0 0
      %1365 = vmatpush.bf16.msra.mxu0 0
      %1366 = vmatpush.bf16.msra.mxu0 0
      %1367 = vmatpush.bf16.msra.mxu0 %v1358
      %1368 = vmatmul.bf16.gmra.mxu0 %v1355
      %v1369 = vpop.f32.mrf.mxu0
      %v1370 = vadd.f32 %v1351, %v1369
      %v1371 = vpop.f32.mrf.mxu0
      %1372 = vdwg.mxu0
      %v1373 = vld [vmem:[%s1242] sm:$0xf]
      %v1374 = vld [vmem:[%s1242 + $0x4] sm:$0x1]
      %v1375 = vld [vmem:[%s339] sm:$0x3]
      %v1378 = vunpack.c.l.b16 %v1373
      %v1379 = vunpack.c.l.b16 %v1374
      %v1380 = vpack.c.b16 %v1379, %v1378
      %v1382 = vshrl.u32 %v1380, 16
      %v1384 = vshll.u32 %v1380, 16
      %v1386 = vrot.slane %v1384, 1
      %v1387 = vor.u32 %v1382, %v1386
      %v1389 = vsel %vm297, %v1387, 0
      %v1392 = vsel %vm301, %v1375, 0
      %1394 = vmatpush.bf16.msra.mxu0 0
      %1395 = vmatpush.bf16.msra.mxu0 0
      %1396 = vmatpush.bf16.msra.mxu0 0
      %1397 = vmatpush.bf16.msra.mxu0 0
      %1398 = vmatpush.bf16.msra.mxu0 0
      %1399 = vmatpush.bf16.msra.mxu0 0
      %1400 = vmatpush.bf16.msra.mxu0 0
      %1401 = vmatpush.bf16.msra.mxu0 %v1392
      %1402 = vmatmul.bf16.gmra.mxu0 %v1389
      %v1403 = vpop.f32.mrf.mxu0
      %v1404 = vadd.f32 0.0, %v1403
      %v1405 = vpop.f32.mrf.mxu0
      %1406 = vdwg.mxu0
      %v1407 = vadd.f32 %v1370, %v1404
      %s1408 = sadd.s32 %s282, 22
      %s1409 = smul.u32 %s1408, 2
      %s1410 = smul.addr %s1409, 4
      %s1411 = scalar_lea.vmem %s257, %s1410
      %v1412 = vld [vmem:[%s1411] sm:$0xf]
      %v1413 = vld [vmem:[%s378] sm:$0x3]
      %v1415 = vsel %vm297, %v1412, 0
      %v1418 = vsel %vm301, %v1413, 0
      %1420 = vmatpush.bf16.msra.mxu0 0
      %1421 = vmatpush.bf16.msra.mxu0 0
      %1422 = vmatpush.bf16.msra.mxu0 0
      %1423 = vmatpush.bf16.msra.mxu0 0
      %1424 = vmatpush.bf16.msra.mxu0 0
      %1425 = vmatpush.bf16.msra.mxu0 0
      %1426 = vmatpush.bf16.msra.mxu0 0
      %1427 = vmatpush.bf16.msra.mxu0 %v1418
      %1428 = vmatmul.bf16.gmra.mxu0 %v1415
      %v1429 = vpop.f32.mrf.mxu0
      %v1430 = vadd.f32 0.0, %v1429
      %v1431 = vpop.f32.mrf.mxu0
      %1432 = vdwg.mxu0
      %v1433 = vadd.f32 %v1407, %v1430
      %s1434 = sadd.s32 %s282, 31
      %s1435 = smul.u32 %s1434, 2
      %s1436 = smul.addr %s1435, 4
      %s1437 = scalar_lea.vmem %s257, %s1436
      %v1438 = vld [vmem:[%s1437] sm:$0xf]
      %v1439 = vld [vmem:[%s405] sm:$0x3]
      %v1441 = vsel %vm297, %v1438, 0
      %v1444 = vsel %vm301, %v1439, 0
      %1446 = vmatpush.bf16.msra.mxu0 0
      %1447 = vmatpush.bf16.msra.mxu0 0
      %1448 = vmatpush.bf16.msra.mxu0 0
      %1449 = vmatpush.bf16.msra.mxu0 0
      %1450 = vmatpush.bf16.msra.mxu0 0
      %1451 = vmatpush.bf16.msra.mxu0 0
      %1452 = vmatpush.bf16.msra.mxu0 0
      %1453 = vmatpush.bf16.msra.mxu0 %v1444
      %1454 = vmatmul.bf16.gmra.mxu0 %v1441
      %v1455 = vpop.f32.mrf.mxu0
      %v1456 = vadd.f32 0.0, %v1455
      %v1457 = vpop.f32.mrf.mxu0
      %1458 = vdwg.mxu0
      %v1459 = vadd.f32 %v1433, %v1456
      %v1460 = vld [vmem:[%s1411] sm:$0xf]
      %v1461 = vld [vmem:[%s1411 + $0x4] sm:$0x1]
      %v1462 = vld [vmem:[%s429] sm:$0x3]
      %v1465 = vunpack.c.l.b16 %v1460
      %v1466 = vunpack.c.l.b16 %v1461
      %v1467 = vpack.c.b16 %v1466, %v1465
      %v1469 = vshrl.u32 %v1467, 16
      %v1471 = vshll.u32 %v1467, 16
      %v1473 = vrot.slane %v1471, 1
      %v1474 = vor.u32 %v1469, %v1473
      %v1476 = vsel %vm297, %v1474, 0
      %v1479 = vsel %vm301, %v1462, 0
      %1481 = vmatpush.bf16.msra.mxu0 0
      %1482 = vmatpush.bf16.msra.mxu0 0
      %1483 = vmatpush.bf16.msra.mxu0 0
      %1484 = vmatpush.bf16.msra.mxu0 0
      %1485 = vmatpush.bf16.msra.mxu0 0
      %1486 = vmatpush.bf16.msra.mxu0 0
      %1487 = vmatpush.bf16.msra.mxu0 0
      %1488 = vmatpush.bf16.msra.mxu0 %v1479
      %1489 = vmatmul.bf16.gmra.mxu0 %v1476
      %v1490 = vpop.f32.mrf.mxu0
      %v1491 = vadd.f32 0.0, %v1490
      %v1492 = vpop.f32.mrf.mxu0
      %1493 = vdwg.mxu0
      %v1494 = vadd.f32 %v1459, %v1491
      %s1495 = sadd.s32 %s282, 5
      %s1496 = smul.u32 %s1495, 2
      %s1497 = smul.addr %s1496, 4
      %s1498 = scalar_lea.vmem %s257, %s1497
      %v1499 = vld [vmem:[%s1498] sm:$0xf]
      %v1500 = vld [vmem:[%s468] sm:$0x3]
      %v1502 = vsel %vm297, %v1499, 0
      %v1505 = vsel %vm301, %v1500, 0
      %1507 = vmatpush.bf16.msra.mxu0 0
      %1508 = vmatpush.bf16.msra.mxu0 0
      %1509 = vmatpush.bf16.msra.mxu0 0
      %1510 = vmatpush.bf16.msra.mxu0 0
      %1511 = vmatpush.bf16.msra.mxu0 0
      %1512 = vmatpush.bf16.msra.mxu0 0
      %1513 = vmatpush.bf16.msra.mxu0 0
      %1514 = vmatpush.bf16.msra.mxu0 %v1505
      %1515 = vmatmul.bf16.gmra.mxu0 %v1502
      %v1516 = vpop.f32.mrf.mxu0
      %v1517 = vadd.f32 0.0, %v1516
      %v1518 = vpop.f32.mrf.mxu0
      %1519 = vdwg.mxu0
      %v1520 = vadd.f32 %v1494, %v1517
      %s1521 = sadd.s32 %s282, 14
      %s1522 = smul.u32 %s1521, 2
      %s1523 = smul.addr %s1522, 4
      %s1524 = scalar_lea.vmem %s257, %s1523
      %v1525 = vld [vmem:[%s1524] sm:$0xf]
      %v1526 = vld [vmem:[%s495] sm:$0x3]
      %v1528 = vsel %vm297, %v1525, 0
      %v1531 = vsel %vm301, %v1526, 0
      %1533 = vmatpush.bf16.msra.mxu0 0
      %1534 = vmatpush.bf16.msra.mxu0 0
      %1535 = vmatpush.bf16.msra.mxu0 0
      %1536 = vmatpush.bf16.msra.mxu0 0
      %1537 = vmatpush.bf16.msra.mxu0 0
      %1538 = vmatpush.bf16.msra.mxu0 0
      %1539 = vmatpush.bf16.msra.mxu0 0
      %1540 = vmatpush.bf16.msra.mxu0 %v1531
      %1541 = vmatmul.bf16.gmra.mxu0 %v1528
      %v1542 = vpop.f32.mrf.mxu0
      %v1543 = vadd.f32 0.0, %v1542
      %v1544 = vpop.f32.mrf.mxu0
      %1545 = vdwg.mxu0
      %v1546 = vadd.f32 %v1520, %v1543
      %v1547 = vld [vmem:[%s1498] sm:$0xf]
      %v1548 = vld [vmem:[%s1498 + $0x4] sm:$0x1]
      %v1549 = vld [vmem:[%s519] sm:$0x3]
      %v1552 = vunpack.c.l.b16 %v1547
      %v1553 = vunpack.c.l.b16 %v1548
      %v1554 = vpack.c.b16 %v1553, %v1552
      %v1556 = vshrl.u32 %v1554, 16
      %v1558 = vshll.u32 %v1554, 16
      %v1560 = vrot.slane %v1558, 1
      %v1561 = vor.u32 %v1556, %v1560
      %v1563 = vsel %vm297, %v1561, 0
      %v1566 = vsel %vm301, %v1549, 0
      %1568 = vmatpush.bf16.msra.mxu0 0
      %1569 = vmatpush.bf16.msra.mxu0 0
      %1570 = vmatpush.bf16.msra.mxu0 0
      %1571 = vmatpush.bf16.msra.mxu0 0
      %1572 = vmatpush.bf16.msra.mxu0 0
      %1573 = vmatpush.bf16.msra.mxu0 0
      %1574 = vmatpush.bf16.msra.mxu0 0
      %1575 = vmatpush.bf16.msra.mxu0 %v1566
      %1576 = vmatmul.bf16.gmra.mxu0 %v1563
      %v1577 = vpop.f32.mrf.mxu0
      %v1578 = vadd.f32 0.0, %v1577
      %v1579 = vpop.f32.mrf.mxu0
      %1580 = vdwg.mxu0
      %v1581 = vadd.f32 %v1546, %v1578
      %v1582 = vmul.f32 %v1581, %v554
      %v1583 = vadd.f32 %v1582, %v558
      %v1584 = vmax.f32 %v1583, 0.0
      %s1585 = scalar_lea.vmem %s279, 32
      %1586 = vst [vmem:[%s1585] sm:$0xff] %v1584
      %v1587 = vld [vmem:[%s1498] sm:$0xf]
      %v1588 = vld [vmem:[%s261] sm:$0x3]
      %v1589 = vld [vmem:[%s1524] sm:$0xf]
      %v1590 = vld [vmem:[%s295] sm:$0x3]
      %v1592 = vsel %vm297, %v1589, 0
      %v1595 = vsel %vm301, %v1590, 0
      %1597 = vmatpush.bf16.msra.mxu0 0
      %1598 = vmatpush.bf16.msra.mxu0 0
      %1599 = vmatpush.bf16.msra.mxu0 0
      %1600 = vmatpush.bf16.msra.mxu0 0
      %1601 = vmatpush.bf16.msra.mxu0 0
      %1602 = vmatpush.bf16.msra.mxu0 0
      %1603 = vmatpush.bf16.msra.mxu0 0
      %1604 = vmatpush.bf16.msra.mxu0 %v1595
      %1605 = vmatmul.bf16.gmra.mxu0 %v1592
      %v1606 = vpop.f32.mrf.mxu0
      %v1607 = vadd.f32 0.0, %v1606
      %v1608 = vpop.f32.mrf.mxu0
      %1609 = vdwg.mxu0
      %v1611 = vsel %vm297, %v1587, 0
      %v1614 = vsel %vm301, %v1588, 0
      %1616 = vmatpush.bf16.msra.mxu0 0
      %1617 = vmatpush.bf16.msra.mxu0 0
      %1618 = vmatpush.bf16.msra.mxu0 0
      %1619 = vmatpush.bf16.msra.mxu0 0
      %1620 = vmatpush.bf16.msra.mxu0 0
      %1621 = vmatpush.bf16.msra.mxu0 0
      %1622 = vmatpush.bf16.msra.mxu0 0
      %1623 = vmatpush.bf16.msra.mxu0 %v1614
      %1624 = vmatmul.bf16.gmra.mxu0 %v1611
      %v1625 = vpop.f32.mrf.mxu0
      %v1626 = vadd.f32 %v1607, %v1625
      %v1627 = vpop.f32.mrf.mxu0
      %1628 = vdwg.mxu0
      %v1629 = vld [vmem:[%s1498] sm:$0xf]
      %v1630 = vld [vmem:[%s1498 + $0x4] sm:$0x1]
      %v1631 = vld [vmem:[%s339] sm:$0x3]
      %v1634 = vunpack.c.l.b16 %v1629
      %v1635 = vunpack.c.l.b16 %v1630
      %v1636 = vpack.c.b16 %v1635, %v1634
      %v1638 = vshrl.u32 %v1636, 16
      %v1640 = vshll.u32 %v1636, 16
      %v1642 = vrot.slane %v1640, 1
      %v1643 = vor.u32 %v1638, %v1642
      %v1645 = vsel %vm297, %v1643, 0
      %v1648 = vsel %vm301, %v1631, 0
      %1650 = vmatpush.bf16.msra.mxu0 0
      %1651 = vmatpush.bf16.msra.mxu0 0
      %1652 = vmatpush.bf16.msra.mxu0 0
      %1653 = vmatpush.bf16.msra.mxu0 0
      %1654 = vmatpush.bf16.msra.mxu0 0
      %1655 = vmatpush.bf16.msra.mxu0 0
      %1656 = vmatpush.bf16.msra.mxu0 0
      %1657 = vmatpush.bf16.msra.mxu0 %v1648
      %1658 = vmatmul.bf16.gmra.mxu0 %v1645
      %v1659 = vpop.f32.mrf.mxu0
      %v1660 = vadd.f32 0.0, %v1659
      %v1661 = vpop.f32.mrf.mxu0
      %1662 = vdwg.mxu0
      %v1663 = vadd.f32 %v1626, %v1660
      %s1664 = sadd.s32 %s282, 23
      %s1665 = smul.u32 %s1664, 2
      %s1666 = smul.addr %s1665, 4
      %s1667 = scalar_lea.vmem %s257, %s1666
      %v1668 = vld [vmem:[%s1667] sm:$0xf]
      %v1669 = vld [vmem:[%s378] sm:$0x3]
      %v1671 = vsel %vm297, %v1668, 0
      %v1674 = vsel %vm301, %v1669, 0
      %1676 = vmatpush.bf16.msra.mxu0 0
      %1677 = vmatpush.bf16.msra.mxu0 0
      %1678 = vmatpush.bf16.msra.mxu0 0
      %1679 = vmatpush.bf16.msra.mxu0 0
      %1680 = vmatpush.bf16.msra.mxu0 0
      %1681 = vmatpush.bf16.msra.mxu0 0
      %1682 = vmatpush.bf16.msra.mxu0 0
      %1683 = vmatpush.bf16.msra.mxu0 %v1674
      %1684 = vmatmul.bf16.gmra.mxu0 %v1671
      %v1685 = vpop.f32.mrf.mxu0
      %v1686 = vadd.f32 0.0, %v1685
      %v1687 = vpop.f32.mrf.mxu0
      %1688 = vdwg.mxu0
      %v1689 = vadd.f32 %v1663, %v1686
      %s1690 = sadd.s32 %s282, 32
      %s1691 = smul.u32 %s1690, 2
      %s1692 = smul.addr %s1691, 4
      %s1693 = scalar_lea.vmem %s257, %s1692
      %v1694 = vld [vmem:[%s1693] sm:$0xf]
      %v1695 = vld [vmem:[%s405] sm:$0x3]
      %v1697 = vsel %vm297, %v1694, 0
      %v1700 = vsel %vm301, %v1695, 0
      %1702 = vmatpush.bf16.msra.mxu0 0
      %1703 = vmatpush.bf16.msra.mxu0 0
      %1704 = vmatpush.bf16.msra.mxu0 0
      %1705 = vmatpush.bf16.msra.mxu0 0
      %1706 = vmatpush.bf16.msra.mxu0 0
      %1707 = vmatpush.bf16.msra.mxu0 0
      %1708 = vmatpush.bf16.msra.mxu0 0
      %1709 = vmatpush.bf16.msra.mxu0 %v1700
      %1710 = vmatmul.bf16.gmra.mxu0 %v1697
      %v1711 = vpop.f32.mrf.mxu0
      %v1712 = vadd.f32 0.0, %v1711
      %v1713 = vpop.f32.mrf.mxu0
      %1714 = vdwg.mxu0
      %v1715 = vadd.f32 %v1689, %v1712
      %v1716 = vld [vmem:[%s1667] sm:$0xf]
      %v1717 = vld [vmem:[%s1667 + $0x4] sm:$0x1]
      %v1718 = vld [vmem:[%s429] sm:$0x3]
      %v1721 = vunpack.c.l.b16 %v1716
      %v1722 = vunpack.c.l.b16 %v1717
      %v1723 = vpack.c.b16 %v1722, %v1721
      %v1725 = vshrl.u32 %v1723, 16
      %v1727 = vshll.u32 %v1723, 16
      %v1729 = vrot.slane %v1727, 1
      %v1730 = vor.u32 %v1725, %v1729
      %v1732 = vsel %vm297, %v1730, 0
      %v1735 = vsel %vm301, %v1718, 0
      %1737 = vmatpush.bf16.msra.mxu0 0
      %1738 = vmatpush.bf16.msra.mxu0 0
      %1739 = vmatpush.bf16.msra.mxu0 0
      %1740 = vmatpush.bf16.msra.mxu0 0
      %1741 = vmatpush.bf16.msra.mxu0 0
      %1742 = vmatpush.bf16.msra.mxu0 0
      %1743 = vmatpush.bf16.msra.mxu0 0
      %1744 = vmatpush.bf16.msra.mxu0 %v1735
      %1745 = vmatmul.bf16.gmra.mxu0 %v1732
      %v1746 = vpop.f32.mrf.mxu0
      %v1747 = vadd.f32 0.0, %v1746
      %v1748 = vpop.f32.mrf.mxu0
      %1749 = vdwg.mxu0
      %v1750 = vadd.f32 %v1715, %v1747
      %s1751 = sadd.s32 %s282, 6
      %s1752 = smul.u32 %s1751, 2
      %s1753 = smul.addr %s1752, 4
      %s1754 = scalar_lea.vmem %s257, %s1753
      %v1755 = vld [vmem:[%s1754] sm:$0xf]
      %v1756 = vld [vmem:[%s468] sm:$0x3]
      %v1758 = vsel %vm297, %v1755, 0
      %v1761 = vsel %vm301, %v1756, 0
      %1763 = vmatpush.bf16.msra.mxu0 0
      %1764 = vmatpush.bf16.msra.mxu0 0
      %1765 = vmatpush.bf16.msra.mxu0 0
      %1766 = vmatpush.bf16.msra.mxu0 0
      %1767 = vmatpush.bf16.msra.mxu0 0
      %1768 = vmatpush.bf16.msra.mxu0 0
      %1769 = vmatpush.bf16.msra.mxu0 0
      %1770 = vmatpush.bf16.msra.mxu0 %v1761
      %1771 = vmatmul.bf16.gmra.mxu0 %v1758
      %v1772 = vpop.f32.mrf.mxu0
      %v1773 = vadd.f32 0.0, %v1772
      %v1774 = vpop.f32.mrf.mxu0
      %1775 = vdwg.mxu0
      %v1776 = vadd.f32 %v1750, %v1773
      %s1777 = sadd.s32 %s282, 15
      %s1778 = smul.u32 %s1777, 2
      %s1779 = smul.addr %s1778, 4
      %s1780 = scalar_lea.vmem %s257, %s1779
      %v1781 = vld [vmem:[%s1780] sm:$0xf]
      %v1782 = vld [vmem:[%s495] sm:$0x3]
      %v1784 = vsel %vm297, %v1781, 0
      %v1787 = vsel %vm301, %v1782, 0
      %1789 = vmatpush.bf16.msra.mxu0 0
      %1790 = vmatpush.bf16.msra.mxu0 0
      %1791 = vmatpush.bf16.msra.mxu0 0
      %1792 = vmatpush.bf16.msra.mxu0 0
      %1793 = vmatpush.bf16.msra.mxu0 0
      %1794 = vmatpush.bf16.msra.mxu0 0
      %1795 = vmatpush.bf16.msra.mxu0 0
      %1796 = vmatpush.bf16.msra.mxu0 %v1787
      %1797 = vmatmul.bf16.gmra.mxu0 %v1784
      %v1798 = vpop.f32.mrf.mxu0
      %v1799 = vadd.f32 0.0, %v1798
      %v1800 = vpop.f32.mrf.mxu0
      %1801 = vdwg.mxu0
      %v1802 = vadd.f32 %v1776, %v1799
      %v1803 = vld [vmem:[%s1754] sm:$0xf]
      %v1804 = vld [vmem:[%s1754 + $0x4] sm:$0x1]
      %v1805 = vld [vmem:[%s519] sm:$0x3]
      %v1808 = vunpack.c.l.b16 %v1803
      %v1809 = vunpack.c.l.b16 %v1804
      %v1810 = vpack.c.b16 %v1809, %v1808
      %v1812 = vshrl.u32 %v1810, 16
      %v1814 = vshll.u32 %v1810, 16
      %v1816 = vrot.slane %v1814, 1
      %v1817 = vor.u32 %v1812, %v1816
      %v1819 = vsel %vm297, %v1817, 0
      %v1822 = vsel %vm301, %v1805, 0
      %1824 = vmatpush.bf16.msra.mxu0 0
      %1825 = vmatpush.bf16.msra.mxu0 0
      %1826 = vmatpush.bf16.msra.mxu0 0
      %1827 = vmatpush.bf16.msra.mxu0 0
      %1828 = vmatpush.bf16.msra.mxu0 0
      %1829 = vmatpush.bf16.msra.mxu0 0
      %1830 = vmatpush.bf16.msra.mxu0 0
      %1831 = vmatpush.bf16.msra.mxu0 %v1822
      %1832 = vmatmul.bf16.gmra.mxu0 %v1819
      %v1833 = vpop.f32.mrf.mxu0
      %v1834 = vadd.f32 0.0, %v1833
      %v1835 = vpop.f32.mrf.mxu0
      %1836 = vdwg.mxu0
      %v1837 = vadd.f32 %v1802, %v1834
      %v1838 = vmul.f32 %v1837, %v554
      %v1839 = vadd.f32 %v1838, %v558
      %v1840 = vmax.f32 %v1839, 0.0
      %s1841 = scalar_lea.vmem %s279, 40
      %1842 = vst [vmem:[%s1841] sm:$0xff] %v1840
      %v1843 = vld [vmem:[%s1754] sm:$0xf]
      %v1844 = vld [vmem:[%s261] sm:$0x3]
      %v1845 = vld [vmem:[%s1780] sm:$0xf]
      %v1846 = vld [vmem:[%s295] sm:$0x3]
      %v1848 = vsel %vm297, %v1845, 0
      %v1851 = vsel %vm301, %v1846, 0
      %1853 = vmatpush.bf16.msra.mxu0 0
      %1854 = vmatpush.bf16.msra.mxu0 0
      %1855 = vmatpush.bf16.msra.mxu0 0
      %1856 = vmatpush.bf16.msra.mxu0 0
      %1857 = vmatpush.bf16.msra.mxu0 0
      %1858 = vmatpush.bf16.msra.mxu0 0
      %1859 = vmatpush.bf16.msra.mxu0 0
      %1860 = vmatpush.bf16.msra.mxu0 %v1851
      %1861 = vmatmul.bf16.gmra.mxu0 %v1848
      %v1862 = vpop.f32.mrf.mxu0
      %v1863 = vadd.f32 0.0, %v1862
      %v1864 = vpop.f32.mrf.mxu0
      %1865 = vdwg.mxu0
      %v1867 = vsel %vm297, %v1843, 0
      %v1870 = vsel %vm301, %v1844, 0
      %1872 = vmatpush.bf16.msra.mxu0 0
      %1873 = vmatpush.bf16.msra.mxu0 0
      %1874 = vmatpush.bf16.msra.mxu0 0
      %1875 = vmatpush.bf16.msra.mxu0 0
      %1876 = vmatpush.bf16.msra.mxu0 0
      %1877 = vmatpush.bf16.msra.mxu0 0
      %1878 = vmatpush.bf16.msra.mxu0 0
      %1879 = vmatpush.bf16.msra.mxu0 %v1870
      %1880 = vmatmul.bf16.gmra.mxu0 %v1867
      %v1881 = vpop.f32.mrf.mxu0
      %v1882 = vadd.f32 %v1863, %v1881
      %v1883 = vpop.f32.mrf.mxu0
      %1884 = vdwg.mxu0
      %v1885 = vld [vmem:[%s1754] sm:$0xf]
      %v1886 = vld [vmem:[%s1754 + $0x4] sm:$0x1]
      %v1887 = vld [vmem:[%s339] sm:$0x3]
      %v1890 = vunpack.c.l.b16 %v1885
      %v1891 = vunpack.c.l.b16 %v1886
      %v1892 = vpack.c.b16 %v1891, %v1890
      %v1894 = vshrl.u32 %v1892, 16
      %v1896 = vshll.u32 %v1892, 16
      %v1898 = vrot.slane %v1896, 1
      %v1899 = vor.u32 %v1894, %v1898
      %v1901 = vsel %vm297, %v1899, 0
      %v1904 = vsel %vm301, %v1887, 0
      %1906 = vmatpush.bf16.msra.mxu0 0
      %1907 = vmatpush.bf16.msra.mxu0 0
      %1908 = vmatpush.bf16.msra.mxu0 0
      %1909 = vmatpush.bf16.msra.mxu0 0
      %1910 = vmatpush.bf16.msra.mxu0 0
      %1911 = vmatpush.bf16.msra.mxu0 0
      %1912 = vmatpush.bf16.msra.mxu0 0
      %1913 = vmatpush.bf16.msra.mxu0 %v1904
      %1914 = vmatmul.bf16.gmra.mxu0 %v1901
      %v1915 = vpop.f32.mrf.mxu0
      %v1916 = vadd.f32 0.0, %v1915
      %v1917 = vpop.f32.mrf.mxu0
      %1918 = vdwg.mxu0
      %v1919 = vadd.f32 %v1882, %v1916
      %s1920 = sadd.s32 %s282, 24
      %s1921 = smul.u32 %s1920, 2
      %s1922 = smul.addr %s1921, 4
      %s1923 = scalar_lea.vmem %s257, %s1922
      %v1924 = vld [vmem:[%s1923] sm:$0xf]
      %v1925 = vld [vmem:[%s378] sm:$0x3]
      %v1927 = vsel %vm297, %v1924, 0
      %v1930 = vsel %vm301, %v1925, 0
      %1932 = vmatpush.bf16.msra.mxu0 0
      %1933 = vmatpush.bf16.msra.mxu0 0
      %1934 = vmatpush.bf16.msra.mxu0 0
      %1935 = vmatpush.bf16.msra.mxu0 0
      %1936 = vmatpush.bf16.msra.mxu0 0
      %1937 = vmatpush.bf16.msra.mxu0 0
      %1938 = vmatpush.bf16.msra.mxu0 0
      %1939 = vmatpush.bf16.msra.mxu0 %v1930
      %1940 = vmatmul.bf16.gmra.mxu0 %v1927
      %v1941 = vpop.f32.mrf.mxu0
      %v1942 = vadd.f32 0.0, %v1941
      %v1943 = vpop.f32.mrf.mxu0
      %1944 = vdwg.mxu0
      %v1945 = vadd.f32 %v1919, %v1942
      %s1946 = sadd.s32 %s282, 33
      %s1947 = smul.u32 %s1946, 2
      %s1948 = smul.addr %s1947, 4
      %s1949 = scalar_lea.vmem %s257, %s1948
      %v1950 = vld [vmem:[%s1949] sm:$0xf]
      %v1951 = vld [vmem:[%s405] sm:$0x3]
      %v1953 = vsel %vm297, %v1950, 0
      %v1956 = vsel %vm301, %v1951, 0
      %1958 = vmatpush.bf16.msra.mxu0 0
      %1959 = vmatpush.bf16.msra.mxu0 0
      %1960 = vmatpush.bf16.msra.mxu0 0
      %1961 = vmatpush.bf16.msra.mxu0 0
      %1962 = vmatpush.bf16.msra.mxu0 0
      %1963 = vmatpush.bf16.msra.mxu0 0
      %1964 = vmatpush.bf16.msra.mxu0 0
      %1965 = vmatpush.bf16.msra.mxu0 %v1956
      %1966 = vmatmul.bf16.gmra.mxu0 %v1953
      %v1967 = vpop.f32.mrf.mxu0
      %v1968 = vadd.f32 0.0, %v1967
      %v1969 = vpop.f32.mrf.mxu0
      %1970 = vdwg.mxu0
      %v1971 = vadd.f32 %v1945, %v1968
      %v1972 = vld [vmem:[%s1923] sm:$0xf]
      %v1973 = vld [vmem:[%s1923 + $0x4] sm:$0x1]
      %v1974 = vld [vmem:[%s429] sm:$0x3]
      %v1977 = vunpack.c.l.b16 %v1972
      %v1978 = vunpack.c.l.b16 %v1973
      %v1979 = vpack.c.b16 %v1978, %v1977
      %v1981 = vshrl.u32 %v1979, 16
      %v1983 = vshll.u32 %v1979, 16
      %v1985 = vrot.slane %v1983, 1
      %v1986 = vor.u32 %v1981, %v1985
      %v1988 = vsel %vm297, %v1986, 0
      %v1991 = vsel %vm301, %v1974, 0
      %1993 = vmatpush.bf16.msra.mxu0 0
      %1994 = vmatpush.bf16.msra.mxu0 0
      %1995 = vmatpush.bf16.msra.mxu0 0
      %1996 = vmatpush.bf16.msra.mxu0 0
      %1997 = vmatpush.bf16.msra.mxu0 0
      %1998 = vmatpush.bf16.msra.mxu0 0
      %1999 = vmatpush.bf16.msra.mxu0 0
      %2000 = vmatpush.bf16.msra.mxu0 %v1991
      %2001 = vmatmul.bf16.gmra.mxu0 %v1988
      %v2002 = vpop.f32.mrf.mxu0
      %v2003 = vadd.f32 0.0, %v2002
      %v2004 = vpop.f32.mrf.mxu0
      %2005 = vdwg.mxu0
      %v2006 = vadd.f32 %v1971, %v2003
      %s2007 = sadd.s32 %s282, 7
      %s2008 = smul.u32 %s2007, 2
      %s2009 = smul.addr %s2008, 4
      %s2010 = scalar_lea.vmem %s257, %s2009
      %v2011 = vld [vmem:[%s2010] sm:$0xf]
      %v2012 = vld [vmem:[%s468] sm:$0x3]
      %v2014 = vsel %vm297, %v2011, 0
      %v2017 = vsel %vm301, %v2012, 0
      %2019 = vmatpush.bf16.msra.mxu0 0
      %2020 = vmatpush.bf16.msra.mxu0 0
      %2021 = vmatpush.bf16.msra.mxu0 0
      %2022 = vmatpush.bf16.msra.mxu0 0
      %2023 = vmatpush.bf16.msra.mxu0 0
      %2024 = vmatpush.bf16.msra.mxu0 0
      %2025 = vmatpush.bf16.msra.mxu0 0
      %2026 = vmatpush.bf16.msra.mxu0 %v2017
      %2027 = vmatmul.bf16.gmra.mxu0 %v2014
      %v2028 = vpop.f32.mrf.mxu0
      %v2029 = vadd.f32 0.0, %v2028
      %v2030 = vpop.f32.mrf.mxu0
      %2031 = vdwg.mxu0
      %v2032 = vadd.f32 %v2006, %v2029
      %s2033 = sadd.s32 %s282, 16
      %s2034 = smul.u32 %s2033, 2
      %s2035 = smul.addr %s2034, 4
      %s2036 = scalar_lea.vmem %s257, %s2035
      %v2037 = vld [vmem:[%s2036] sm:$0xf]
      %v2038 = vld [vmem:[%s495] sm:$0x3]
      %v2040 = vsel %vm297, %v2037, 0
      %v2043 = vsel %vm301, %v2038, 0
      %2045 = vmatpush.bf16.msra.mxu0 0
      %2046 = vmatpush.bf16.msra.mxu0 0
      %2047 = vmatpush.bf16.msra.mxu0 0
      %2048 = vmatpush.bf16.msra.mxu0 0
      %2049 = vmatpush.bf16.msra.mxu0 0
      %2050 = vmatpush.bf16.msra.mxu0 0
      %2051 = vmatpush.bf16.msra.mxu0 0
      %2052 = vmatpush.bf16.msra.mxu0 %v2043
      %2053 = vmatmul.bf16.gmra.mxu0 %v2040
      %v2054 = vpop.f32.mrf.mxu0
      %v2055 = vadd.f32 0.0, %v2054
      %v2056 = vpop.f32.mrf.mxu0
      %2057 = vdwg.mxu0
      %v2058 = vadd.f32 %v2032, %v2055
      %v2059 = vld [vmem:[%s2010] sm:$0xf]
      %v2060 = vld [vmem:[%s2010 + $0x4] sm:$0x1]
      %v2061 = vld [vmem:[%s519] sm:$0x3]
      %v2064 = vunpack.c.l.b16 %v2059
      %v2065 = vunpack.c.l.b16 %v2060
      %v2066 = vpack.c.b16 %v2065, %v2064
      %v2068 = vshrl.u32 %v2066, 16
      %v2070 = vshll.u32 %v2066, 16
      %v2072 = vrot.slane %v2070, 1
      %v2073 = vor.u32 %v2068, %v2072
      %v2075 = vsel %vm297, %v2073, 0
      %v2078 = vsel %vm301, %v2061, 0
      %2080 = vmatpush.bf16.msra.mxu0 0
      %2081 = vmatpush.bf16.msra.mxu0 0
      %2082 = vmatpush.bf16.msra.mxu0 0
      %2083 = vmatpush.bf16.msra.mxu0 0
      %2084 = vmatpush.bf16.msra.mxu0 0
      %2085 = vmatpush.bf16.msra.mxu0 0
      %2086 = vmatpush.bf16.msra.mxu0 0
      %2087 = vmatpush.bf16.msra.mxu0 %v2078
      %2088 = vmatmul.bf16.gmra.mxu0 %v2075
      %v2089 = vpop.f32.mrf.mxu0
      %v2090 = vadd.f32 0.0, %v2089
      %v2091 = vpop.f32.mrf.mxu0
      %2092 = vdwg.mxu0
      %v2093 = vadd.f32 %v2058, %v2090
      %v2094 = vmul.f32 %v2093, %v554
      %v2095 = vadd.f32 %v2094, %v558
      %v2096 = vmax.f32 %v2095, 0.0
      %s2097 = scalar_lea.vmem %s279, 48
      %2098 = vst [vmem:[%s2097] sm:$0xff] %v2096
      %v2099 = vld [vmem:[%s2010] sm:$0xf]
      %v2100 = vld [vmem:[%s261] sm:$0x3]
      %v2101 = vld [vmem:[%s2036] sm:$0xf]
      %v2102 = vld [vmem:[%s295] sm:$0x3]
      %v2104 = vsel %vm297, %v2101, 0
      %v2107 = vsel %vm301, %v2102, 0
      %2109 = vmatpush.bf16.msra.mxu0 0
      %2110 = vmatpush.bf16.msra.mxu0 0
      %2111 = vmatpush.bf16.msra.mxu0 0
      %2112 = vmatpush.bf16.msra.mxu0 0
      %2113 = vmatpush.bf16.msra.mxu0 0
      %2114 = vmatpush.bf16.msra.mxu0 0
      %2115 = vmatpush.bf16.msra.mxu0 0
      %2116 = vmatpush.bf16.msra.mxu0 %v2107
      %2117 = vmatmul.bf16.gmra.mxu0 %v2104
      %v2118 = vpop.f32.mrf.mxu0
      %v2119 = vadd.f32 0.0, %v2118
      %v2120 = vpop.f32.mrf.mxu0
      %2121 = vdwg.mxu0
      %v2123 = vsel %vm297, %v2099, 0
      %v2126 = vsel %vm301, %v2100, 0
      %2128 = vmatpush.bf16.msra.mxu0 0
      %2129 = vmatpush.bf16.msra.mxu0 0
      %2130 = vmatpush.bf16.msra.mxu0 0
      %2131 = vmatpush.bf16.msra.mxu0 0
      %2132 = vmatpush.bf16.msra.mxu0 0
      %2133 = vmatpush.bf16.msra.mxu0 0
      %2134 = vmatpush.bf16.msra.mxu0 0
      %2135 = vmatpush.bf16.msra.mxu0 %v2126
      %2136 = vmatmul.bf16.gmra.mxu0 %v2123
      %v2137 = vpop.f32.mrf.mxu0
      %v2138 = vadd.f32 %v2119, %v2137
      %v2139 = vpop.f32.mrf.mxu0
      %2140 = vdwg.mxu0
      %v2141 = vld [vmem:[%s2010] sm:$0xf]
      %v2142 = vld [vmem:[%s2010 + $0x4] sm:$0x1]
      %v2143 = vld [vmem:[%s339] sm:$0x3]
      %v2146 = vunpack.c.l.b16 %v2141
      %v2147 = vunpack.c.l.b16 %v2142
      %v2148 = vpack.c.b16 %v2147, %v2146
      %v2150 = vshrl.u32 %v2148, 16
      %v2152 = vshll.u32 %v2148, 16
      %v2154 = vrot.slane %v2152, 1
      %v2155 = vor.u32 %v2150, %v2154
      %v2157 = vsel %vm297, %v2155, 0
      %v2160 = vsel %vm301, %v2143, 0
      %2162 = vmatpush.bf16.msra.mxu0 0
      %2163 = vmatpush.bf16.msra.mxu0 0
      %2164 = vmatpush.bf16.msra.mxu0 0
      %2165 = vmatpush.bf16.msra.mxu0 0
      %2166 = vmatpush.bf16.msra.mxu0 0
      %2167 = vmatpush.bf16.msra.mxu0 0
      %2168 = vmatpush.bf16.msra.mxu0 0
      %2169 = vmatpush.bf16.msra.mxu0 %v2160
      %2170 = vmatmul.bf16.gmra.mxu0 %v2157
      %v2171 = vpop.f32.mrf.mxu0
      %v2172 = vadd.f32 0.0, %v2171
      %v2173 = vpop.f32.mrf.mxu0
      %2174 = vdwg.mxu0
      %v2175 = vadd.f32 %v2138, %v2172
      %s2176 = sadd.s32 %s282, 25
      %s2177 = smul.u32 %s2176, 2
      %s2178 = smul.addr %s2177, 4
      %s2179 = scalar_lea.vmem %s257, %s2178
      %v2180 = vld [vmem:[%s2179] sm:$0xf]
      %v2181 = vld [vmem:[%s378] sm:$0x3]
      %v2183 = vsel %vm297, %v2180, 0
      %v2186 = vsel %vm301, %v2181, 0
      %2188 = vmatpush.bf16.msra.mxu0 0
      %2189 = vmatpush.bf16.msra.mxu0 0
      %2190 = vmatpush.bf16.msra.mxu0 0
      %2191 = vmatpush.bf16.msra.mxu0 0
      %2192 = vmatpush.bf16.msra.mxu0 0
      %2193 = vmatpush.bf16.msra.mxu0 0
      %2194 = vmatpush.bf16.msra.mxu0 0
      %2195 = vmatpush.bf16.msra.mxu0 %v2186
      %2196 = vmatmul.bf16.gmra.mxu0 %v2183
      %v2197 = vpop.f32.mrf.mxu0
      %v2198 = vadd.f32 0.0, %v2197
      %v2199 = vpop.f32.mrf.mxu0
      %2200 = vdwg.mxu0
      %v2201 = vadd.f32 %v2175, %v2198
      %s2202 = sadd.s32 %s282, 34
      %s2203 = smul.u32 %s2202, 2
      %s2204 = smul.addr %s2203, 4
      %s2205 = scalar_lea.vmem %s257, %s2204
      %v2206 = vld [vmem:[%s2205] sm:$0xf]
      %v2207 = vld [vmem:[%s405] sm:$0x3]
      %v2209 = vsel %vm297, %v2206, 0
      %v2212 = vsel %vm301, %v2207, 0
      %2214 = vmatpush.bf16.msra.mxu0 0
      %2215 = vmatpush.bf16.msra.mxu0 0
      %2216 = vmatpush.bf16.msra.mxu0 0
      %2217 = vmatpush.bf16.msra.mxu0 0
      %2218 = vmatpush.bf16.msra.mxu0 0
      %2219 = vmatpush.bf16.msra.mxu0 0
      %2220 = vmatpush.bf16.msra.mxu0 0
      %2221 = vmatpush.bf16.msra.mxu0 %v2212
      %2222 = vmatmul.bf16.gmra.mxu0 %v2209
      %v2223 = vpop.f32.mrf.mxu0
      %v2224 = vadd.f32 0.0, %v2223
      %v2225 = vpop.f32.mrf.mxu0
      %2226 = vdwg.mxu0
      %v2227 = vadd.f32 %v2201, %v2224
      %v2228 = vld [vmem:[%s2179] sm:$0xf]
      %v2229 = vld [vmem:[%s2179 + $0x4] sm:$0x1]
      %v2230 = vld [vmem:[%s429] sm:$0x3]
      %v2233 = vunpack.c.l.b16 %v2228
      %v2234 = vunpack.c.l.b16 %v2229
      %v2235 = vpack.c.b16 %v2234, %v2233
      %v2237 = vshrl.u32 %v2235, 16
      %v2239 = vshll.u32 %v2235, 16
      %v2241 = vrot.slane %v2239, 1
      %v2242 = vor.u32 %v2237, %v2241
      %v2244 = vsel %vm297, %v2242, 0
      %v2247 = vsel %vm301, %v2230, 0
      %2249 = vmatpush.bf16.msra.mxu0 0
      %2250 = vmatpush.bf16.msra.mxu0 0
      %2251 = vmatpush.bf16.msra.mxu0 0
      %2252 = vmatpush.bf16.msra.mxu0 0
      %2253 = vmatpush.bf16.msra.mxu0 0
      %2254 = vmatpush.bf16.msra.mxu0 0
      %2255 = vmatpush.bf16.msra.mxu0 0
      %2256 = vmatpush.bf16.msra.mxu0 %v2247
      %2257 = vmatmul.bf16.gmra.mxu0 %v2244
      %v2258 = vpop.f32.mrf.mxu0
      %v2259 = vadd.f32 0.0, %v2258
      %v2260 = vpop.f32.mrf.mxu0
      %2261 = vdwg.mxu0
      %v2262 = vadd.f32 %v2227, %v2259
      %s2263 = sadd.s32 %s282, 8
      %s2264 = smul.u32 %s2263, 2
      %s2265 = smul.addr %s2264, 4
      %s2266 = scalar_lea.vmem %s257, %s2265
      %v2267 = vld [vmem:[%s2266] sm:$0xf]
      %v2268 = vld [vmem:[%s468] sm:$0x3]
      %v2270 = vsel %vm297, %v2267, 0
      %v2273 = vsel %vm301, %v2268, 0
      %2275 = vmatpush.bf16.msra.mxu0 0
      %2276 = vmatpush.bf16.msra.mxu0 0
      %2277 = vmatpush.bf16.msra.mxu0 0
      %2278 = vmatpush.bf16.msra.mxu0 0
      %2279 = vmatpush.bf16.msra.mxu0 0
      %2280 = vmatpush.bf16.msra.mxu0 0
      %2281 = vmatpush.bf16.msra.mxu0 0
      %2282 = vmatpush.bf16.msra.mxu0 %v2273
      %2283 = vmatmul.bf16.gmra.mxu0 %v2270
      %v2284 = vpop.f32.mrf.mxu0
      %v2285 = vadd.f32 0.0, %v2284
      %v2286 = vpop.f32.mrf.mxu0
      %2287 = vdwg.mxu0
      %v2288 = vadd.f32 %v2262, %v2285
      %s2289 = sadd.s32 %s282, 17
      %s2290 = smul.u32 %s2289, 2
      %s2291 = smul.addr %s2290, 4
      %s2292 = scalar_lea.vmem %s257, %s2291
      %v2293 = vld [vmem:[%s2292] sm:$0xf]
      %v2294 = vld [vmem:[%s495] sm:$0x3]
      %v2296 = vsel %vm297, %v2293, 0
      %v2299 = vsel %vm301, %v2294, 0
      %2301 = vmatpush.bf16.msra.mxu0 0
      %2302 = vmatpush.bf16.msra.mxu0 0
      %2303 = vmatpush.bf16.msra.mxu0 0
      %2304 = vmatpush.bf16.msra.mxu0 0
      %2305 = vmatpush.bf16.msra.mxu0 0
      %2306 = vmatpush.bf16.msra.mxu0 0
      %2307 = vmatpush.bf16.msra.mxu0 0
      %2308 = vmatpush.bf16.msra.mxu0 %v2299
      %2309 = vmatmul.bf16.gmra.mxu0 %v2296
      %v2310 = vpop.f32.mrf.mxu0
      %v2311 = vadd.f32 0.0, %v2310
      %v2312 = vpop.f32.mrf.mxu0
      %2313 = vdwg.mxu0
      %v2314 = vadd.f32 %v2288, %v2311
      %v2315 = vld [vmem:[%s2266] sm:$0xf]
      %v2316 = vld [vmem:[%s2266 + $0x4] sm:$0x1]
      %v2317 = vld [vmem:[%s519] sm:$0x3]
      %v2320 = vunpack.c.l.b16 %v2315
      %v2321 = vunpack.c.l.b16 %v2316
      %v2322 = vpack.c.b16 %v2321, %v2320
      %v2324 = vshrl.u32 %v2322, 16
      %v2326 = vshll.u32 %v2322, 16
      %v2328 = vrot.slane %v2326, 1
      %v2329 = vor.u32 %v2324, %v2328
      %v2331 = vsel %vm297, %v2329, 0
      %v2334 = vsel %vm301, %v2317, 0
      %2336 = vmatpush.bf16.msra.mxu0 0
      %2337 = vmatpush.bf16.msra.mxu0 0
      %2338 = vmatpush.bf16.msra.mxu0 0
      %2339 = vmatpush.bf16.msra.mxu0 0
      %2340 = vmatpush.bf16.msra.mxu0 0
      %2341 = vmatpush.bf16.msra.mxu0 0
      %2342 = vmatpush.bf16.msra.mxu0 0
      %2343 = vmatpush.bf16.msra.mxu0 %v2334
      %2344 = vmatmul.bf16.gmra.mxu0 %v2331
      %v2345 = vpop.f32.mrf.mxu0
      %v2346 = vadd.f32 0.0, %v2345
      %v2347 = vpop.f32.mrf.mxu0
      %2348 = vdwg.mxu0
      %v2349 = vadd.f32 %v2314, %v2346
      %v2350 = vmul.f32 %v2349, %v554
      %v2351 = vadd.f32 %v2350, %v558
      %v2352 = vmax.f32 %v2351, 0.0
      %s2353 = scalar_lea.vmem %s279, 56
      %2354 = vst [vmem:[%s2353] sm:$0xff] %v2352
      %s2355 = smul.u32 8, %s22
      %p2356 = scmp.lt.s32.totalorder %s21, 1
      %s2357 = scalar_select %p2356, %s21, 1
      %p2358 = scmp.lt.s32.totalorder %s2355, 7
      %s2359 = scalar_select %p2358, %s2355, 7
      %p2360 = scmp.lt.s32.totalorder %s20, 0
      %s2361 = scalar_select %p2360, %s20, 0
      %s2362 = sadd.s32 %s2361, %s2359
      %s2363 = smul.addr %s2357, 8
      %s2364 = sadd.s32 %s2362, %s2363
      %s2365 = smul.addr %s2364, 8
      %s2366 = scalar_lea.vmem %s4, %s2365
      // Predicated region
      $region37: #{basic_conv2d_forward.1} parent=35 // pred_check
        %p2367 = pneg %p160
      $region38: #{basic_conv2d_forward.1} parent=35 // pred_check_branch
        %2369 = sbr.rel (%p2367) target = $region40
      $region39: #{basic_conv2d_forward.1} parent=35 // pred_region
        %s2370 = smul.u32 8, %s22
      $region40: #{basic_conv2d_forward.1} parent=35 // pred_fallthru
        _
    $region36: #{basic_conv2d_forward.1} parent=5 // pred_fallthru
      _
    %p2371 = scmp.le.s32.totalorder 2, %s10
    // Predicated region
    $region41: #{basic_conv2d_forward.1} parent=5 // pred_check
      %p2372 = pneg %p2371
    $region42: #{basic_conv2d_forward.1} parent=5 // pred_check_branch
      %2374 = sbr.rel (%p2372) target = $region44
    $region43: #{basic_conv2d_forward.1} parent=5 // pred_region
      %s2375 = ssub.s32 %s10, 2
      // Predicated region
      $region45: #{basic_conv2d_forward.1} parent=43 // pred_check
        %p2376 = pneg %p166
      $region46: #{basic_conv2d_forward.1} parent=43 // pred_check_branch
        %2378 = sbr.rel (%p2376) target = $region48
      $region47: #{basic_conv2d_forward.1} parent=43 // pred_region
        %s2379 = smul.u32 8, %s25
        %p2380 = scmp.lt.s32.totalorder %s24, 1
        %s2381 = scalar_select %p2380, %s24, 1
        %p2382 = scmp.lt.s32.totalorder %s2379, 7
        %s2383 = scalar_select %p2382, %s2379, 7
        %p2384 = scmp.lt.s32.totalorder %s23, 0
        %s2385 = scalar_select %p2384, %s23, 0
        %s2386 = sadd.s32 %s2385, %s2383
        %s2387 = smul.addr %s2381, 8
        %s2388 = sadd.s32 %s2386, %s2387
        %s2389 = smul.addr %s2388, 8
        %s2390 = scalar_lea.vmem %s4, %s2389
      $region48: #{basic_conv2d_forward.1} parent=43 // pred_fallthru
        _
    $region44: #{basic_conv2d_forward.1} parent=5 // pred_fallthru
      _
  $region6: #{basic_conv2d_forward.1} parent=0 // loop_footer
    %s14 = sadd.s32 1, %s10
  $region7: #{basic_conv2d_forward.1} parent=0 // loop_footer_branch
    %9 = sbr.rel target = $region3
  $region8: #{basic_conv2d_forward.1} parent=0 // loop_exit
    _

</llo_original>
